<compile_context>
chip_gen: v7x
topology: tpu7x:2x2x1
jax: 0.10.0
libtpu: 0.0.40
codegen_flags: <defaults>
</compile_context>

<pallas_src>
import jax
import jax.numpy as jnp
from jax.experimental import pallas as pl
from jax.experimental.pallas import tpu as pltpu

# ------------------------- model config (small, synthetic) -------------------------
B = 2              # batch
S = 8              # sequence length
H = 32             # hidden size (stand-in for 768)
NH = 2             # attention heads
HD = H // NH       # head dim
I = 4 * H          # FFN intermediate
L = 2              # encoder layers
VOCAB = 50
MAX_POS = 32
NUM_CLASSES = 7    # output_dim of the RE classifier
CPAD = 128         # lane-padded class dim for lane-dense stores / CE
LN_EPS = 1e-12     # BERT LayerNorm eps


# ------------------------------ per-example fused kernel ------------------------------
def _rescl_kernel(
    labels_sref,   # SMEM (B,) i32     scalar-prefetched relation labels
    emb_ref,       # (1, S, H)  f32    embeddings after lookup (pre-LN), this example
    mask_ref,      # (1, 1, S)  f32    attention mask (1 = keep)
    e1_ref,        # (1, S, 1)  f32    entity-1 mask
    e2_ref,        # (1, S, 1)  f32    entity-2 mask
    emb_ln_ref,    # (2, H)     f32    [gamma; beta]
    wq_ref,        # (L, NH, H, HD) bf16   per-head Q weight (host pre-split)
    bq_ref,        # (L, NH, 1, HD) f32
    wk_ref,        # (L, NH, H, HD) bf16
    bk_ref,        # (L, NH, 1, HD) f32
    wv_ref,        # (L, NH, H, HD) bf16
    bv_ref,        # (L, NH, 1, HD) f32
    wo_ref,        # (L, NH, HD, H) bf16   per-head rows of W_O (host pre-split)
    bo_ref,        # (L, 1, H)  f32
    ln1_ref,       # (L, 2, H)  f32
    wi_ref,        # (L, H, I)  bf16
    bi_ref,        # (L, 1, I)  f32
    wo2_ref,       # (L, I, H)  bf16
    bo2_ref,       # (L, 1, H)  f32
    ln2_ref,       # (L, 2, H)  f32
    clsw_ref,      # (2H, CPAD) bf16   zero-padded classifier weight
    clsb_ref,      # (1, CPAD)  f32    bias, padding classes = -1e9
    hidden_ref,    # out: (1, S, H)  f32   last_hidden_state for this example
    ent_ref,       # out: (1, 1, 2H) f32   concatenated entity pooling
    logits_ref,    # out: (1, 1, CPAD) f32 lane-padded logits
    ploss_ref,     # out: (1, 1, 1)  f32   per-example CE term (0 if ignored)
    pvalid_ref,    # out: (1, 1, 1)  f32   1.0 if label != ignore_index
):
    f32 = jnp.float32
    bf16 = jnp.bfloat16

    def layer_norm(h, gb):  # biased variance, eps = 1e-12 (matches torch LayerNorm)
        mean = jnp.mean(h, axis=-1, keepdims=True)
        var = jnp.mean((h - mean) ** 2, axis=-1, keepdims=True)
        return (h - mean) * jax.lax.rsqrt(var + LN_EPS) * gb[0:1, :] + gb[1:2, :]

    def mm(x, w_bf16):  # bf16 MXU feed, f32 accumulation
        return jnp.dot(x.astype(bf16), w_bf16, preferred_element_type=f32)

    def gelu_exact(xv):
        # erf via Abramowitz & Stegun 7.1.26; divide -> EUP approx reciprocal + 1 Newton step
        z = xv * 0.7071067811865476
        sgn = jnp.where(z >= 0.0, 1.0, -1.0)
        az = jnp.abs(z)
        d = 1.0 + 0.3275911 * az
        r = pl.reciprocal(d, approx=True)
        r = r * (2.0 - d * r)                       # Newton refinement -> ~f32 accuracy
        poly = r * (0.254829592 + r * (-0.284496736 + r * (1.421413741
                     + r * (-1.453152027 + r * 1.061405429))))
        erf_z = sgn * (1.0 - poly * jnp.exp(-az * az))
        return 0.5 * xv * (1.0 + erf_z)

    scale = 1.0 / (HD ** 0.5)

    # additive attention bias, broadcast ONCE (hoisted out of the layer/head loops)
    neg = (1.0 - mask_ref[0]) * -10000.0            # (1, S)
    bias_ss = jnp.broadcast_to(neg, (S, S))         # (S, S)

    # ----------------- embedding LayerNorm (dropout = identity, eval) -----------------
    x = layer_norm(emb_ref[0], emb_ln_ref[...])     # (S, H) f32

    # ------------------------------ transformer encoder -------------------------------
    for li in range(L):
        acc = bo_ref[li]                            # (1, H), broadcasts over rows
        for h in range(NH):
            # per-head projections with host-pre-split weights (no qkv lane slicing)
            q = mm(x, wq_ref[li, h]) + bq_ref[li, h]     # (S, HD)
            k = mm(x, wk_ref[li, h]) + bk_ref[li, h]     # (S, HD)
            v = mm(x, wv_ref[li, h]) + bv_ref[li, h]     # (S, HD)
            s = jax.lax.dot_general(                      # q @ k^T without explicit transpose
                q.astype(bf16), k.astype(bf16),
                (((1,), (1,)), ((), ())),
                preferred_element_type=f32) * scale + bias_ss
            m = jnp.max(s, axis=-1, keepdims=True)
            p = jnp.exp(s - m)
            p = p * pl.reciprocal(jnp.sum(p, axis=-1, keepdims=True), approx=True)
            ctx = jnp.dot(p.astype(bf16), v.astype(bf16),
                          preferred_element_type=f32)     # (S, HD)
            # accumulate ctx_h @ W_O[head-rows]  -> no lane-dim concat of heads
            acc = acc + jnp.dot(ctx.astype(bf16), wo_ref[li, h],
                                preferred_element_type=f32)
        x = layer_norm(acc + x, ln1_ref[li])             # dropout: identity (eval)

        # feed-forward block with fused exact-erf GELU
        inter = gelu_exact(mm(x, wi_ref[li]) + bi_ref[li])   # (S, I)
        ffn = mm(inter, wo2_ref[li]) + bo2_ref[li]            # dropout: identity (eval)
        x = layer_norm(ffn + x, ln2_ref[li])

    hidden_ref[...] = x.reshape(1, S, H)                 # last_hidden_state

    # ------------------ entity max-pooling + concat + classifier ----------------------
    def masked_max(e_ref):
        e = e_ref[0]                                      # (S, 1)
        return jnp.max(jnp.where(e > 0.0, x, -1e30), axis=0, keepdims=True)  # (1, H)

    e1_h = masked_max(e1_ref)
    e2_h = masked_max(e2_ref)
    ent = jnp.concatenate([e1_h, e2_h], axis=-1)          # (1, 2H); dropout: identity
    ent_ref[...] = ent.reshape(1, 1, 2 * H)

    # classifier (bf16 MXU feed, f32 acc), lane-padded to CPAD classes
    logits = mm(ent, clsw_ref[...]) + clsb_ref[...]       # (1, CPAD)
    logits_ref[...] = logits.reshape(1, 1, CPAD)

    # ------------------------ per-example cross-entropy term --------------------------
    lab = labels_sref[pl.program_id(0)]                   # scalar i32 from SMEM
    mx = jnp.max(logits, axis=-1, keepdims=True)
    lse = jnp.log(jnp.sum(jnp.exp(logits - mx), axis=-1, keepdims=True)) + mx   # (1, 1)
    cls_iota = jax.lax.broadcasted_iota(jnp.int32, (1, CPAD), 1)
    picked = jnp.sum(jnp.where(cls_iota == lab, logits, 0.0), axis=-1, keepdims=True)
    is_valid = lab != -100                                # CrossEntropyLoss ignore_index
    ploss_ref[...] = jnp.where(is_valid, lse - picked,
                               jnp.zeros_like(lse)).reshape(1, 1, 1)
    pvalid_ref[...] = jnp.where(is_valid, jnp.ones((1, 1, 1), f32),
                                jnp.zeros((1, 1, 1), f32))


# ------------------------------- parameter init --------------------------------------
def init_params(key):
    def nrm(k, shape):
        return 0.02 * jax.random.normal(k, shape, dtype=jnp.float32)

    ks = jax.random.split(key, 12)
    ones_lh = jnp.ones((L, H), jnp.float32)
    zeros_lh = jnp.zeros((L, H), jnp.float32)
    return {
        "word_emb": nrm(ks[0], (VOCAB, H)),
        "pos_emb": nrm(ks[1], (MAX_POS, H)),
        "type_emb": nrm(ks[2], (2, H)),
        "emb_ln": jnp.stack([jnp.ones((H,), jnp.float32), jnp.zeros((H,), jnp.float32)]),
        "wq": nrm(ks[3], (L, H, H)), "bq": jnp.zeros((L, H), jnp.float32),
        "wk": nrm(ks[4], (L, H, H)), "bk": jnp.zeros((L, H), jnp.float32),
        "wv": nrm(ks[5], (L, H, H)), "bv": jnp.zeros((L, H), jnp.float32),
        "wo": nrm(ks[6], (L, H, H)), "bo": jnp.zeros((L, 1, H), jnp.float32),
        "ln1": jnp.stack([ones_lh, zeros_lh], axis=1),          # (L, 2, H)
        "wi": nrm(ks[7], (L, H, I)), "bi": jnp.zeros((L, 1, I), jnp.float32),
        "wo2": nrm(ks[8], (L, I, H)), "bo2": jnp.zeros((L, 1, H), jnp.float32),
        "ln2": jnp.stack([ones_lh, zeros_lh], axis=1),          # (L, 2, H)
        "cls_w": nrm(ks[9], (2 * H, NUM_CLASSES)),
        "cls_b": jnp.zeros((NUM_CLASSES,), jnp.float32),
    }


# --------------------------------- forward wrapper ------------------------------------
def rescl_forward(params, input_ids, input_mask, e1_mask, e2_mask, labels):
    """RESCLModel.forward, eval path. Returns (last_hidden, ent, logits, ce_loss)."""
    Bv, Sv = input_ids.shape
    f32 = jnp.float32
    bf = jnp.bfloat16

    # glue: embedding gathers (word + position + token_type=0)
    emb = (jnp.take(params["word_emb"], input_ids, axis=0)
           + params["pos_emb"][:Sv][None, :, :]
           + params["type_emb"][0][None, None, :]).astype(f32)        # (B, S, H)

    mask3 = input_mask.astype(f32).reshape(Bv, 1, Sv)
    e1m = e1_mask.astype(f32).reshape(Bv, Sv, 1)
    e2m = e2_mask.astype(f32).reshape(Bv, Sv, 1)
    labels_i32 = labels.astype(jnp.int32).reshape(Bv)

    # host-side pre-permutation: per-head, slice-free weight layouts for the kernel
    def heads_cols(w):   # (L, H, H) -> (L, NH, H, HD): columns of head h
        return w.reshape(L, H, NH, HD).transpose(0, 2, 1, 3).astype(bf)

    def heads_bias(b):   # (L, H) -> (L, NH, 1, HD)
        return b.reshape(L, NH, HD)[:, :, None, :].astype(f32)

    wq, wk, wv = heads_cols(params["wq"]), heads_cols(params["wk"]), heads_cols(params["wv"])
    bq, bk, bv = heads_bias(params["bq"]), heads_bias(params["bk"]), heads_bias(params["bv"])
    wo = params["wo"].reshape(L, NH, HD, H).astype(bf)    # rows of head h

    # lane-dense classifier: zero-pad weights (bf16), -1e9 bias on padding classes
    cls_w = (jnp.zeros((2 * H, CPAD), f32).at[:, :NUM_CLASSES]
             .set(params["cls_w"]).astype(bf))
    cls_b = jnp.full((1, CPAD), -1e9, f32).at[0, :NUM_CLASSES].set(params["cls_b"])

    def per_ex3(b, lab):  # per-example block, rank-3 arrays
        return (b, 0, 0)

    def full2(b, lab):    # resident weights, rank-2
        return (0, 0)

    def full3(b, lab):    # resident weights, rank-3
        return (0, 0, 0)

    def full4(b, lab):    # resident weights, rank-4
        return (0, 0, 0, 0)

    gs = pltpu.PrefetchScalarGridSpec(
        num_scalar_prefetch=1,                 # labels -> SMEM
        grid=(Bv,),
        in_specs=[
            pl.BlockSpec((1, Sv, H), per_ex3),        # emb
            pl.BlockSpec((1, 1, Sv), per_ex3),        # attention mask
            pl.BlockSpec((1, Sv, 1), per_ex3),        # e1 mask
            pl.BlockSpec((1, Sv, 1), per_ex3),        # e2 mask
            pl.BlockSpec((2, H), full2),              # emb LN
            pl.BlockSpec((L, NH, H, HD), full4),      # wq (per-head)
            pl.BlockSpec((L, NH, 1, HD), full4),      # bq
            pl.BlockSpec((L, NH, H, HD), full4),      # wk
            pl.BlockSpec((L, NH, 1, HD), full4),      # bk
            pl.BlockSpec((L, NH, H, HD), full4),      # wv
            pl.BlockSpec((L, NH, 1, HD), full4),      # bv
            pl.BlockSpec((L, NH, HD, H), full4),      # wo (per-head rows)
            pl.BlockSpec((L, 1, H), full3),           # bo
            pl.BlockSpec((L, 2, H), full3),           # ln1
            pl.BlockSpec((L, H, I), full3),           # wi
            pl.BlockSpec((L, 1, I), full3),           # bi
            pl.BlockSpec((L, I, H), full3),           # wo2
            pl.BlockSpec((L, 1, H), full3),           # bo2
            pl.BlockSpec((L, 2, H), full3),           # ln2
            pl.BlockSpec((2 * H, CPAD), full2),       # classifier W (padded, bf16)
            pl.BlockSpec((1, CPAD), full2),           # classifier b (padded, -1e9)
        ],
        out_specs=(
            pl.BlockSpec((1, Sv, H), per_ex3),        # last_hidden_state
            pl.BlockSpec((1, 1, 2 * H), per_ex3),     # ent
            pl.BlockSpec((1, 1, CPAD), per_ex3),      # padded logits
            pl.BlockSpec((1, 1, 1), per_ex3),         # per-example CE term
            pl.BlockSpec((1, 1, 1), per_ex3),         # per-example valid flag
        ),
    )

    hidden, ent, logits_pad, ploss, pvalid = pl.pallas_call(
        _rescl_kernel,
        out_shape=(
            jax.ShapeDtypeStruct((Bv, Sv, H), f32),
            jax.ShapeDtypeStruct((Bv, 1, 2 * H), f32),
            jax.ShapeDtypeStruct((Bv, 1, CPAD), f32),
            jax.ShapeDtypeStruct((Bv, 1, 1), f32),
            jax.ShapeDtypeStruct((Bv, 1, 1), f32),
        ),
        grid_spec=gs,
        compiler_params=pltpu.CompilerParams(
            dimension_semantics=("parallel",),        # batch-parallel -> both v7x TCs
            vmem_limit_bytes=32 * 1024 * 1024,
        ),
    )(
        labels_i32,
        emb, mask3, e1m, e2m,
        params["emb_ln"],
        wq, bq, wk, bk, wv, bv,
        wo, params["bo"], params["ln1"],
        params["wi"].astype(bf), params["bi"],
        params["wo2"].astype(bf), params["bo2"], params["ln2"],
        cls_w, cls_b,
    )

    # glue: mean-over-batch CE (2 scalar reductions), guarded against all-ignored labels
    tot = jnp.sum(ploss)
    cnt = jnp.sum(pvalid)
    loss = jnp.where(cnt > 0, tot / jnp.maximum(cnt, 1.0), 0.0)

    logits = logits_pad[:, 0, :NUM_CLASSES]
    ent_out = ent[:, 0, :]
    return hidden, ent_out, logits, loss


# --------------------------------------- main ------------------------------------------
if __name__ == "__main__":
    key = jax.random.PRNGKey(0)
    k_param, k_ids, k_lab = jax.random.split(key, 3)

    params = init_params(k_param)
    input_ids = jax.random.randint(k_ids, (B, S), 0, VOCAB, dtype=jnp.int32)
    # attention mask: example 0 full length, example 1 has 2 padded tail tokens
    input_mask = jnp.ones((B, S), jnp.int32).at[1, S - 2:].set(0)
    # entity spans
    e1_mask = jnp.zeros((B, S), jnp.float32).at[:, 1:3].set(1.0)
    e2_mask = jnp.zeros((B, S), jnp.float32).at[:, 4:6].set(1.0)
    labels = jax.random.randint(k_lab, (B,), 0, NUM_CLASSES, dtype=jnp.int32)

    fwd = jax.jit(rescl_forward)
    last_hidden, ent, logits, loss = fwd(params, input_ids, input_mask,
                                         e1_mask, e2_mask, labels)
    jax.block_until_ready((last_hidden, ent, logits, loss))

    assert last_hidden.shape == (B, S, H)
    assert ent.shape == (B, 2 * H)
    assert logits.shape == (B, NUM_CLASSES)
    assert loss.shape == ()
    assert bool(jnp.isfinite(loss))
    print("KERNEL_OK")
</pallas_src>

<mosaic_0001>
module attributes {stable_mosaic.version = 11 : i64} {
  func.func @_rescl_kernel(%arg0: i32, %arg1: memref<2xi32, #tpu.memory_space<smem>>, %arg2: memref<1x8x32xf32, #tpu.memory_space<vmem>>, %arg3: memref<1x1x8xf32, #tpu.memory_space<vmem>>, %arg4: memref<1x8x1xf32, #tpu.memory_space<vmem>>, %arg5: memref<1x8x1xf32, #tpu.memory_space<vmem>>, %arg6: memref<2x32xf32, #tpu.memory_space<vmem>>, %arg7: memref<2x2x32x16xbf16, #tpu.memory_space<vmem>>, %arg8: memref<2x2x1x16xf32, #tpu.memory_space<vmem>>, %arg9: memref<2x2x32x16xbf16, #tpu.memory_space<vmem>>, %arg10: memref<2x2x1x16xf32, #tpu.memory_space<vmem>>, %arg11: memref<2x2x32x16xbf16, #tpu.memory_space<vmem>>, %arg12: memref<2x2x1x16xf32, #tpu.memory_space<vmem>>, %arg13: memref<2x2x16x32xbf16, #tpu.memory_space<vmem>>, %arg14: memref<2x1x32xf32, #tpu.memory_space<vmem>>, %arg15: memref<2x2x32xf32, #tpu.memory_space<vmem>>, %arg16: memref<2x32x128xbf16, #tpu.memory_space<vmem>>, %arg17: memref<2x1x128xf32, #tpu.memory_space<vmem>>, %arg18: memref<2x128x32xbf16, #tpu.memory_space<vmem>>, %arg19: memref<2x1x32xf32, #tpu.memory_space<vmem>>, %arg20: memref<2x2x32xf32, #tpu.memory_space<vmem>>, %arg21: memref<64x128xbf16, #tpu.memory_space<vmem>>, %arg22: memref<1x128xf32, #tpu.memory_space<vmem>>, %arg23: memref<1x8x32xf32, #tpu.memory_space<vmem>>, %arg24: memref<1x1x64xf32, #tpu.memory_space<vmem>>, %arg25: memref<1x1x128xf32, #tpu.memory_space<vmem>>, %arg26: memref<1x1x1xf32, #tpu.memory_space<vmem>>, %arg27: memref<1x1x1xf32, #tpu.memory_space<vmem>>) attributes {dimension_semantics = [#tpu.dimension_semantics<parallel>], iteration_bounds = array<i64: 2>, scalar_prefetch = 1 : i64, scratch_operands = 0 : i64, tpu.core_type = #tpu.core_type<tc>, window_params = [{transform_indices = @transform_0, window_bounds = array<i64: 1, 8, 32>}, {transform_indices = @transform_1, window_bounds = array<i64: 1, 1, 8>}, {transform_indices = @transform_2, window_bounds = array<i64: 1, 8, 1>}, {transform_indices = @transform_3, window_bounds = array<i64: 1, 8, 1>}, {pipeline_mode = #tpu.pipeline_mode<synchronous>, transform_indices = @transform_4, window_bounds = array<i64: 2, 32>}, {pipeline_mode = #tpu.pipeline_mode<synchronous>, transform_indices = @transform_5, window_bounds = array<i64: 2, 2, 32, 16>}, {pipeline_mode = #tpu.pipeline_mode<synchronous>, transform_indices = @transform_6, window_bounds = array<i64: 2, 2, 1, 16>}, {pipeline_mode = #tpu.pipeline_mode<synchronous>, transform_indices = @transform_7, window_bounds = array<i64: 2, 2, 32, 16>}, {pipeline_mode = #tpu.pipeline_mode<synchronous>, transform_indices = @transform_8, window_bounds = array<i64: 2, 2, 1, 16>}, {pipeline_mode = #tpu.pipeline_mode<synchronous>, transform_indices = @transform_9, window_bounds = array<i64: 2, 2, 32, 16>}, {pipeline_mode = #tpu.pipeline_mode<synchronous>, transform_indices = @transform_10, window_bounds = array<i64: 2, 2, 1, 16>}, {pipeline_mode = #tpu.pipeline_mode<synchronous>, transform_indices = @transform_11, window_bounds = array<i64: 2, 2, 16, 32>}, {pipeline_mode = #tpu.pipeline_mode<synchronous>, transform_indices = @transform_12, window_bounds = array<i64: 2, 1, 32>}, {pipeline_mode = #tpu.pipeline_mode<synchronous>, transform_indices = @transform_13, window_bounds = array<i64: 2, 2, 32>}, {pipeline_mode = #tpu.pipeline_mode<synchronous>, transform_indices = @transform_14, window_bounds = array<i64: 2, 32, 128>}, {pipeline_mode = #tpu.pipeline_mode<synchronous>, transform_indices = @transform_15, window_bounds = array<i64: 2, 1, 128>}, {pipeline_mode = #tpu.pipeline_mode<synchronous>, transform_indices = @transform_16, window_bounds = array<i64: 2, 128, 32>}, {pipeline_mode = #tpu.pipeline_mode<synchronous>, transform_indices = @transform_17, window_bounds = array<i64: 2, 1, 32>}, {pipeline_mode = #tpu.pipeline_mode<synchronous>, transform_indices = @transform_18, window_bounds = array<i64: 2, 2, 32>}, {pipeline_mode = #tpu.pipeline_mode<synchronous>, transform_indices = @transform_19, window_bounds = array<i64: 64, 128>}, {pipeline_mode = #tpu.pipeline_mode<synchronous>, transform_indices = @transform_20, window_bounds = array<i64: 1, 128>}, {transform_indices = @transform_21, window_bounds = array<i64: 1, 8, 32>}, {transform_indices = @transform_22, window_bounds = array<i64: 1, 1, 64>}, {transform_indices = @transform_23, window_bounds = array<i64: 1, 1, 128>}, {transform_indices = @transform_24, window_bounds = array<i64: 1, 1, 1>}, {transform_indices = @transform_25, window_bounds = array<i64: 1, 1, 1>}]} {
    %c0 = arith.constant 0 : index
    %c0_0 = arith.constant 0 : index
    %c0_1 = arith.constant 0 : index
    %0 = vector.load %arg3[%c0, %c0_0, %c0_1] : memref<1x1x8xf32, #tpu.memory_space<vmem>>, vector<1x1x8xf32>
    %1 = vector.shape_cast %0 : vector<1x1x8xf32> to vector<1x8xf32>
    %cst = arith.constant 1.000000e+00 : f32
    %2 = vector.broadcast %cst : f32 to vector<1x8xf32>
    %3 = arith.subf %2, %1 : vector<1x8xf32>
    %cst_2 = arith.constant -1.000000e+04 : f32
    %4 = vector.broadcast %cst_2 : f32 to vector<1x8xf32>
    %5 = arith.mulf %3, %4 : vector<1x8xf32>
    %6 = vector.shape_cast %5 : vector<1x8xf32> to vector<1x8xf32>
    %7 = vector.broadcast %6 : vector<1x8xf32> to vector<8x8xf32>
    %c0_3 = arith.constant 0 : index
    %c0_4 = arith.constant 0 : index
    %c0_5 = arith.constant 0 : index
    %8 = vector.load %arg2[%c0_3, %c0_4, %c0_5] : memref<1x8x32xf32, #tpu.memory_space<vmem>>, vector<1x8x32xf32>
    %9 = vector.shape_cast %8 : vector<1x8x32xf32> to vector<8x32xf32>
    %c0_6 = arith.constant 0 : index
    %c0_7 = arith.constant 0 : index
    %10 = vector.load %arg6[%c0_6, %c0_7] : memref<2x32xf32, #tpu.memory_space<vmem>>, vector<2x32xf32>
    %cst_8 = arith.constant dense<0.000000e+00> : vector<8xf32>
    %11 = vector.multi_reduction <add>, %9, %cst_8 [1] : vector<8x32xf32> to vector<8xf32>
    %12 = vector.shape_cast %11 : vector<8xf32> to vector<8x1xf32>
    %cst_9 = arith.constant 3.200000e+01 : f32
    %13 = vector.broadcast %cst_9 : f32 to vector<8x1xf32>
    %14 = arith.divf %12, %13 : vector<8x1xf32>
    %15 = vector.broadcast %14 : vector<8x1xf32> to vector<8x32xf32>
    %16 = arith.subf %9, %15 : vector<8x32xf32>
    %17 = arith.mulf %16, %16 : vector<8x32xf32>
    %cst_10 = arith.constant dense<0.000000e+00> : vector<8xf32>
    %18 = vector.multi_reduction <add>, %17, %cst_10 [1] : vector<8x32xf32> to vector<8xf32>
    %19 = vector.shape_cast %18 : vector<8xf32> to vector<8x1xf32>
    %cst_11 = arith.constant 3.200000e+01 : f32
    %20 = vector.broadcast %cst_11 : f32 to vector<8x1xf32>
    %21 = arith.divf %19, %20 : vector<8x1xf32>
    %22 = vector.broadcast %14 : vector<8x1xf32> to vector<8x32xf32>
    %23 = arith.subf %9, %22 : vector<8x32xf32>
    %cst_12 = arith.constant 9.99999996E-13 : f32
    %24 = vector.broadcast %cst_12 : f32 to vector<8x1xf32>
    %25 = arith.addf %21, %24 : vector<8x1xf32>
    %26 = math.rsqrt %25 : vector<8x1xf32>
    %27 = vector.broadcast %26 : vector<8x1xf32> to vector<8x32xf32>
    %28 = arith.mulf %23, %27 : vector<8x32xf32>
    %29 = vector.extract_strided_slice %10 {offsets = [0, 0], sizes = [1, 32], strides = [1, 1]} : vector<2x32xf32> to vector<1x32xf32>
    %30 = vector.broadcast %29 : vector<1x32xf32> to vector<8x32xf32>
    %31 = arith.mulf %28, %30 : vector<8x32xf32>
    %32 = vector.extract_strided_slice %10 {offsets = [1, 0], sizes = [1, 32], strides = [1, 1]} : vector<2x32xf32> to vector<1x32xf32>
    %33 = vector.broadcast %32 : vector<1x32xf32> to vector<8x32xf32>
    %34 = arith.addf %31, %33 : vector<8x32xf32>
    %c0_13 = arith.constant 0 : index
    %c0_14 = arith.constant 0 : index
    %c0_15 = arith.constant 0 : index
    %35 = vector.load %arg14[%c0_13, %c0_14, %c0_15] : memref<2x1x32xf32, #tpu.memory_space<vmem>>, vector<1x1x32xf32>
    %36 = vector.shape_cast %35 : vector<1x1x32xf32> to vector<1x32xf32>
    %c0_16 = arith.constant 0 : index
    %c0_17 = arith.constant 0 : index
    %c0_18 = arith.constant 0 : index
    %c0_19 = arith.constant 0 : index
    %37 = vector.load %arg7[%c0_16, %c0_17, %c0_18, %c0_19] : memref<2x2x32x16xbf16, #tpu.memory_space<vmem>>, vector<1x1x32x16xbf16>
    %38 = vector.shape_cast %37 : vector<1x1x32x16xbf16> to vector<32x16xbf16>
    %39 = arith.truncf %34 : vector<8x32xf32> to vector<8x32xbf16>
    %cst_20 = arith.constant dense<0.000000e+00> : vector<8x16xf32>
    %40 = tpu.matmul %39, %38, %cst_20 {dimension_numbers = #tpu.dot_dimension_numbers<[1], [0], [0], [1], [0, 0, 1, 1], [], []>} : vector<8x32xbf16>, vector<32x16xbf16>, vector<8x16xf32> -> vector<8x16xf32>
    %c0_21 = arith.constant 0 : index
    %c0_22 = arith.constant 0 : index
    %c0_23 = arith.constant 0 : index
    %c0_24 = arith.constant 0 : index
    %41 = vector.load %arg8[%c0_21, %c0_22, %c0_23, %c0_24] : memref<2x2x1x16xf32, #tpu.memory_space<vmem>>, vector<1x1x1x16xf32>
    %42 = vector.shape_cast %41 : vector<1x1x1x16xf32> to vector<1x16xf32>
    %43 = vector.broadcast %42 : vector<1x16xf32> to vector<8x16xf32>
    %44 = arith.addf %40, %43 : vector<8x16xf32>
    %c0_25 = arith.constant 0 : index
    %c0_26 = arith.constant 0 : index
    %c0_27 = arith.constant 0 : index
    %c0_28 = arith.constant 0 : index
    %45 = vector.load %arg9[%c0_25, %c0_26, %c0_27, %c0_28] : memref<2x2x32x16xbf16, #tpu.memory_space<vmem>>, vector<1x1x32x16xbf16>
    %46 = vector.shape_cast %45 : vector<1x1x32x16xbf16> to vector<32x16xbf16>
    %47 = arith.truncf %34 : vector<8x32xf32> to vector<8x32xbf16>
    %cst_29 = arith.constant dense<0.000000e+00> : vector<8x16xf32>
    %48 = tpu.matmul %47, %46, %cst_29 {dimension_numbers = #tpu.dot_dimension_numbers<[1], [0], [0], [1], [0, 0, 1, 1], [], []>} : vector<8x32xbf16>, vector<32x16xbf16>, vector<8x16xf32> -> vector<8x16xf32>
    %c0_30 = arith.constant 0 : index
    %c0_31 = arith.constant 0 : index
    %c0_32 = arith.constant 0 : index
    %c0_33 = arith.constant 0 : index
    %49 = vector.load %arg10[%c0_30, %c0_31, %c0_32, %c0_33] : memref<2x2x1x16xf32, #tpu.memory_space<vmem>>, vector<1x1x1x16xf32>
    %50 = vector.shape_cast %49 : vector<1x1x1x16xf32> to vector<1x16xf32>
    %51 = vector.broadcast %50 : vector<1x16xf32> to vector<8x16xf32>
    %52 = arith.addf %48, %51 : vector<8x16xf32>
    %c0_34 = arith.constant 0 : index
    %c0_35 = arith.constant 0 : index
    %c0_36 = arith.constant 0 : index
    %c0_37 = arith.constant 0 : index
    %53 = vector.load %arg11[%c0_34, %c0_35, %c0_36, %c0_37] : memref<2x2x32x16xbf16, #tpu.memory_space<vmem>>, vector<1x1x32x16xbf16>
    %54 = vector.shape_cast %53 : vector<1x1x32x16xbf16> to vector<32x16xbf16>
    %55 = arith.truncf %34 : vector<8x32xf32> to vector<8x32xbf16>
    %cst_38 = arith.constant dense<0.000000e+00> : vector<8x16xf32>
    %56 = tpu.matmul %55, %54, %cst_38 {dimension_numbers = #tpu.dot_dimension_numbers<[1], [0], [0], [1], [0, 0, 1, 1], [], []>} : vector<8x32xbf16>, vector<32x16xbf16>, vector<8x16xf32> -> vector<8x16xf32>
    %c0_39 = arith.constant 0 : index
    %c0_40 = arith.constant 0 : index
    %c0_41 = arith.constant 0 : index
    %c0_42 = arith.constant 0 : index
    %57 = vector.load %arg12[%c0_39, %c0_40, %c0_41, %c0_42] : memref<2x2x1x16xf32, #tpu.memory_space<vmem>>, vector<1x1x1x16xf32>
    %58 = vector.shape_cast %57 : vector<1x1x1x16xf32> to vector<1x16xf32>
    %59 = vector.broadcast %58 : vector<1x16xf32> to vector<8x16xf32>
    %60 = arith.addf %56, %59 : vector<8x16xf32>
    %61 = arith.truncf %44 : vector<8x16xf32> to vector<8x16xbf16>
    %62 = arith.truncf %52 : vector<8x16xf32> to vector<8x16xbf16>
    %cst_43 = arith.constant dense<0.000000e+00> : vector<8x8xf32>
    %63 = tpu.matmul %61, %62, %cst_43 {dimension_numbers = #tpu.dot_dimension_numbers<[1], [1], [0], [0], [0, 0, 1, 0], [], []>} : vector<8x16xbf16>, vector<8x16xbf16>, vector<8x8xf32> -> vector<8x8xf32>
    %cst_44 = arith.constant 2.500000e-01 : f32
    %64 = vector.broadcast %cst_44 : f32 to vector<8x8xf32>
    %65 = arith.mulf %63, %64 : vector<8x8xf32>
    %66 = arith.addf %65, %7 : vector<8x8xf32>
    %cst_45 = arith.constant dense<0xFF800000> : vector<8xf32>
    %67 = vector.multi_reduction <maximumf>, %66, %cst_45 [1] : vector<8x8xf32> to vector<8xf32>
    %68 = vector.shape_cast %67 : vector<8xf32> to vector<8x1xf32>
    %69 = vector.broadcast %68 : vector<8x1xf32> to vector<8x8xf32>
    %70 = arith.subf %66, %69 : vector<8x8xf32>
    %71 = math.exp %70 : vector<8x8xf32>
    %cst_46 = arith.constant dense<0.000000e+00> : vector<8xf32>
    %72 = vector.multi_reduction <add>, %71, %cst_46 [1] : vector<8x8xf32> to vector<8xf32>
    %73 = vector.shape_cast %72 : vector<8xf32> to vector<8x1xf32>
    %74 = tpu.reciprocal %73 {approx = true} : vector<8x1xf32> -> vector<8x1xf32>
    %75 = vector.broadcast %74 : vector<8x1xf32> to vector<8x8xf32>
    %76 = arith.mulf %71, %75 : vector<8x8xf32>
    %77 = arith.truncf %76 : vector<8x8xf32> to vector<8x8xbf16>
    %78 = arith.truncf %60 : vector<8x16xf32> to vector<8x16xbf16>
    %cst_47 = arith.constant dense<0.000000e+00> : vector<8x16xf32>
    %79 = tpu.matmul %77, %78, %cst_47 {dimension_numbers = #tpu.dot_dimension_numbers<[1], [0], [0], [1], [0, 0, 1, 1], [], []>} : vector<8x8xbf16>, vector<8x16xbf16>, vector<8x16xf32> -> vector<8x16xf32>
    %80 = arith.truncf %79 : vector<8x16xf32> to vector<8x16xbf16>
    %c0_48 = arith.constant 0 : index
    %c0_49 = arith.constant 0 : index
    %c0_50 = arith.constant 0 : index
    %c0_51 = arith.constant 0 : index
    %81 = vector.load %arg13[%c0_48, %c0_49, %c0_50, %c0_51] : memref<2x2x16x32xbf16, #tpu.memory_space<vmem>>, vector<1x1x16x32xbf16>
    %82 = vector.shape_cast %81 : vector<1x1x16x32xbf16> to vector<16x32xbf16>
    %cst_52 = arith.constant dense<0.000000e+00> : vector<8x32xf32>
    %83 = tpu.matmul %80, %82, %cst_52 {dimension_numbers = #tpu.dot_dimension_numbers<[1], [0], [0], [1], [0, 0, 1, 1], [], []>} : vector<8x16xbf16>, vector<16x32xbf16>, vector<8x32xf32> -> vector<8x32xf32>
    %84 = vector.broadcast %36 : vector<1x32xf32> to vector<8x32xf32>
    %85 = arith.addf %84, %83 : vector<8x32xf32>
    %c0_53 = arith.constant 0 : index
    %c1 = arith.constant 1 : index
    %c0_54 = arith.constant 0 : index
    %c0_55 = arith.constant 0 : index
    %86 = vector.load %arg7[%c0_53, %c1, %c0_54, %c0_55] : memref<2x2x32x16xbf16, #tpu.memory_space<vmem>>, vector<1x1x32x16xbf16>
    %87 = vector.shape_cast %86 : vector<1x1x32x16xbf16> to vector<32x16xbf16>
    %88 = arith.truncf %34 : vector<8x32xf32> to vector<8x32xbf16>
    %cst_56 = arith.constant dense<0.000000e+00> : vector<8x16xf32>
    %89 = tpu.matmul %88, %87, %cst_56 {dimension_numbers = #tpu.dot_dimension_numbers<[1], [0], [0], [1], [0, 0, 1, 1], [], []>} : vector<8x32xbf16>, vector<32x16xbf16>, vector<8x16xf32> -> vector<8x16xf32>
    %c0_57 = arith.constant 0 : index
    %c1_58 = arith.constant 1 : index
    %c0_59 = arith.constant 0 : index
    %c0_60 = arith.constant 0 : index
    %90 = vector.load %arg8[%c0_57, %c1_58, %c0_59, %c0_60] : memref<2x2x1x16xf32, #tpu.memory_space<vmem>>, vector<1x1x1x16xf32>
    %91 = vector.shape_cast %90 : vector<1x1x1x16xf32> to vector<1x16xf32>
    %92 = vector.broadcast %91 : vector<1x16xf32> to vector<8x16xf32>
    %93 = arith.addf %89, %92 : vector<8x16xf32>
    %c0_61 = arith.constant 0 : index
    %c1_62 = arith.constant 1 : index
    %c0_63 = arith.constant 0 : index
    %c0_64 = arith.constant 0 : index
    %94 = vector.load %arg9[%c0_61, %c1_62, %c0_63, %c0_64] : memref<2x2x32x16xbf16, #tpu.memory_space<vmem>>, vector<1x1x32x16xbf16>
    %95 = vector.shape_cast %94 : vector<1x1x32x16xbf16> to vector<32x16xbf16>
    %96 = arith.truncf %34 : vector<8x32xf32> to vector<8x32xbf16>
    %cst_65 = arith.constant dense<0.000000e+00> : vector<8x16xf32>
    %97 = tpu.matmul %96, %95, %cst_65 {dimension_numbers = #tpu.dot_dimension_numbers<[1], [0], [0], [1], [0, 0, 1, 1], [], []>} : vector<8x32xbf16>, vector<32x16xbf16>, vector<8x16xf32> -> vector<8x16xf32>
    %c0_66 = arith.constant 0 : index
    %c1_67 = arith.constant 1 : index
    %c0_68 = arith.constant 0 : index
    %c0_69 = arith.constant 0 : index
    %98 = vector.load %arg10[%c0_66, %c1_67, %c0_68, %c0_69] : memref<2x2x1x16xf32, #tpu.memory_space<vmem>>, vector<1x1x1x16xf32>
    %99 = vector.shape_cast %98 : vector<1x1x1x16xf32> to vector<1x16xf32>
    %100 = vector.broadcast %99 : vector<1x16xf32> to vector<8x16xf32>
    %101 = arith.addf %97, %100 : vector<8x16xf32>
    %c0_70 = arith.constant 0 : index
    %c1_71 = arith.constant 1 : index
    %c0_72 = arith.constant 0 : index
    %c0_73 = arith.constant 0 : index
    %102 = vector.load %arg11[%c0_70, %c1_71, %c0_72, %c0_73] : memref<2x2x32x16xbf16, #tpu.memory_space<vmem>>, vector<1x1x32x16xbf16>
    %103 = vector.shape_cast %102 : vector<1x1x32x16xbf16> to vector<32x16xbf16>
    %104 = arith.truncf %34 : vector<8x32xf32> to vector<8x32xbf16>
    %cst_74 = arith.constant dense<0.000000e+00> : vector<8x16xf32>
    %105 = tpu.matmul %104, %103, %cst_74 {dimension_numbers = #tpu.dot_dimension_numbers<[1], [0], [0], [1], [0, 0, 1, 1], [], []>} : vector<8x32xbf16>, vector<32x16xbf16>, vector<8x16xf32> -> vector<8x16xf32>
    %c0_75 = arith.constant 0 : index
    %c1_76 = arith.constant 1 : index
    %c0_77 = arith.constant 0 : index
    %c0_78 = arith.constant 0 : index
    %106 = vector.load %arg12[%c0_75, %c1_76, %c0_77, %c0_78] : memref<2x2x1x16xf32, #tpu.memory_space<vmem>>, vector<1x1x1x16xf32>
    %107 = vector.shape_cast %106 : vector<1x1x1x16xf32> to vector<1x16xf32>
    %108 = vector.broadcast %107 : vector<1x16xf32> to vector<8x16xf32>
    %109 = arith.addf %105, %108 : vector<8x16xf32>
    %110 = arith.truncf %93 : vector<8x16xf32> to vector<8x16xbf16>
    %111 = arith.truncf %101 : vector<8x16xf32> to vector<8x16xbf16>
    %cst_79 = arith.constant dense<0.000000e+00> : vector<8x8xf32>
    %112 = tpu.matmul %110, %111, %cst_79 {dimension_numbers = #tpu.dot_dimension_numbers<[1], [1], [0], [0], [0, 0, 1, 0], [], []>} : vector<8x16xbf16>, vector<8x16xbf16>, vector<8x8xf32> -> vector<8x8xf32>
    %cst_80 = arith.constant 2.500000e-01 : f32
    %113 = vector.broadcast %cst_80 : f32 to vector<8x8xf32>
    %114 = arith.mulf %112, %113 : vector<8x8xf32>
    %115 = arith.addf %114, %7 : vector<8x8xf32>
    %cst_81 = arith.constant dense<0xFF800000> : vector<8xf32>
    %116 = vector.multi_reduction <maximumf>, %115, %cst_81 [1] : vector<8x8xf32> to vector<8xf32>
    %117 = vector.shape_cast %116 : vector<8xf32> to vector<8x1xf32>
    %118 = vector.broadcast %117 : vector<8x1xf32> to vector<8x8xf32>
    %119 = arith.subf %115, %118 : vector<8x8xf32>
    %120 = math.exp %119 : vector<8x8xf32>
    %cst_82 = arith.constant dense<0.000000e+00> : vector<8xf32>
    %121 = vector.multi_reduction <add>, %120, %cst_82 [1] : vector<8x8xf32> to vector<8xf32>
    %122 = vector.shape_cast %121 : vector<8xf32> to vector<8x1xf32>
    %123 = tpu.reciprocal %122 {approx = true} : vector<8x1xf32> -> vector<8x1xf32>
    %124 = vector.broadcast %123 : vector<8x1xf32> to vector<8x8xf32>
    %125 = arith.mulf %120, %124 : vector<8x8xf32>
    %126 = arith.truncf %125 : vector<8x8xf32> to vector<8x8xbf16>
    %127 = arith.truncf %109 : vector<8x16xf32> to vector<8x16xbf16>
    %cst_83 = arith.constant dense<0.000000e+00> : vector<8x16xf32>
    %128 = tpu.matmul %126, %127, %cst_83 {dimension_numbers = #tpu.dot_dimension_numbers<[1], [0], [0], [1], [0, 0, 1, 1], [], []>} : vector<8x8xbf16>, vector<8x16xbf16>, vector<8x16xf32> -> vector<8x16xf32>
    %129 = arith.truncf %128 : vector<8x16xf32> to vector<8x16xbf16>
    %c0_84 = arith.constant 0 : index
    %c1_85 = arith.constant 1 : index
    %c0_86 = arith.constant 0 : index
    %c0_87 = arith.constant 0 : index
    %130 = vector.load %arg13[%c0_84, %c1_85, %c0_86, %c0_87] : memref<2x2x16x32xbf16, #tpu.memory_space<vmem>>, vector<1x1x16x32xbf16>
    %131 = vector.shape_cast %130 : vector<1x1x16x32xbf16> to vector<16x32xbf16>
    %cst_88 = arith.constant dense<0.000000e+00> : vector<8x32xf32>
    %132 = tpu.matmul %129, %131, %cst_88 {dimension_numbers = #tpu.dot_dimension_numbers<[1], [0], [0], [1], [0, 0, 1, 1], [], []>} : vector<8x16xbf16>, vector<16x32xbf16>, vector<8x32xf32> -> vector<8x32xf32>
    %133 = arith.addf %85, %132 : vector<8x32xf32>
    %134 = arith.addf %133, %34 : vector<8x32xf32>
    %c0_89 = arith.constant 0 : index
    %c0_90 = arith.constant 0 : index
    %c0_91 = arith.constant 0 : index
    %135 = vector.load %arg15[%c0_89, %c0_90, %c0_91] : memref<2x2x32xf32, #tpu.memory_space<vmem>>, vector<1x2x32xf32>
    %136 = vector.shape_cast %135 : vector<1x2x32xf32> to vector<2x32xf32>
    %cst_92 = arith.constant dense<0.000000e+00> : vector<8xf32>
    %137 = vector.multi_reduction <add>, %134, %cst_92 [1] : vector<8x32xf32> to vector<8xf32>
    %138 = vector.shape_cast %137 : vector<8xf32> to vector<8x1xf32>
    %cst_93 = arith.constant 3.200000e+01 : f32
    %139 = vector.broadcast %cst_93 : f32 to vector<8x1xf32>
    %140 = arith.divf %138, %139 : vector<8x1xf32>
    %141 = vector.broadcast %140 : vector<8x1xf32> to vector<8x32xf32>
    %142 = arith.subf %134, %141 : vector<8x32xf32>
    %143 = arith.mulf %142, %142 : vector<8x32xf32>
    %cst_94 = arith.constant dense<0.000000e+00> : vector<8xf32>
    %144 = vector.multi_reduction <add>, %143, %cst_94 [1] : vector<8x32xf32> to vector<8xf32>
    %145 = vector.shape_cast %144 : vector<8xf32> to vector<8x1xf32>
    %cst_95 = arith.constant 3.200000e+01 : f32
    %146 = vector.broadcast %cst_95 : f32 to vector<8x1xf32>
    %147 = arith.divf %145, %146 : vector<8x1xf32>
    %148 = vector.broadcast %140 : vector<8x1xf32> to vector<8x32xf32>
    %149 = arith.subf %134, %148 : vector<8x32xf32>
    %cst_96 = arith.constant 9.99999996E-13 : f32
    %150 = vector.broadcast %cst_96 : f32 to vector<8x1xf32>
    %151 = arith.addf %147, %150 : vector<8x1xf32>
    %152 = math.rsqrt %151 : vector<8x1xf32>
    %153 = vector.broadcast %152 : vector<8x1xf32> to vector<8x32xf32>
    %154 = arith.mulf %149, %153 : vector<8x32xf32>
    %155 = vector.extract_strided_slice %136 {offsets = [0, 0], sizes = [1, 32], strides = [1, 1]} : vector<2x32xf32> to vector<1x32xf32>
    %156 = vector.broadcast %155 : vector<1x32xf32> to vector<8x32xf32>
    %157 = arith.mulf %154, %156 : vector<8x32xf32>
    %158 = vector.extract_strided_slice %136 {offsets = [1, 0], sizes = [1, 32], strides = [1, 1]} : vector<2x32xf32> to vector<1x32xf32>
    %159 = vector.broadcast %158 : vector<1x32xf32> to vector<8x32xf32>
    %160 = arith.addf %157, %159 : vector<8x32xf32>
    %c0_97 = arith.constant 0 : index
    %c0_98 = arith.constant 0 : index
    %c0_99 = arith.constant 0 : index
    %161 = vector.load %arg16[%c0_97, %c0_98, %c0_99] : memref<2x32x128xbf16, #tpu.memory_space<vmem>>, vector<1x32x128xbf16>
    %162 = vector.shape_cast %161 : vector<1x32x128xbf16> to vector<32x128xbf16>
    %163 = arith.truncf %160 : vector<8x32xf32> to vector<8x32xbf16>
    %cst_100 = arith.constant dense<0.000000e+00> : vector<8x128xf32>
    %164 = tpu.matmul %163, %162, %cst_100 {dimension_numbers = #tpu.dot_dimension_numbers<[1], [0], [0], [1], [0, 0, 1, 1], [], []>} : vector<8x32xbf16>, vector<32x128xbf16>, vector<8x128xf32> -> vector<8x128xf32>
    %c0_101 = arith.constant 0 : index
    %c0_102 = arith.constant 0 : index
    %c0_103 = arith.constant 0 : index
    %165 = vector.load %arg17[%c0_101, %c0_102, %c0_103] : memref<2x1x128xf32, #tpu.memory_space<vmem>>, vector<1x1x128xf32>
    %166 = vector.shape_cast %165 : vector<1x1x128xf32> to vector<1x128xf32>
    %167 = vector.broadcast %166 : vector<1x128xf32> to vector<8x128xf32>
    %168 = arith.addf %164, %167 : vector<8x128xf32>
    %cst_104 = arith.constant 0.707106769 : f32
    %169 = vector.broadcast %cst_104 : f32 to vector<8x128xf32>
    %170 = arith.mulf %168, %169 : vector<8x128xf32>
    %cst_105 = arith.constant 0.000000e+00 : f32
    %171 = vector.broadcast %cst_105 : f32 to vector<8x128xf32>
    %172 = arith.cmpf oge, %170, %171 : vector<8x128xf32>
    %cst_106 = arith.constant 1.000000e+00 : f32
    %cst_107 = arith.constant -1.000000e+00 : f32
    %173 = vector.broadcast %cst_106 : f32 to vector<8x128xf32>
    %174 = vector.broadcast %cst_107 : f32 to vector<8x128xf32>
    %175 = arith.select %172, %173, %174 : vector<8x128xi1>, vector<8x128xf32>
    %176 = math.absf %170 : vector<8x128xf32>
    %cst_108 = arith.constant 0.327591091 : f32
    %177 = vector.broadcast %cst_108 : f32 to vector<8x128xf32>
    %178 = arith.mulf %177, %176 : vector<8x128xf32>
    %cst_109 = arith.constant 1.000000e+00 : f32
    %179 = vector.broadcast %cst_109 : f32 to vector<8x128xf32>
    %180 = arith.addf %179, %178 : vector<8x128xf32>
    %181 = tpu.reciprocal %180 {approx = true} : vector<8x128xf32> -> vector<8x128xf32>
    %182 = arith.mulf %180, %181 : vector<8x128xf32>
    %cst_110 = arith.constant 2.000000e+00 : f32
    %183 = vector.broadcast %cst_110 : f32 to vector<8x128xf32>
    %184 = arith.subf %183, %182 : vector<8x128xf32>
    %185 = arith.mulf %181, %184 : vector<8x128xf32>
    %cst_111 = arith.constant 1.06140542 : f32
    %186 = vector.broadcast %cst_111 : f32 to vector<8x128xf32>
    %187 = arith.mulf %185, %186 : vector<8x128xf32>
    %cst_112 = arith.constant -1.45315206 : f32
    %188 = vector.broadcast %cst_112 : f32 to vector<8x128xf32>
    %189 = arith.addf %188, %187 : vector<8x128xf32>
    %190 = arith.mulf %185, %189 : vector<8x128xf32>
    %cst_113 = arith.constant 1.42141378 : f32
    %191 = vector.broadcast %cst_113 : f32 to vector<8x128xf32>
    %192 = arith.addf %191, %190 : vector<8x128xf32>
    %193 = arith.mulf %185, %192 : vector<8x128xf32>
    %cst_114 = arith.constant -0.284496725 : f32
    %194 = vector.broadcast %cst_114 : f32 to vector<8x128xf32>
    %195 = arith.addf %194, %193 : vector<8x128xf32>
    %196 = arith.mulf %185, %195 : vector<8x128xf32>
    %cst_115 = arith.constant 0.254829586 : f32
    %197 = vector.broadcast %cst_115 : f32 to vector<8x128xf32>
    %198 = arith.addf %197, %196 : vector<8x128xf32>
    %199 = arith.mulf %185, %198 : vector<8x128xf32>
    %cst_116 = arith.constant 0.000000e+00 : f32
    %200 = vector.broadcast %cst_116 : f32 to vector<8x128xf32>
    %201 = arith.subf %200, %176 : vector<8x128xf32>
    %202 = arith.mulf %201, %176 : vector<8x128xf32>
    %203 = math.exp %202 : vector<8x128xf32>
    %204 = arith.mulf %199, %203 : vector<8x128xf32>
    %cst_117 = arith.constant 1.000000e+00 : f32
    %205 = vector.broadcast %cst_117 : f32 to vector<8x128xf32>
    %206 = arith.subf %205, %204 : vector<8x128xf32>
    %207 = arith.mulf %175, %206 : vector<8x128xf32>
    %cst_118 = arith.constant 5.000000e-01 : f32
    %208 = vector.broadcast %cst_118 : f32 to vector<8x128xf32>
    %209 = arith.mulf %208, %168 : vector<8x128xf32>
    %cst_119 = arith.constant 1.000000e+00 : f32
    %210 = vector.broadcast %cst_119 : f32 to vector<8x128xf32>
    %211 = arith.addf %210, %207 : vector<8x128xf32>
    %212 = arith.mulf %209, %211 : vector<8x128xf32>
    %c0_120 = arith.constant 0 : index
    %c0_121 = arith.constant 0 : index
    %c0_122 = arith.constant 0 : index
    %213 = vector.load %arg18[%c0_120, %c0_121, %c0_122] : memref<2x128x32xbf16, #tpu.memory_space<vmem>>, vector<1x128x32xbf16>
    %214 = vector.shape_cast %213 : vector<1x128x32xbf16> to vector<128x32xbf16>
    %215 = arith.truncf %212 : vector<8x128xf32> to vector<8x128xbf16>
    %cst_123 = arith.constant dense<0.000000e+00> : vector<8x32xf32>
    %216 = tpu.matmul %215, %214, %cst_123 {dimension_numbers = #tpu.dot_dimension_numbers<[1], [0], [0], [1], [0, 0, 1, 1], [], []>} : vector<8x128xbf16>, vector<128x32xbf16>, vector<8x32xf32> -> vector<8x32xf32>
    %c0_124 = arith.constant 0 : index
    %c0_125 = arith.constant 0 : index
    %c0_126 = arith.constant 0 : index
    %217 = vector.load %arg19[%c0_124, %c0_125, %c0_126] : memref<2x1x32xf32, #tpu.memory_space<vmem>>, vector<1x1x32xf32>
    %218 = vector.shape_cast %217 : vector<1x1x32xf32> to vector<1x32xf32>
    %219 = vector.broadcast %218 : vector<1x32xf32> to vector<8x32xf32>
    %220 = arith.addf %216, %219 : vector<8x32xf32>
    %221 = arith.addf %220, %160 : vector<8x32xf32>
    %c0_127 = arith.constant 0 : index
    %c0_128 = arith.constant 0 : index
    %c0_129 = arith.constant 0 : index
    %222 = vector.load %arg20[%c0_127, %c0_128, %c0_129] : memref<2x2x32xf32, #tpu.memory_space<vmem>>, vector<1x2x32xf32>
    %223 = vector.shape_cast %222 : vector<1x2x32xf32> to vector<2x32xf32>
    %cst_130 = arith.constant dense<0.000000e+00> : vector<8xf32>
    %224 = vector.multi_reduction <add>, %221, %cst_130 [1] : vector<8x32xf32> to vector<8xf32>
    %225 = vector.shape_cast %224 : vector<8xf32> to vector<8x1xf32>
    %cst_131 = arith.constant 3.200000e+01 : f32
    %226 = vector.broadcast %cst_131 : f32 to vector<8x1xf32>
    %227 = arith.divf %225, %226 : vector<8x1xf32>
    %228 = vector.broadcast %227 : vector<8x1xf32> to vector<8x32xf32>
    %229 = arith.subf %221, %228 : vector<8x32xf32>
    %230 = arith.mulf %229, %229 : vector<8x32xf32>
    %cst_132 = arith.constant dense<0.000000e+00> : vector<8xf32>
    %231 = vector.multi_reduction <add>, %230, %cst_132 [1] : vector<8x32xf32> to vector<8xf32>
    %232 = vector.shape_cast %231 : vector<8xf32> to vector<8x1xf32>
    %cst_133 = arith.constant 3.200000e+01 : f32
    %233 = vector.broadcast %cst_133 : f32 to vector<8x1xf32>
    %234 = arith.divf %232, %233 : vector<8x1xf32>
    %235 = vector.broadcast %227 : vector<8x1xf32> to vector<8x32xf32>
    %236 = arith.subf %221, %235 : vector<8x32xf32>
    %cst_134 = arith.constant 9.99999996E-13 : f32
    %237 = vector.broadcast %cst_134 : f32 to vector<8x1xf32>
    %238 = arith.addf %234, %237 : vector<8x1xf32>
    %239 = math.rsqrt %238 : vector<8x1xf32>
    %240 = vector.broadcast %239 : vector<8x1xf32> to vector<8x32xf32>
    %241 = arith.mulf %236, %240 : vector<8x32xf32>
    %242 = vector.extract_strided_slice %223 {offsets = [0, 0], sizes = [1, 32], strides = [1, 1]} : vector<2x32xf32> to vector<1x32xf32>
    %243 = vector.broadcast %242 : vector<1x32xf32> to vector<8x32xf32>
    %244 = arith.mulf %241, %243 : vector<8x32xf32>
    %245 = vector.extract_strided_slice %223 {offsets = [1, 0], sizes = [1, 32], strides = [1, 1]} : vector<2x32xf32> to vector<1x32xf32>
    %246 = vector.broadcast %245 : vector<1x32xf32> to vector<8x32xf32>
    %247 = arith.addf %244, %246 : vector<8x32xf32>
    %c1_135 = arith.constant 1 : index
    %c0_136 = arith.constant 0 : index
    %c0_137 = arith.constant 0 : index
    %248 = vector.load %arg14[%c1_135, %c0_136, %c0_137] : memref<2x1x32xf32, #tpu.memory_space<vmem>>, vector<1x1x32xf32>
    %249 = vector.shape_cast %248 : vector<1x1x32xf32> to vector<1x32xf32>
    %c1_138 = arith.constant 1 : index
    %c0_139 = arith.constant 0 : index
    %c0_140 = arith.constant 0 : index
    %c0_141 = arith.constant 0 : index
    %250 = vector.load %arg7[%c1_138, %c0_139, %c0_140, %c0_141] : memref<2x2x32x16xbf16, #tpu.memory_space<vmem>>, vector<1x1x32x16xbf16>
    %251 = vector.shape_cast %250 : vector<1x1x32x16xbf16> to vector<32x16xbf16>
    %252 = arith.truncf %247 : vector<8x32xf32> to vector<8x32xbf16>
    %cst_142 = arith.constant dense<0.000000e+00> : vector<8x16xf32>
    %253 = tpu.matmul %252, %251, %cst_142 {dimension_numbers = #tpu.dot_dimension_numbers<[1], [0], [0], [1], [0, 0, 1, 1], [], []>} : vector<8x32xbf16>, vector<32x16xbf16>, vector<8x16xf32> -> vector<8x16xf32>
    %c1_143 = arith.constant 1 : index
    %c0_144 = arith.constant 0 : index
    %c0_145 = arith.constant 0 : index
    %c0_146 = arith.constant 0 : index
    %254 = vector.load %arg8[%c1_143, %c0_144, %c0_145, %c0_146] : memref<2x2x1x16xf32, #tpu.memory_space<vmem>>, vector<1x1x1x16xf32>
    %255 = vector.shape_cast %254 : vector<1x1x1x16xf32> to vector<1x16xf32>
    %256 = vector.broadcast %255 : vector<1x16xf32> to vector<8x16xf32>
    %257 = arith.addf %253, %256 : vector<8x16xf32>
    %c1_147 = arith.constant 1 : index
    %c0_148 = arith.constant 0 : index
    %c0_149 = arith.constant 0 : index
    %c0_150 = arith.constant 0 : index
    %258 = vector.load %arg9[%c1_147, %c0_148, %c0_149, %c0_150] : memref<2x2x32x16xbf16, #tpu.memory_space<vmem>>, vector<1x1x32x16xbf16>
    %259 = vector.shape_cast %258 : vector<1x1x32x16xbf16> to vector<32x16xbf16>
    %260 = arith.truncf %247 : vector<8x32xf32> to vector<8x32xbf16>
    %cst_151 = arith.constant dense<0.000000e+00> : vector<8x16xf32>
    %261 = tpu.matmul %260, %259, %cst_151 {dimension_numbers = #tpu.dot_dimension_numbers<[1], [0], [0], [1], [0, 0, 1, 1], [], []>} : vector<8x32xbf16>, vector<32x16xbf16>, vector<8x16xf32> -> vector<8x16xf32>
    %c1_152 = arith.constant 1 : index
    %c0_153 = arith.constant 0 : index
    %c0_154 = arith.constant 0 : index
    %c0_155 = arith.constant 0 : index
    %262 = vector.load %arg10[%c1_152, %c0_153, %c0_154, %c0_155] : memref<2x2x1x16xf32, #tpu.memory_space<vmem>>, vector<1x1x1x16xf32>
    %263 = vector.shape_cast %262 : vector<1x1x1x16xf32> to vector<1x16xf32>
    %264 = vector.broadcast %263 : vector<1x16xf32> to vector<8x16xf32>
    %265 = arith.addf %261, %264 : vector<8x16xf32>
    %c1_156 = arith.constant 1 : index
    %c0_157 = arith.constant 0 : index
    %c0_158 = arith.constant 0 : index
    %c0_159 = arith.constant 0 : index
    %266 = vector.load %arg11[%c1_156, %c0_157, %c0_158, %c0_159] : memref<2x2x32x16xbf16, #tpu.memory_space<vmem>>, vector<1x1x32x16xbf16>
    %267 = vector.shape_cast %266 : vector<1x1x32x16xbf16> to vector<32x16xbf16>
    %268 = arith.truncf %247 : vector<8x32xf32> to vector<8x32xbf16>
    %cst_160 = arith.constant dense<0.000000e+00> : vector<8x16xf32>
    %269 = tpu.matmul %268, %267, %cst_160 {dimension_numbers = #tpu.dot_dimension_numbers<[1], [0], [0], [1], [0, 0, 1, 1], [], []>} : vector<8x32xbf16>, vector<32x16xbf16>, vector<8x16xf32> -> vector<8x16xf32>
    %c1_161 = arith.constant 1 : index
    %c0_162 = arith.constant 0 : index
    %c0_163 = arith.constant 0 : index
    %c0_164 = arith.constant 0 : index
    %270 = vector.load %arg12[%c1_161, %c0_162, %c0_163, %c0_164] : memref<2x2x1x16xf32, #tpu.memory_space<vmem>>, vector<1x1x1x16xf32>
    %271 = vector.shape_cast %270 : vector<1x1x1x16xf32> to vector<1x16xf32>
    %272 = vector.broadcast %271 : vector<1x16xf32> to vector<8x16xf32>
    %273 = arith.addf %269, %272 : vector<8x16xf32>
    %274 = arith.truncf %257 : vector<8x16xf32> to vector<8x16xbf16>
    %275 = arith.truncf %265 : vector<8x16xf32> to vector<8x16xbf16>
    %cst_165 = arith.constant dense<0.000000e+00> : vector<8x8xf32>
    %276 = tpu.matmul %274, %275, %cst_165 {dimension_numbers = #tpu.dot_dimension_numbers<[1], [1], [0], [0], [0, 0, 1, 0], [], []>} : vector<8x16xbf16>, vector<8x16xbf16>, vector<8x8xf32> -> vector<8x8xf32>
    %cst_166 = arith.constant 2.500000e-01 : f32
    %277 = vector.broadcast %cst_166 : f32 to vector<8x8xf32>
    %278 = arith.mulf %276, %277 : vector<8x8xf32>
    %279 = arith.addf %278, %7 : vector<8x8xf32>
    %cst_167 = arith.constant dense<0xFF800000> : vector<8xf32>
    %280 = vector.multi_reduction <maximumf>, %279, %cst_167 [1] : vector<8x8xf32> to vector<8xf32>
    %281 = vector.shape_cast %280 : vector<8xf32> to vector<8x1xf32>
    %282 = vector.broadcast %281 : vector<8x1xf32> to vector<8x8xf32>
    %283 = arith.subf %279, %282 : vector<8x8xf32>
    %284 = math.exp %283 : vector<8x8xf32>
    %cst_168 = arith.constant dense<0.000000e+00> : vector<8xf32>
    %285 = vector.multi_reduction <add>, %284, %cst_168 [1] : vector<8x8xf32> to vector<8xf32>
    %286 = vector.shape_cast %285 : vector<8xf32> to vector<8x1xf32>
    %287 = tpu.reciprocal %286 {approx = true} : vector<8x1xf32> -> vector<8x1xf32>
    %288 = vector.broadcast %287 : vector<8x1xf32> to vector<8x8xf32>
    %289 = arith.mulf %284, %288 : vector<8x8xf32>
    %290 = arith.truncf %289 : vector<8x8xf32> to vector<8x8xbf16>
    %291 = arith.truncf %273 : vector<8x16xf32> to vector<8x16xbf16>
    %cst_169 = arith.constant dense<0.000000e+00> : vector<8x16xf32>
    %292 = tpu.matmul %290, %291, %cst_169 {dimension_numbers = #tpu.dot_dimension_numbers<[1], [0], [0], [1], [0, 0, 1, 1], [], []>} : vector<8x8xbf16>, vector<8x16xbf16>, vector<8x16xf32> -> vector<8x16xf32>
    %293 = arith.truncf %292 : vector<8x16xf32> to vector<8x16xbf16>
    %c1_170 = arith.constant 1 : index
    %c0_171 = arith.constant 0 : index
    %c0_172 = arith.constant 0 : index
    %c0_173 = arith.constant 0 : index
    %294 = vector.load %arg13[%c1_170, %c0_171, %c0_172, %c0_173] : memref<2x2x16x32xbf16, #tpu.memory_space<vmem>>, vector<1x1x16x32xbf16>
    %295 = vector.shape_cast %294 : vector<1x1x16x32xbf16> to vector<16x32xbf16>
    %cst_174 = arith.constant dense<0.000000e+00> : vector<8x32xf32>
    %296 = tpu.matmul %293, %295, %cst_174 {dimension_numbers = #tpu.dot_dimension_numbers<[1], [0], [0], [1], [0, 0, 1, 1], [], []>} : vector<8x16xbf16>, vector<16x32xbf16>, vector<8x32xf32> -> vector<8x32xf32>
    %297 = vector.broadcast %249 : vector<1x32xf32> to vector<8x32xf32>
    %298 = arith.addf %297, %296 : vector<8x32xf32>
    %c1_175 = arith.constant 1 : index
    %c1_176 = arith.constant 1 : index
    %c0_177 = arith.constant 0 : index
    %c0_178 = arith.constant 0 : index
    %299 = vector.load %arg7[%c1_175, %c1_176, %c0_177, %c0_178] : memref<2x2x32x16xbf16, #tpu.memory_space<vmem>>, vector<1x1x32x16xbf16>
    %300 = vector.shape_cast %299 : vector<1x1x32x16xbf16> to vector<32x16xbf16>
    %301 = arith.truncf %247 : vector<8x32xf32> to vector<8x32xbf16>
    %cst_179 = arith.constant dense<0.000000e+00> : vector<8x16xf32>
    %302 = tpu.matmul %301, %300, %cst_179 {dimension_numbers = #tpu.dot_dimension_numbers<[1], [0], [0], [1], [0, 0, 1, 1], [], []>} : vector<8x32xbf16>, vector<32x16xbf16>, vector<8x16xf32> -> vector<8x16xf32>
    %c1_180 = arith.constant 1 : index
    %c1_181 = arith.constant 1 : index
    %c0_182 = arith.constant 0 : index
    %c0_183 = arith.constant 0 : index
    %303 = vector.load %arg8[%c1_180, %c1_181, %c0_182, %c0_183] : memref<2x2x1x16xf32, #tpu.memory_space<vmem>>, vector<1x1x1x16xf32>
    %304 = vector.shape_cast %303 : vector<1x1x1x16xf32> to vector<1x16xf32>
    %305 = vector.broadcast %304 : vector<1x16xf32> to vector<8x16xf32>
    %306 = arith.addf %302, %305 : vector<8x16xf32>
    %c1_184 = arith.constant 1 : index
    %c1_185 = arith.constant 1 : index
    %c0_186 = arith.constant 0 : index
    %c0_187 = arith.constant 0 : index
    %307 = vector.load %arg9[%c1_184, %c1_185, %c0_186, %c0_187] : memref<2x2x32x16xbf16, #tpu.memory_space<vmem>>, vector<1x1x32x16xbf16>
    %308 = vector.shape_cast %307 : vector<1x1x32x16xbf16> to vector<32x16xbf16>
    %309 = arith.truncf %247 : vector<8x32xf32> to vector<8x32xbf16>
    %cst_188 = arith.constant dense<0.000000e+00> : vector<8x16xf32>
    %310 = tpu.matmul %309, %308, %cst_188 {dimension_numbers = #tpu.dot_dimension_numbers<[1], [0], [0], [1], [0, 0, 1, 1], [], []>} : vector<8x32xbf16>, vector<32x16xbf16>, vector<8x16xf32> -> vector<8x16xf32>
    %c1_189 = arith.constant 1 : index
    %c1_190 = arith.constant 1 : index
    %c0_191 = arith.constant 0 : index
    %c0_192 = arith.constant 0 : index
    %311 = vector.load %arg10[%c1_189, %c1_190, %c0_191, %c0_192] : memref<2x2x1x16xf32, #tpu.memory_space<vmem>>, vector<1x1x1x16xf32>
    %312 = vector.shape_cast %311 : vector<1x1x1x16xf32> to vector<1x16xf32>
    %313 = vector.broadcast %312 : vector<1x16xf32> to vector<8x16xf32>
    %314 = arith.addf %310, %313 : vector<8x16xf32>
    %c1_193 = arith.constant 1 : index
    %c1_194 = arith.constant 1 : index
    %c0_195 = arith.constant 0 : index
    %c0_196 = arith.constant 0 : index
    %315 = vector.load %arg11[%c1_193, %c1_194, %c0_195, %c0_196] : memref<2x2x32x16xbf16, #tpu.memory_space<vmem>>, vector<1x1x32x16xbf16>
    %316 = vector.shape_cast %315 : vector<1x1x32x16xbf16> to vector<32x16xbf16>
    %317 = arith.truncf %247 : vector<8x32xf32> to vector<8x32xbf16>
    %cst_197 = arith.constant dense<0.000000e+00> : vector<8x16xf32>
    %318 = tpu.matmul %317, %316, %cst_197 {dimension_numbers = #tpu.dot_dimension_numbers<[1], [0], [0], [1], [0, 0, 1, 1], [], []>} : vector<8x32xbf16>, vector<32x16xbf16>, vector<8x16xf32> -> vector<8x16xf32>
    %c1_198 = arith.constant 1 : index
    %c1_199 = arith.constant 1 : index
    %c0_200 = arith.constant 0 : index
    %c0_201 = arith.constant 0 : index
    %319 = vector.load %arg12[%c1_198, %c1_199, %c0_200, %c0_201] : memref<2x2x1x16xf32, #tpu.memory_space<vmem>>, vector<1x1x1x16xf32>
    %320 = vector.shape_cast %319 : vector<1x1x1x16xf32> to vector<1x16xf32>
    %321 = vector.broadcast %320 : vector<1x16xf32> to vector<8x16xf32>
    %322 = arith.addf %318, %321 : vector<8x16xf32>
    %323 = arith.truncf %306 : vector<8x16xf32> to vector<8x16xbf16>
    %324 = arith.truncf %314 : vector<8x16xf32> to vector<8x16xbf16>
    %cst_202 = arith.constant dense<0.000000e+00> : vector<8x8xf32>
    %325 = tpu.matmul %323, %324, %cst_202 {dimension_numbers = #tpu.dot_dimension_numbers<[1], [1], [0], [0], [0, 0, 1, 0], [], []>} : vector<8x16xbf16>, vector<8x16xbf16>, vector<8x8xf32> -> vector<8x8xf32>
    %cst_203 = arith.constant 2.500000e-01 : f32
    %326 = vector.broadcast %cst_203 : f32 to vector<8x8xf32>
    %327 = arith.mulf %325, %326 : vector<8x8xf32>
    %328 = arith.addf %327, %7 : vector<8x8xf32>
    %cst_204 = arith.constant dense<0xFF800000> : vector<8xf32>
    %329 = vector.multi_reduction <maximumf>, %328, %cst_204 [1] : vector<8x8xf32> to vector<8xf32>
    %330 = vector.shape_cast %329 : vector<8xf32> to vector<8x1xf32>
    %331 = vector.broadcast %330 : vector<8x1xf32> to vector<8x8xf32>
    %332 = arith.subf %328, %331 : vector<8x8xf32>
    %333 = math.exp %332 : vector<8x8xf32>
    %cst_205 = arith.constant dense<0.000000e+00> : vector<8xf32>
    %334 = vector.multi_reduction <add>, %333, %cst_205 [1] : vector<8x8xf32> to vector<8xf32>
    %335 = vector.shape_cast %334 : vector<8xf32> to vector<8x1xf32>
    %336 = tpu.reciprocal %335 {approx = true} : vector<8x1xf32> -> vector<8x1xf32>
    %337 = vector.broadcast %336 : vector<8x1xf32> to vector<8x8xf32>
    %338 = arith.mulf %333, %337 : vector<8x8xf32>
    %339 = arith.truncf %338 : vector<8x8xf32> to vector<8x8xbf16>
    %340 = arith.truncf %322 : vector<8x16xf32> to vector<8x16xbf16>
    %cst_206 = arith.constant dense<0.000000e+00> : vector<8x16xf32>
    %341 = tpu.matmul %339, %340, %cst_206 {dimension_numbers = #tpu.dot_dimension_numbers<[1], [0], [0], [1], [0, 0, 1, 1], [], []>} : vector<8x8xbf16>, vector<8x16xbf16>, vector<8x16xf32> -> vector<8x16xf32>
    %342 = arith.truncf %341 : vector<8x16xf32> to vector<8x16xbf16>
    %c1_207 = arith.constant 1 : index
    %c1_208 = arith.constant 1 : index
    %c0_209 = arith.constant 0 : index
    %c0_210 = arith.constant 0 : index
    %343 = vector.load %arg13[%c1_207, %c1_208, %c0_209, %c0_210] : memref<2x2x16x32xbf16, #tpu.memory_space<vmem>>, vector<1x1x16x32xbf16>
    %344 = vector.shape_cast %343 : vector<1x1x16x32xbf16> to vector<16x32xbf16>
    %cst_211 = arith.constant dense<0.000000e+00> : vector<8x32xf32>
    %345 = tpu.matmul %342, %344, %cst_211 {dimension_numbers = #tpu.dot_dimension_numbers<[1], [0], [0], [1], [0, 0, 1, 1], [], []>} : vector<8x16xbf16>, vector<16x32xbf16>, vector<8x32xf32> -> vector<8x32xf32>
    %346 = arith.addf %298, %345 : vector<8x32xf32>
    %347 = arith.addf %346, %247 : vector<8x32xf32>
    %c1_212 = arith.constant 1 : index
    %c0_213 = arith.constant 0 : index
    %c0_214 = arith.constant 0 : index
    %348 = vector.load %arg15[%c1_212, %c0_213, %c0_214] : memref<2x2x32xf32, #tpu.memory_space<vmem>>, vector<1x2x32xf32>
    %349 = vector.shape_cast %348 : vector<1x2x32xf32> to vector<2x32xf32>
    %cst_215 = arith.constant dense<0.000000e+00> : vector<8xf32>
    %350 = vector.multi_reduction <add>, %347, %cst_215 [1] : vector<8x32xf32> to vector<8xf32>
    %351 = vector.shape_cast %350 : vector<8xf32> to vector<8x1xf32>
    %cst_216 = arith.constant 3.200000e+01 : f32
    %352 = vector.broadcast %cst_216 : f32 to vector<8x1xf32>
    %353 = arith.divf %351, %352 : vector<8x1xf32>
    %354 = vector.broadcast %353 : vector<8x1xf32> to vector<8x32xf32>
    %355 = arith.subf %347, %354 : vector<8x32xf32>
    %356 = arith.mulf %355, %355 : vector<8x32xf32>
    %cst_217 = arith.constant dense<0.000000e+00> : vector<8xf32>
    %357 = vector.multi_reduction <add>, %356, %cst_217 [1] : vector<8x32xf32> to vector<8xf32>
    %358 = vector.shape_cast %357 : vector<8xf32> to vector<8x1xf32>
    %cst_218 = arith.constant 3.200000e+01 : f32
    %359 = vector.broadcast %cst_218 : f32 to vector<8x1xf32>
    %360 = arith.divf %358, %359 : vector<8x1xf32>
    %361 = vector.broadcast %353 : vector<8x1xf32> to vector<8x32xf32>
    %362 = arith.subf %347, %361 : vector<8x32xf32>
    %cst_219 = arith.constant 9.99999996E-13 : f32
    %363 = vector.broadcast %cst_219 : f32 to vector<8x1xf32>
    %364 = arith.addf %360, %363 : vector<8x1xf32>
    %365 = math.rsqrt %364 : vector<8x1xf32>
    %366 = vector.broadcast %365 : vector<8x1xf32> to vector<8x32xf32>
    %367 = arith.mulf %362, %366 : vector<8x32xf32>
    %368 = vector.extract_strided_slice %349 {offsets = [0, 0], sizes = [1, 32], strides = [1, 1]} : vector<2x32xf32> to vector<1x32xf32>
    %369 = vector.broadcast %368 : vector<1x32xf32> to vector<8x32xf32>
    %370 = arith.mulf %367, %369 : vector<8x32xf32>
    %371 = vector.extract_strided_slice %349 {offsets = [1, 0], sizes = [1, 32], strides = [1, 1]} : vector<2x32xf32> to vector<1x32xf32>
    %372 = vector.broadcast %371 : vector<1x32xf32> to vector<8x32xf32>
    %373 = arith.addf %370, %372 : vector<8x32xf32>
    %c1_220 = arith.constant 1 : index
    %c0_221 = arith.constant 0 : index
    %c0_222 = arith.constant 0 : index
    %374 = vector.load %arg16[%c1_220, %c0_221, %c0_222] : memref<2x32x128xbf16, #tpu.memory_space<vmem>>, vector<1x32x128xbf16>
    %375 = vector.shape_cast %374 : vector<1x32x128xbf16> to vector<32x128xbf16>
    %376 = arith.truncf %373 : vector<8x32xf32> to vector<8x32xbf16>
    %cst_223 = arith.constant dense<0.000000e+00> : vector<8x128xf32>
    %377 = tpu.matmul %376, %375, %cst_223 {dimension_numbers = #tpu.dot_dimension_numbers<[1], [0], [0], [1], [0, 0, 1, 1], [], []>} : vector<8x32xbf16>, vector<32x128xbf16>, vector<8x128xf32> -> vector<8x128xf32>
    %c1_224 = arith.constant 1 : index
    %c0_225 = arith.constant 0 : index
    %c0_226 = arith.constant 0 : index
    %378 = vector.load %arg17[%c1_224, %c0_225, %c0_226] : memref<2x1x128xf32, #tpu.memory_space<vmem>>, vector<1x1x128xf32>
    %379 = vector.shape_cast %378 : vector<1x1x128xf32> to vector<1x128xf32>
    %380 = vector.broadcast %379 : vector<1x128xf32> to vector<8x128xf32>
    %381 = arith.addf %377, %380 : vector<8x128xf32>
    %cst_227 = arith.constant 0.707106769 : f32
    %382 = vector.broadcast %cst_227 : f32 to vector<8x128xf32>
    %383 = arith.mulf %381, %382 : vector<8x128xf32>
    %cst_228 = arith.constant 0.000000e+00 : f32
    %384 = vector.broadcast %cst_228 : f32 to vector<8x128xf32>
    %385 = arith.cmpf oge, %383, %384 : vector<8x128xf32>
    %cst_229 = arith.constant 1.000000e+00 : f32
    %cst_230 = arith.constant -1.000000e+00 : f32
    %386 = vector.broadcast %cst_229 : f32 to vector<8x128xf32>
    %387 = vector.broadcast %cst_230 : f32 to vector<8x128xf32>
    %388 = arith.select %385, %386, %387 : vector<8x128xi1>, vector<8x128xf32>
    %389 = math.absf %383 : vector<8x128xf32>
    %cst_231 = arith.constant 0.327591091 : f32
    %390 = vector.broadcast %cst_231 : f32 to vector<8x128xf32>
    %391 = arith.mulf %390, %389 : vector<8x128xf32>
    %cst_232 = arith.constant 1.000000e+00 : f32
    %392 = vector.broadcast %cst_232 : f32 to vector<8x128xf32>
    %393 = arith.addf %392, %391 : vector<8x128xf32>
    %394 = tpu.reciprocal %393 {approx = true} : vector<8x128xf32> -> vector<8x128xf32>
    %395 = arith.mulf %393, %394 : vector<8x128xf32>
    %cst_233 = arith.constant 2.000000e+00 : f32
    %396 = vector.broadcast %cst_233 : f32 to vector<8x128xf32>
    %397 = arith.subf %396, %395 : vector<8x128xf32>
    %398 = arith.mulf %394, %397 : vector<8x128xf32>
    %cst_234 = arith.constant 1.06140542 : f32
    %399 = vector.broadcast %cst_234 : f32 to vector<8x128xf32>
    %400 = arith.mulf %398, %399 : vector<8x128xf32>
    %cst_235 = arith.constant -1.45315206 : f32
    %401 = vector.broadcast %cst_235 : f32 to vector<8x128xf32>
    %402 = arith.addf %401, %400 : vector<8x128xf32>
    %403 = arith.mulf %398, %402 : vector<8x128xf32>
    %cst_236 = arith.constant 1.42141378 : f32
    %404 = vector.broadcast %cst_236 : f32 to vector<8x128xf32>
    %405 = arith.addf %404, %403 : vector<8x128xf32>
    %406 = arith.mulf %398, %405 : vector<8x128xf32>
    %cst_237 = arith.constant -0.284496725 : f32
    %407 = vector.broadcast %cst_237 : f32 to vector<8x128xf32>
    %408 = arith.addf %407, %406 : vector<8x128xf32>
    %409 = arith.mulf %398, %408 : vector<8x128xf32>
    %cst_238 = arith.constant 0.254829586 : f32
    %410 = vector.broadcast %cst_238 : f32 to vector<8x128xf32>
    %411 = arith.addf %410, %409 : vector<8x128xf32>
    %412 = arith.mulf %398, %411 : vector<8x128xf32>
    %cst_239 = arith.constant 0.000000e+00 : f32
    %413 = vector.broadcast %cst_239 : f32 to vector<8x128xf32>
    %414 = arith.subf %413, %389 : vector<8x128xf32>
    %415 = arith.mulf %414, %389 : vector<8x128xf32>
    %416 = math.exp %415 : vector<8x128xf32>
    %417 = arith.mulf %412, %416 : vector<8x128xf32>
    %cst_240 = arith.constant 1.000000e+00 : f32
    %418 = vector.broadcast %cst_240 : f32 to vector<8x128xf32>
    %419 = arith.subf %418, %417 : vector<8x128xf32>
    %420 = arith.mulf %388, %419 : vector<8x128xf32>
    %cst_241 = arith.constant 5.000000e-01 : f32
    %421 = vector.broadcast %cst_241 : f32 to vector<8x128xf32>
    %422 = arith.mulf %421, %381 : vector<8x128xf32>
    %cst_242 = arith.constant 1.000000e+00 : f32
    %423 = vector.broadcast %cst_242 : f32 to vector<8x128xf32>
    %424 = arith.addf %423, %420 : vector<8x128xf32>
    %425 = arith.mulf %422, %424 : vector<8x128xf32>
    %c1_243 = arith.constant 1 : index
    %c0_244 = arith.constant 0 : index
    %c0_245 = arith.constant 0 : index
    %426 = vector.load %arg18[%c1_243, %c0_244, %c0_245] : memref<2x128x32xbf16, #tpu.memory_space<vmem>>, vector<1x128x32xbf16>
    %427 = vector.shape_cast %426 : vector<1x128x32xbf16> to vector<128x32xbf16>
    %428 = arith.truncf %425 : vector<8x128xf32> to vector<8x128xbf16>
    %cst_246 = arith.constant dense<0.000000e+00> : vector<8x32xf32>
    %429 = tpu.matmul %428, %427, %cst_246 {dimension_numbers = #tpu.dot_dimension_numbers<[1], [0], [0], [1], [0, 0, 1, 1], [], []>} : vector<8x128xbf16>, vector<128x32xbf16>, vector<8x32xf32> -> vector<8x32xf32>
    %c1_247 = arith.constant 1 : index
    %c0_248 = arith.constant 0 : index
    %c0_249 = arith.constant 0 : index
    %430 = vector.load %arg19[%c1_247, %c0_248, %c0_249] : memref<2x1x32xf32, #tpu.memory_space<vmem>>, vector<1x1x32xf32>
    %431 = vector.shape_cast %430 : vector<1x1x32xf32> to vector<1x32xf32>
    %432 = vector.broadcast %431 : vector<1x32xf32> to vector<8x32xf32>
    %433 = arith.addf %429, %432 : vector<8x32xf32>
    %434 = arith.addf %433, %373 : vector<8x32xf32>
    %c1_250 = arith.constant 1 : index
    %c0_251 = arith.constant 0 : index
    %c0_252 = arith.constant 0 : index
    %435 = vector.load %arg20[%c1_250, %c0_251, %c0_252] : memref<2x2x32xf32, #tpu.memory_space<vmem>>, vector<1x2x32xf32>
    %436 = vector.shape_cast %435 : vector<1x2x32xf32> to vector<2x32xf32>
    %cst_253 = arith.constant dense<0.000000e+00> : vector<8xf32>
    %437 = vector.multi_reduction <add>, %434, %cst_253 [1] : vector<8x32xf32> to vector<8xf32>
    %438 = vector.shape_cast %437 : vector<8xf32> to vector<8x1xf32>
    %cst_254 = arith.constant 3.200000e+01 : f32
    %439 = vector.broadcast %cst_254 : f32 to vector<8x1xf32>
    %440 = arith.divf %438, %439 : vector<8x1xf32>
    %441 = vector.broadcast %440 : vector<8x1xf32> to vector<8x32xf32>
    %442 = arith.subf %434, %441 : vector<8x32xf32>
    %443 = arith.mulf %442, %442 : vector<8x32xf32>
    %cst_255 = arith.constant dense<0.000000e+00> : vector<8xf32>
    %444 = vector.multi_reduction <add>, %443, %cst_255 [1] : vector<8x32xf32> to vector<8xf32>
    %445 = vector.shape_cast %444 : vector<8xf32> to vector<8x1xf32>
    %cst_256 = arith.constant 3.200000e+01 : f32
    %446 = vector.broadcast %cst_256 : f32 to vector<8x1xf32>
    %447 = arith.divf %445, %446 : vector<8x1xf32>
    %448 = vector.broadcast %440 : vector<8x1xf32> to vector<8x32xf32>
    %449 = arith.subf %434, %448 : vector<8x32xf32>
    %cst_257 = arith.constant 9.99999996E-13 : f32
    %450 = vector.broadcast %cst_257 : f32 to vector<8x1xf32>
    %451 = arith.addf %447, %450 : vector<8x1xf32>
    %452 = math.rsqrt %451 : vector<8x1xf32>
    %453 = vector.broadcast %452 : vector<8x1xf32> to vector<8x32xf32>
    %454 = arith.mulf %449, %453 : vector<8x32xf32>
    %455 = vector.extract_strided_slice %436 {offsets = [0, 0], sizes = [1, 32], strides = [1, 1]} : vector<2x32xf32> to vector<1x32xf32>
    %456 = vector.broadcast %455 : vector<1x32xf32> to vector<8x32xf32>
    %457 = arith.mulf %454, %456 : vector<8x32xf32>
    %458 = vector.extract_strided_slice %436 {offsets = [1, 0], sizes = [1, 32], strides = [1, 1]} : vector<2x32xf32> to vector<1x32xf32>
    %459 = vector.broadcast %458 : vector<1x32xf32> to vector<8x32xf32>
    %460 = arith.addf %457, %459 : vector<8x32xf32>
    %461 = vector.shape_cast %460 : vector<8x32xf32> to vector<1x8x32xf32>
    %c0_258 = arith.constant 0 : index
    %c0_259 = arith.constant 0 : index
    %c0_260 = arith.constant 0 : index
    %462 = vector.load %arg23[%c0_258, %c0_259, %c0_260] : memref<1x8x32xf32, #tpu.memory_space<vmem>>, vector<1x8x32xf32>
    tpu.vector_store %arg23[%c0_258, %c0_259, %c0_260], %461 {strides = array<i32>} : memref<1x8x32xf32, #tpu.memory_space<vmem>>, vector<1x8x32xf32>,
    %c0_261 = arith.constant 0 : index
    %c0_262 = arith.constant 0 : index
    %c0_263 = arith.constant 0 : index
    %463 = vector.load %arg4[%c0_261, %c0_262, %c0_263] : memref<1x8x1xf32, #tpu.memory_space<vmem>>, vector<1x8x1xf32>
    %464 = vector.shape_cast %463 : vector<1x8x1xf32> to vector<8x1xf32>
    %cst_264 = arith.constant 0.000000e+00 : f32
    %465 = vector.broadcast %cst_264 : f32 to vector<8x1xf32>
    %466 = arith.cmpf ogt, %464, %465 : vector<8x1xf32>
    %cst_265 = arith.constant -1.000000e+30 : f32
    %467 = vector.shape_cast %466 : vector<8x1xi1> to vector<8x1xi1>
    %468 = vector.broadcast %467 : vector<8x1xi1> to vector<8x32xi1>
    %469 = vector.broadcast %cst_265 : f32 to vector<8x32xf32>
    %470 = arith.select %468, %460, %469 : vector<8x32xi1>, vector<8x32xf32>
    %cst_266 = arith.constant dense<0xFF800000> : vector<32xf32>
    %471 = vector.multi_reduction <maximumf>, %470, %cst_266 [0] : vector<8x32xf32> to vector<32xf32>
    %472 = vector.shape_cast %471 : vector<32xf32> to vector<1x32xf32>
    %c0_267 = arith.constant 0 : index
    %c0_268 = arith.constant 0 : index
    %c0_269 = arith.constant 0 : index
    %473 = vector.load %arg5[%c0_267, %c0_268, %c0_269] : memref<1x8x1xf32, #tpu.memory_space<vmem>>, vector<1x8x1xf32>
    %474 = vector.shape_cast %473 : vector<1x8x1xf32> to vector<8x1xf32>
    %cst_270 = arith.constant 0.000000e+00 : f32
    %475 = vector.broadcast %cst_270 : f32 to vector<8x1xf32>
    %476 = arith.cmpf ogt, %474, %475 : vector<8x1xf32>
    %cst_271 = arith.constant -1.000000e+30 : f32
    %477 = vector.shape_cast %476 : vector<8x1xi1> to vector<8x1xi1>
    %478 = vector.broadcast %477 : vector<8x1xi1> to vector<8x32xi1>
    %479 = vector.broadcast %cst_271 : f32 to vector<8x32xf32>
    %480 = arith.select %478, %460, %479 : vector<8x32xi1>, vector<8x32xf32>
    %cst_272 = arith.constant dense<0xFF800000> : vector<32xf32>
    %481 = vector.multi_reduction <maximumf>, %480, %cst_272 [0] : vector<8x32xf32> to vector<32xf32>
    %482 = vector.shape_cast %481 : vector<32xf32> to vector<1x32xf32>
    %483 = tpu.concatenate %472, %482 in 1 : vector<1x32xf32>, vector<1x32xf32> -> vector<1x64xf32>
    %484 = vector.shape_cast %483 : vector<1x64xf32> to vector<1x1x64xf32>
    %c0_273 = arith.constant 0 : index
    %c0_274 = arith.constant 0 : index
    %c0_275 = arith.constant 0 : index
    %485 = vector.load %arg24[%c0_273, %c0_274, %c0_275] : memref<1x1x64xf32, #tpu.memory_space<vmem>>, vector<1x1x64xf32>
    tpu.vector_store %arg24[%c0_273, %c0_274, %c0_275], %484 {strides = array<i32>} : memref<1x1x64xf32, #tpu.memory_space<vmem>>, vector<1x1x64xf32>,
    %c0_276 = arith.constant 0 : index
    %c0_277 = arith.constant 0 : index
    %486 = vector.load %arg21[%c0_276, %c0_277] : memref<64x128xbf16, #tpu.memory_space<vmem>>, vector<64x128xbf16>
    %487 = arith.truncf %483 : vector<1x64xf32> to vector<1x64xbf16>
    %cst_278 = arith.constant dense<0.000000e+00> : vector<1x128xf32>
    %488 = tpu.matmul %487, %486, %cst_278 {dimension_numbers = #tpu.dot_dimension_numbers<[1], [0], [0], [1], [0, 0, 1, 1], [], []>} : vector<1x64xbf16>, vector<64x128xbf16>, vector<1x128xf32> -> vector<1x128xf32>
    %c0_279 = arith.constant 0 : index
    %c0_280 = arith.constant 0 : index
    %489 = vector.load %arg22[%c0_279, %c0_280] : memref<1x128xf32, #tpu.memory_space<vmem>>, vector<1x128xf32>
    %490 = arith.addf %488, %489 : vector<1x128xf32>
    %491 = vector.shape_cast %490 : vector<1x128xf32> to vector<1x1x128xf32>
    %c0_281 = arith.constant 0 : index
    %c0_282 = arith.constant 0 : index
    %c0_283 = arith.constant 0 : index
    %492 = vector.load %arg25[%c0_281, %c0_282, %c0_283] : memref<1x1x128xf32, #tpu.memory_space<vmem>>, vector<1x1x128xf32>
    tpu.vector_store %arg25[%c0_281, %c0_282, %c0_283], %491 {strides = array<i32>} : memref<1x1x128xf32, #tpu.memory_space<vmem>>, vector<1x1x128xf32>,
    %493 = arith.index_cast %arg0 : i32 to index
    %494 = memref.load %arg1[%493] : memref<2xi32, #tpu.memory_space<smem>>
    %cst_284 = arith.constant dense<0xFF800000> : vector<1xf32>
    %495 = vector.multi_reduction <maximumf>, %490, %cst_284 [1] : vector<1x128xf32> to vector<1xf32>
    %496 = vector.shape_cast %495 : vector<1xf32> to vector<1x1xf32>
    %497 = vector.broadcast %496 : vector<1x1xf32> to vector<1x128xf32>
    %498 = arith.subf %490, %497 : vector<1x128xf32>
    %499 = math.exp %498 : vector<1x128xf32>
    %cst_285 = arith.constant dense<0.000000e+00> : vector<1xf32>
    %500 = vector.multi_reduction <add>, %499, %cst_285 [1] : vector<1x128xf32> to vector<1xf32>
    %501 = vector.shape_cast %500 : vector<1xf32> to vector<1x1xf32>
    %502 = math.log %501 : vector<1x1xf32>
    %503 = arith.addf %502, %496 : vector<1x1xf32>
    %504 = tpu.iota {dimensions = array<i32: 1>} : vector<1x128xi32>
    %505 = vector.broadcast %494 : i32 to vector<1x128xi32>
    %506 = arith.cmpi eq, %504, %505 : vector<1x128xi32>
    %cst_286 = arith.constant 0.000000e+00 : f32
    %507 = vector.broadcast %cst_286 : f32 to vector<1x128xf32>
    %508 = arith.select %506, %490, %507 : vector<1x128xi1>, vector<1x128xf32>
    %cst_287 = arith.constant dense<0.000000e+00> : vector<1xf32>
    %509 = vector.multi_reduction <add>, %508, %cst_287 [1] : vector<1x128xf32> to vector<1xf32>
    %510 = vector.shape_cast %509 : vector<1xf32> to vector<1x1xf32>
    %c-100_i32 = arith.constant -100 : i32
    %511 = arith.cmpi ne, %494, %c-100_i32 : i32
    %512 = arith.subf %503, %510 : vector<1x1xf32>
    %cst_288 = arith.constant 0.000000e+00 : f32
    %513 = vector.broadcast %cst_288 : f32 to vector<1x1xf32>
    %514 = arith.select %511, %512, %513 : vector<1x1xf32>
    %515 = vector.shape_cast %514 : vector<1x1xf32> to vector<1x1x1xf32>
    %c0_289 = arith.constant 0 : index
    %c0_290 = arith.constant 0 : index
    %c0_291 = arith.constant 0 : index
    %516 = vector.load %arg26[%c0_289, %c0_290, %c0_291] : memref<1x1x1xf32, #tpu.memory_space<vmem>>, vector<1x1x1xf32>
    tpu.vector_store %arg26[%c0_289, %c0_290, %c0_291], %515 {strides = array<i32>} : memref<1x1x1xf32, #tpu.memory_space<vmem>>, vector<1x1x1xf32>,
    %cst_292 = arith.constant 1.000000e+00 : f32
    %517 = vector.broadcast %cst_292 : f32 to vector<1x1x1xf32>
    %cst_293 = arith.constant 0.000000e+00 : f32
    %518 = vector.broadcast %cst_293 : f32 to vector<1x1x1xf32>
    %519 = arith.select %511, %517, %518 : vector<1x1x1xf32>
    %c0_294 = arith.constant 0 : index
    %c0_295 = arith.constant 0 : index
    %c0_296 = arith.constant 0 : index
    %520 = vector.load %arg27[%c0_294, %c0_295, %c0_296] : memref<1x1x1xf32, #tpu.memory_space<vmem>>, vector<1x1x1xf32>
    tpu.vector_store %arg27[%c0_294, %c0_295, %c0_296], %519 {strides = array<i32>} : memref<1x1x1xf32, #tpu.memory_space<vmem>>, vector<1x1x1xf32>,
    return
  }
  func.func @transform_0(%arg0: i32, %arg1: memref<2xi32, #tpu.memory_space<smem>>) -> (i32, i32, i32) {
    %c0_i32 = arith.constant 0 : i32
    %c0_i32_0 = arith.constant 0 : i32
    %c0_i32_1 = arith.constant 0 : i32
    return %arg0, %c0_i32, %c0_i32_0 : i32, i32, i32
  }
  func.func @transform_1(%arg0: i32, %arg1: memref<2xi32, #tpu.memory_space<smem>>) -> (i32, i32, i32) {
    %c0_i32 = arith.constant 0 : i32
    %c0_i32_0 = arith.constant 0 : i32
    %c0_i32_1 = arith.constant 0 : i32
    return %arg0, %c0_i32, %c0_i32_0 : i32, i32, i32
  }
  func.func @transform_2(%arg0: i32, %arg1: memref<2xi32, #tpu.memory_space<smem>>) -> (i32, i32, i32) {
    %c0_i32 = arith.constant 0 : i32
    %c0_i32_0 = arith.constant 0 : i32
    %c0_i32_1 = arith.constant 0 : i32
    return %arg0, %c0_i32, %c0_i32_0 : i32, i32, i32
  }
  func.func @transform_3(%arg0: i32, %arg1: memref<2xi32, #tpu.memory_space<smem>>) -> (i32, i32, i32) {
    %c0_i32 = arith.constant 0 : i32
    %c0_i32_0 = arith.constant 0 : i32
    %c0_i32_1 = arith.constant 0 : i32
    return %arg0, %c0_i32, %c0_i32_0 : i32, i32, i32
  }
  func.func @transform_4(%arg0: i32, %arg1: memref<2xi32, #tpu.memory_space<smem>>) -> (i32, i32) {
    %c0_i32 = arith.constant 0 : i32
    %c0_i32_0 = arith.constant 0 : i32
    %c0_i32_1 = arith.constant 0 : i32
    return %c0_i32, %c0_i32_0 : i32, i32
  }
  func.func @transform_5(%arg0: i32, %arg1: memref<2xi32, #tpu.memory_space<smem>>) -> (i32, i32, i32, i32) {
    %c0_i32 = arith.constant 0 : i32
    %c0_i32_0 = arith.constant 0 : i32
    %c0_i32_1 = arith.constant 0 : i32
    %c0_i32_2 = arith.constant 0 : i32
    %c0_i32_3 = arith.constant 0 : i32
    return %c0_i32, %c0_i32_0, %c0_i32_1, %c0_i32_2 : i32, i32, i32, i32
  }
  func.func @transform_6(%arg0: i32, %arg1: memref<2xi32, #tpu.memory_space<smem>>) -> (i32, i32, i32, i32) {
    %c0_i32 = arith.constant 0 : i32
    %c0_i32_0 = arith.constant 0 : i32
    %c0_i32_1 = arith.constant 0 : i32
    %c0_i32_2 = arith.constant 0 : i32
    %c0_i32_3 = arith.constant 0 : i32
    return %c0_i32, %c0_i32_0, %c0_i32_1, %c0_i32_2 : i32, i32, i32, i32
  }
  func.func @transform_7(%arg0: i32, %arg1: memref<2xi32, #tpu.memory_space<smem>>) -> (i32, i32, i32, i32) {
    %c0_i32 = arith.constant 0 : i32
    %c0_i32_0 = arith.constant 0 : i32
    %c0_i32_1 = arith.constant 0 : i32
    %c0_i32_2 = arith.constant 0 : i32
    %c0_i32_3 = arith.constant 0 : i32
    return %c0_i32, %c0_i32_0, %c0_i32_1, %c0_i32_2 : i32, i32, i32, i32
  }
  func.func @transform_8(%arg0: i32, %arg1: memref<2xi32, #tpu.memory_space<smem>>) -> (i32, i32, i32, i32) {
    %c0_i32 = arith.constant 0 : i32
    %c0_i32_0 = arith.constant 0 : i32
    %c0_i32_1 = arith.constant 0 : i32
    %c0_i32_2 = arith.constant 0 : i32
    %c0_i32_3 = arith.constant 0 : i32
    return %c0_i32, %c0_i32_0, %c0_i32_1, %c0_i32_2 : i32, i32, i32, i32
  }
  func.func @transform_9(%arg0: i32, %arg1: memref<2xi32, #tpu.memory_space<smem>>) -> (i32, i32, i32, i32) {
    %c0_i32 = arith.constant 0 : i32
    %c0_i32_0 = arith.constant 0 : i32
    %c0_i32_1 = arith.constant 0 : i32
    %c0_i32_2 = arith.constant 0 : i32
    %c0_i32_3 = arith.constant 0 : i32
    return %c0_i32, %c0_i32_0, %c0_i32_1, %c0_i32_2 : i32, i32, i32, i32
  }
  func.func @transform_10(%arg0: i32, %arg1: memref<2xi32, #tpu.memory_space<smem>>) -> (i32, i32, i32, i32) {
    %c0_i32 = arith.constant 0 : i32
    %c0_i32_0 = arith.constant 0 : i32
    %c0_i32_1 = arith.constant 0 : i32
    %c0_i32_2 = arith.constant 0 : i32
    %c0_i32_3 = arith.constant 0 : i32
    return %c0_i32, %c0_i32_0, %c0_i32_1, %c0_i32_2 : i32, i32, i32, i32
  }
  func.func @transform_11(%arg0: i32, %arg1: memref<2xi32, #tpu.memory_space<smem>>) -> (i32, i32, i32, i32) {
    %c0_i32 = arith.constant 0 : i32
    %c0_i32_0 = arith.constant 0 : i32
    %c0_i32_1 = arith.constant 0 : i32
    %c0_i32_2 = arith.constant 0 : i32
    %c0_i32_3 = arith.constant 0 : i32
    return %c0_i32, %c0_i32_0, %c0_i32_1, %c0_i32_2 : i32, i32, i32, i32
  }
  func.func @transform_12(%arg0: i32, %arg1: memref<2xi32, #tpu.memory_space<smem>>) -> (i32, i32, i32) {
    %c0_i32 = arith.constant 0 : i32
    %c0_i32_0 = arith.constant 0 : i32
    %c0_i32_1 = arith.constant 0 : i32
    %c0_i32_2 = arith.constant 0 : i32
    return %c0_i32, %c0_i32_0, %c0_i32_1 : i32, i32, i32
  }
  func.func @transform_13(%arg0: i32, %arg1: memref<2xi32, #tpu.memory_space<smem>>) -> (i32, i32, i32) {
    %c0_i32 = arith.constant 0 : i32
    %c0_i32_0 = arith.constant 0 : i32
    %c0_i32_1 = arith.constant 0 : i32
    %c0_i32_2 = arith.constant 0 : i32
    return %c0_i32, %c0_i32_0, %c0_i32_1 : i32, i32, i32
  }
  func.func @transform_14(%arg0: i32, %arg1: memref<2xi32, #tpu.memory_space<smem>>) -> (i32, i32, i32) {
    %c0_i32 = arith.constant 0 : i32
    %c0_i32_0 = arith.constant 0 : i32
    %c0_i32_1 = arith.constant 0 : i32
    %c0_i32_2 = arith.constant 0 : i32
    return %c0_i32, %c0_i32_0, %c0_i32_1 : i32, i32, i32
  }
  func.func @transform_15(%arg0: i32, %arg1: memref<2xi32, #tpu.memory_space<smem>>) -> (i32, i32, i32) {
    %c0_i32 = arith.constant 0 : i32
    %c0_i32_0 = arith.constant 0 : i32
    %c0_i32_1 = arith.constant 0 : i32
    %c0_i32_2 = arith.constant 0 : i32
    return %c0_i32, %c0_i32_0, %c0_i32_1 : i32, i32, i32
  }
  func.func @transform_16(%arg0: i32, %arg1: memref<2xi32, #tpu.memory_space<smem>>) -> (i32, i32, i32) {
    %c0_i32 = arith.constant 0 : i32
    %c0_i32_0 = arith.constant 0 : i32
    %c0_i32_1 = arith.constant 0 : i32
    %c0_i32_2 = arith.constant 0 : i32
    return %c0_i32, %c0_i32_0, %c0_i32_1 : i32, i32, i32
  }
  func.func @transform_17(%arg0: i32, %arg1: memref<2xi32, #tpu.memory_space<smem>>) -> (i32, i32, i32) {
    %c0_i32 = arith.constant 0 : i32
    %c0_i32_0 = arith.constant 0 : i32
    %c0_i32_1 = arith.constant 0 : i32
    %c0_i32_2 = arith.constant 0 : i32
    return %c0_i32, %c0_i32_0, %c0_i32_1 : i32, i32, i32
  }
  func.func @transform_18(%arg0: i32, %arg1: memref<2xi32, #tpu.memory_space<smem>>) -> (i32, i32, i32) {
    %c0_i32 = arith.constant 0 : i32
    %c0_i32_0 = arith.constant 0 : i32
    %c0_i32_1 = arith.constant 0 : i32
    %c0_i32_2 = arith.constant 0 : i32
    return %c0_i32, %c0_i32_0, %c0_i32_1 : i32, i32, i32
  }
  func.func @transform_19(%arg0: i32, %arg1: memref<2xi32, #tpu.memory_space<smem>>) -> (i32, i32) {
    %c0_i32 = arith.constant 0 : i32
    %c0_i32_0 = arith.constant 0 : i32
    %c0_i32_1 = arith.constant 0 : i32
    return %c0_i32, %c0_i32_0 : i32, i32
  }
  func.func @transform_20(%arg0: i32, %arg1: memref<2xi32, #tpu.memory_space<smem>>) -> (i32, i32) {
    %c0_i32 = arith.constant 0 : i32
    %c0_i32_0 = arith.constant 0 : i32
    %c0_i32_1 = arith.constant 0 : i32
    return %c0_i32, %c0_i32_0 : i32, i32
  }
  func.func @transform_21(%arg0: i32, %arg1: memref<2xi32, #tpu.memory_space<smem>>) -> (i32, i32, i32) {
    %c0_i32 = arith.constant 0 : i32
    %c0_i32_0 = arith.constant 0 : i32
    %c0_i32_1 = arith.constant 0 : i32
    return %arg0, %c0_i32, %c0_i32_0 : i32, i32, i32
  }
  func.func @transform_22(%arg0: i32, %arg1: memref<2xi32, #tpu.memory_space<smem>>) -> (i32, i32, i32) {
    %c0_i32 = arith.constant 0 : i32
    %c0_i32_0 = arith.constant 0 : i32
    %c0_i32_1 = arith.constant 0 : i32
    return %arg0, %c0_i32, %c0_i32_0 : i32, i32, i32
  }
  func.func @transform_23(%arg0: i32, %arg1: memref<2xi32, #tpu.memory_space<smem>>) -> (i32, i32, i32) {
    %c0_i32 = arith.constant 0 : i32
    %c0_i32_0 = arith.constant 0 : i32
    %c0_i32_1 = arith.constant 0 : i32
    return %arg0, %c0_i32, %c0_i32_0 : i32, i32, i32
  }
  func.func @transform_24(%arg0: i32, %arg1: memref<2xi32, #tpu.memory_space<smem>>) -> (i32, i32, i32) {
    %c0_i32 = arith.constant 0 : i32
    %c0_i32_0 = arith.constant 0 : i32
    %c0_i32_1 = arith.constant 0 : i32
    return %arg0, %c0_i32, %c0_i32_0 : i32, i32, i32
  }
  func.func @transform_25(%arg0: i32, %arg1: memref<2xi32, #tpu.memory_space<smem>>) -> (i32, i32, i32) {
    %c0_i32 = arith.constant 0 : i32
    %c0_i32_0 = arith.constant 0 : i32
    %c0_i32_1 = arith.constant 0 : i32
    return %arg0, %c0_i32, %c0_i32_0 : i32, i32, i32
  }
}

</mosaic_0001>

<llo_original>
// kernel: rescl_forward.1
$region0: #{rescl_forward.1}
  #allocation0 [shape = 'u32[]', space=smem, size = 0x4, offset = 0x4, fixed_abs, tag = 'smem constant byte address 0x4 - core index']
  #allocation1 [shape = 'u32[144,128]{1,0:T(1,128)}', space=vmem, size = 0x12000, scoped, tag = 'internal scratch']
  #allocation2 [shape = 's32[1]{0}', space=sflag, size = 0x4, scoped, tag = 'scoped memory for rescl_forward.1']
  #allocation3 [shape = 'u8[512]{0}', space=smem, size = 0x200, scoped, tag = 'prefetched SMEM operand 0']
  %s0 = inlined_call_operand.vmem [shape: s32[2], index: 0, kind: input, shape index: {}]
  %s1 = inlined_call_operand.vmem [shape: f32[2,8,32], index: 1, kind: input, shape index: {}]
  %s2 = inlined_call_operand.vmem [shape: f32[2,1,8], index: 2, kind: input, shape index: {}]
  %s3 = inlined_call_operand.vmem [shape: f32[2,8,1], index: 3, kind: input, shape index: {}]
  %s4 = inlined_call_operand.vmem [shape: f32[2,8,1], index: 4, kind: input, shape index: {}]
  %s5 = inlined_call_operand.vmem [shape: f32[2,32], index: 5, kind: input, shape index: {}]
  %s6 = inlined_call_operand.vmem [shape: bf16[2,2,32,16], index: 6, kind: input, shape index: {}]
  %s7 = inlined_call_operand.vmem [shape: f32[2,2,1,16], index: 7, kind: input, shape index: {}]
  %s8 = inlined_call_operand.vmem [shape: bf16[2,2,32,16], index: 8, kind: input, shape index: {}]
  %s9 = inlined_call_operand.vmem [shape: f32[2,2,1,16], index: 9, kind: input, shape index: {}]
  %s10 = inlined_call_operand.vmem [shape: bf16[2,2,32,16], index: 10, kind: input, shape index: {}]
  %s11 = inlined_call_operand.vmem [shape: f32[2,2,1,16], index: 11, kind: input, shape index: {}]
  %s12 = inlined_call_operand.vmem [shape: bf16[2,2,16,32], index: 12, kind: input, shape index: {}]
  %s13 = inlined_call_operand.vmem [shape: f32[2,1,32], index: 13, kind: input, shape index: {}]
  %s14 = inlined_call_operand.vmem [shape: f32[2,2,32], index: 14, kind: input, shape index: {}]
  %s15 = inlined_call_operand.vmem [shape: bf16[2,32,128], index: 15, kind: input, shape index: {}]
  %s16 = inlined_call_operand.vmem [shape: f32[2,1,128], index: 16, kind: input, shape index: {}]
  %s17 = inlined_call_operand.vmem [shape: bf16[2,128,32], index: 17, kind: input, shape index: {}]
  %s18 = inlined_call_operand.vmem [shape: f32[2,1,32], index: 18, kind: input, shape index: {}]
  %s19 = inlined_call_operand.vmem [shape: f32[2,2,32], index: 19, kind: input, shape index: {}]
  %s20 = inlined_call_operand.vmem [shape: bf16[64,128], index: 20, kind: input, shape index: {}]
  %s21 = inlined_call_operand.vmem [shape: f32[1,128], index: 21, kind: input, shape index: {}]
  %s22 = inlined_call_operand.hbm [shape: f32[2,8,32], index: 22, kind: output, shape index: {0}]
  %s23 = inlined_call_operand.hbm [shape: f32[2,1,64], index: 23, kind: output, shape index: {1}]
  %s24 = inlined_call_operand.hbm [shape: f32[2,1,128], index: 24, kind: output, shape index: {2}]
  %s25 = inlined_call_operand.vmem [shape: f32[2,1,1], index: 25, kind: output, shape index: {3}]
  %s26 = inlined_call_operand.vmem [shape: f32[2,1,1], index: 26, kind: output, shape index: {4}]
  %27 = xla_tuple %s22, %s23, %s24, %s25, %s26
  %s28 = sld [smem:[#allocation0]]
  $region149: #{rescl_forward.1} parent=0
    _
  %s30 = ssub.s32 1, %s28
  %s31 = scalar_select 0, %s30, %s28
  %s32 = sshll.u32 %s0, 4
  %s33 = int_to_ptr.vmem [resolvable:$true] %s32
  %35 = dma.vmem_to_smem %s33, 16, [#allocation3], [#allocation2]
  %36 = dma.done [#allocation2], 16
  %37 = sfence
  $region1: #{rescl_forward.1} parent=0
    #allocation4 [shape = 'u8[8192]{0}', space=vmem, size = 0x2000, scoped, tag = 'output window, operand 0']
    #allocation5 [shape = 's32[2]{0}', space=sflag, size = 0x8, scoped, tag = 'scoped memory for rescl_forward.1']
    #allocation6 [shape = 'u8[1024]{0}', space=vmem, size = 0x400, scoped, tag = 'output window, operand 1']
    #allocation7 [shape = 's32[2]{0}', space=sflag, size = 0x8, scoped, tag = 'scoped memory for rescl_forward.1']
    #allocation8 [shape = 'u8[1024]{0}', space=vmem, size = 0x400, scoped, tag = 'output window, operand 2']
    %38 = vsyncpa [#allocation5], 0
    %s39 = scalar_lea.sflag [#allocation5], 1
    %40 = vsyncpa %s39, 0
    %41 = vsyncpa [#allocation7], 0
    %s42 = scalar_lea.sflag [#allocation7], 1
    %43 = vsyncpa %s42, 0
    loop: start=0, step=1, limit=4
    $region2: #{rescl_forward.1} parent=1 // loop_pre_header
      _
    $region3: #{rescl_forward.1} parent=1 // loop_header
      %s45 = sphi 0, %s49
      %p46 = scmp.ge.s32.totalorder %s45, 4
      %s55 = sphi 0, %s57
      %s58 = sphi 0, %s55
      %s59 = sphi 0, %s58
      %s75 = sphi 0, %s59
      %s81 = sphi 0, %s83
      %s84 = sphi 0, %s81
      %s85 = sphi 0, %s84
      %s101 = sphi 0, %s85
      %s107 = sphi 0, %s109
      %s110 = sphi 0, %s107
      %s111 = sphi 0, %s110
      %s127 = sphi 0, %s111
      %s133 = sphi 0, %s135
      %s136 = sphi 0, %s133
      %s137 = sphi 0, %s136
      %s153 = sphi 0, %s137
      %s157 = sphi 0, %s157
      %s159 = sphi 0, %s157
      %s160 = sphi 0, %s159
      %s174 = sphi 0, %s160
      %s178 = sphi 0, %s178
      %s180 = sphi 0, %s178
      %s181 = sphi 0, %s180
      %s195 = sphi 0, %s181
      %s199 = sphi 0, %s199
      %s201 = sphi 0, %s199
      %s202 = sphi 0, %s201
      %s216 = sphi 0, %s202
      %s220 = sphi 0, %s220
      %s222 = sphi 0, %s220
      %s223 = sphi 0, %s222
      %s237 = sphi 0, %s223
      %s241 = sphi 0, %s241
      %s243 = sphi 0, %s241
      %s244 = sphi 0, %s243
      %s258 = sphi 0, %s244
      %s262 = sphi 0, %s262
      %s264 = sphi 0, %s262
      %s265 = sphi 0, %s264
      %s279 = sphi 0, %s265
      %s283 = sphi 0, %s283
      %s285 = sphi 0, %s283
      %s286 = sphi 0, %s285
      %s300 = sphi 0, %s286
      %s304 = sphi 0, %s304
      %s306 = sphi 0, %s304
      %s307 = sphi 0, %s306
      %s321 = sphi 0, %s307
      %s325 = sphi 0, %s325
      %s327 = sphi 0, %s325
      %s328 = sphi 0, %s327
      %s342 = sphi 0, %s328
      %s346 = sphi 0, %s346
      %s348 = sphi 0, %s346
      %s349 = sphi 0, %s348
      %s363 = sphi 0, %s349
      %s367 = sphi 0, %s367
      %s369 = sphi 0, %s367
      %s370 = sphi 0, %s369
      %s384 = sphi 0, %s370
      %s388 = sphi 0, %s388
      %s390 = sphi 0, %s388
      %s391 = sphi 0, %s390
      %s405 = sphi 0, %s391
      %s409 = sphi 0, %s409
      %s411 = sphi 0, %s409
      %s412 = sphi 0, %s411
      %s426 = sphi 0, %s412
      %s430 = sphi 0, %s430
      %s432 = sphi 0, %s430
      %s433 = sphi 0, %s432
      %s447 = sphi 0, %s433
      %s451 = sphi 0, %s451
      %s453 = sphi 0, %s451
      %s454 = sphi 0, %s453
      %s468 = sphi 0, %s454
      %s472 = sphi 0, %s472
      %s474 = sphi 0, %s472
      %s475 = sphi 0, %s474
      %s489 = sphi 0, %s475
      %s493 = sphi 0, %s493
      %s495 = sphi 0, %s493
      %s496 = sphi 0, %s495
      %s510 = sphi 0, %s496
      %s516 = sphi 0, %s518
      %s519 = sphi 0, %s516
      %s520 = sphi 0, %s519
      %s536 = sphi 0, %s520
      %s542 = sphi 0, %s544
      %s545 = sphi 0, %s542
      %s546 = sphi 0, %s545
      %s562 = sphi 0, %s546
      %s568 = sphi 0, %s570
      %s571 = sphi 0, %s568
      %s572 = sphi 0, %s571
      %s588 = sphi 0, %s572
      %s594 = sphi 0, %s596
      %s597 = sphi 0, %s594
      %s598 = sphi 0, %s597
      %s614 = sphi 0, %s598
      %s620 = sphi 0, %s622
      %s623 = sphi 0, %s620
      %s624 = sphi 0, %s623
      %s640 = sphi 0, %s624
    $region4: #{rescl_forward.1} parent=1 // loop_header_branch
      %48 = sbr.rel (%p46) target = $region8
    $region5: #{rescl_forward.1} parent=1 // loop_body
      %s50 = ssub.s32 %s45, 1
      %s51 = ssub.s32 %s45, 2
      %s52 = sadd.s32 %s45, 1
      %s53 = ssub.s32 %s45, %s52
      %p54 = scmp.eq.s32.totalorder %s53, 0
      %s56 = sadd.s32 %s55, 1
      %s57 = scalar_select %p54, %s55, %s56
      %p60 = pneg %p54
      %p61 = scmp.eq.s32.totalorder %s45, 1
      %p62 = por %p60, %p61
      %p63 = scmp.ne.s32.totalorder %s55, %s58
      %p64 = scmp.eq.s32.totalorder %s45, 0
      %p65 = por %p63, %p64
      %p66 = scmp.ne.s32.totalorder %s55, %s58
      %p67 = scmp.eq.s32.totalorder %s50, 1
      %p68 = por %p66, %p67
      %p69 = scmp.ne.s32.totalorder %s58, %s59
      %p70 = scmp.eq.s32.totalorder %s50, 0
      %p71 = por %p69, %p70
      %p72 = scmp.ne.s32.totalorder %s58, %s59
      %p73 = scmp.eq.s32.totalorder %s51, 1
      %p74 = por %p72, %p73
      %p76 = scmp.ne.s32.totalorder %s59, %s75
      %p77 = scmp.eq.s32.totalorder %s51, 0
      %p78 = por %p76, %p77
      %s79 = ssub.s32 %s45, %s52
      %p80 = scmp.eq.s32.totalorder %s79, 0
      %s82 = sadd.s32 %s81, 1
      %s83 = scalar_select %p80, %s81, %s82
      %p86 = pneg %p80
      %p87 = scmp.eq.s32.totalorder %s45, 1
      %p88 = por %p86, %p87
      %p89 = scmp.ne.s32.totalorder %s81, %s84
      %p90 = scmp.eq.s32.totalorder %s45, 0
      %p91 = por %p89, %p90
      %p92 = scmp.ne.s32.totalorder %s81, %s84
      %p93 = scmp.eq.s32.totalorder %s50, 1
      %p94 = por %p92, %p93
      %p95 = scmp.ne.s32.totalorder %s84, %s85
      %p96 = scmp.eq.s32.totalorder %s50, 0
      %p97 = por %p95, %p96
      %p98 = scmp.ne.s32.totalorder %s84, %s85
      %p99 = scmp.eq.s32.totalorder %s51, 1
      %p100 = por %p98, %p99
      %p102 = scmp.ne.s32.totalorder %s85, %s101
      %p103 = scmp.eq.s32.totalorder %s51, 0
      %p104 = por %p102, %p103
      %s105 = ssub.s32 %s45, %s52
      %p106 = scmp.eq.s32.totalorder %s105, 0
      %s108 = sadd.s32 %s107, 1
      %s109 = scalar_select %p106, %s107, %s108
      %p112 = pneg %p106
      %p113 = scmp.eq.s32.totalorder %s45, 1
      %p114 = por %p112, %p113
      %p115 = scmp.ne.s32.totalorder %s107, %s110
      %p116 = scmp.eq.s32.totalorder %s45, 0
      %p117 = por %p115, %p116
      %p118 = scmp.ne.s32.totalorder %s107, %s110
      %p119 = scmp.eq.s32.totalorder %s50, 1
      %p120 = por %p118, %p119
      %p121 = scmp.ne.s32.totalorder %s110, %s111
      %p122 = scmp.eq.s32.totalorder %s50, 0
      %p123 = por %p121, %p122
      %p124 = scmp.ne.s32.totalorder %s110, %s111
      %p125 = scmp.eq.s32.totalorder %s51, 1
      %p126 = por %p124, %p125
      %p128 = scmp.ne.s32.totalorder %s111, %s127
      %p129 = scmp.eq.s32.totalorder %s51, 0
      %p130 = por %p128, %p129
      %s131 = ssub.s32 %s45, %s52
      %p132 = scmp.eq.s32.totalorder %s131, 0
      %s134 = sadd.s32 %s133, 1
      %s135 = scalar_select %p132, %s133, %s134
      %p138 = pneg %p132
      %p139 = scmp.eq.s32.totalorder %s45, 1
      %p140 = por %p138, %p139
      %p141 = scmp.ne.s32.totalorder %s133, %s136
      %p142 = scmp.eq.s32.totalorder %s45, 0
      %p143 = por %p141, %p142
      %p144 = scmp.ne.s32.totalorder %s133, %s136
      %p145 = scmp.eq.s32.totalorder %s50, 1
      %p146 = por %p144, %p145
      %p147 = scmp.ne.s32.totalorder %s136, %s137
      %p148 = scmp.eq.s32.totalorder %s50, 0
      %p149 = por %p147, %p148
      %p150 = scmp.ne.s32.totalorder %s136, %s137
      %p151 = scmp.eq.s32.totalorder %s51, 1
      %p152 = por %p150, %p151
      %p154 = scmp.ne.s32.totalorder %s137, %s153
      %p155 = scmp.eq.s32.totalorder %s51, 0
      %p156 = por %p154, %p155
      %s158 = sadd.s32 %s157, 1
      %p161 = scmp.eq.s32.totalorder %s45, 1
      %p162 = scmp.ne.s32.totalorder %s157, %s159
      %p163 = scmp.eq.s32.totalorder %s45, 0
      %p164 = por %p162, %p163
      %p165 = scmp.ne.s32.totalorder %s157, %s159
      %p166 = scmp.eq.s32.totalorder %s50, 1
      %p167 = por %p165, %p166
      %p168 = scmp.ne.s32.totalorder %s159, %s160
      %p169 = scmp.eq.s32.totalorder %s50, 0
      %p170 = por %p168, %p169
      %p171 = scmp.ne.s32.totalorder %s159, %s160
      %p172 = scmp.eq.s32.totalorder %s51, 1
      %p173 = por %p171, %p172
      %p175 = scmp.ne.s32.totalorder %s160, %s174
      %p176 = scmp.eq.s32.totalorder %s51, 0
      %p177 = por %p175, %p176
      %s179 = sadd.s32 %s178, 1
      %p182 = scmp.eq.s32.totalorder %s45, 1
      %p183 = scmp.ne.s32.totalorder %s178, %s180
      %p184 = scmp.eq.s32.totalorder %s45, 0
      %p185 = por %p183, %p184
      %p186 = scmp.ne.s32.totalorder %s178, %s180
      %p187 = scmp.eq.s32.totalorder %s50, 1
      %p188 = por %p186, %p187
      %p189 = scmp.ne.s32.totalorder %s180, %s181
      %p190 = scmp.eq.s32.totalorder %s50, 0
      %p191 = por %p189, %p190
      %p192 = scmp.ne.s32.totalorder %s180, %s181
      %p193 = scmp.eq.s32.totalorder %s51, 1
      %p194 = por %p192, %p193
      %p196 = scmp.ne.s32.totalorder %s181, %s195
      %p197 = scmp.eq.s32.totalorder %s51, 0
      %p198 = por %p196, %p197
      %s200 = sadd.s32 %s199, 1
      %p203 = scmp.eq.s32.totalorder %s45, 1
      %p204 = scmp.ne.s32.totalorder %s199, %s201
      %p205 = scmp.eq.s32.totalorder %s45, 0
      %p206 = por %p204, %p205
      %p207 = scmp.ne.s32.totalorder %s199, %s201
      %p208 = scmp.eq.s32.totalorder %s50, 1
      %p209 = por %p207, %p208
      %p210 = scmp.ne.s32.totalorder %s201, %s202
      %p211 = scmp.eq.s32.totalorder %s50, 0
      %p212 = por %p210, %p211
      %p213 = scmp.ne.s32.totalorder %s201, %s202
      %p214 = scmp.eq.s32.totalorder %s51, 1
      %p215 = por %p213, %p214
      %p217 = scmp.ne.s32.totalorder %s202, %s216
      %p218 = scmp.eq.s32.totalorder %s51, 0
      %p219 = por %p217, %p218
      %s221 = sadd.s32 %s220, 1
      %p224 = scmp.eq.s32.totalorder %s45, 1
      %p225 = scmp.ne.s32.totalorder %s220, %s222
      %p226 = scmp.eq.s32.totalorder %s45, 0
      %p227 = por %p225, %p226
      %p228 = scmp.ne.s32.totalorder %s220, %s222
      %p229 = scmp.eq.s32.totalorder %s50, 1
      %p230 = por %p228, %p229
      %p231 = scmp.ne.s32.totalorder %s222, %s223
      %p232 = scmp.eq.s32.totalorder %s50, 0
      %p233 = por %p231, %p232
      %p234 = scmp.ne.s32.totalorder %s222, %s223
      %p235 = scmp.eq.s32.totalorder %s51, 1
      %p236 = por %p234, %p235
      %p238 = scmp.ne.s32.totalorder %s223, %s237
      %p239 = scmp.eq.s32.totalorder %s51, 0
      %p240 = por %p238, %p239
      %s242 = sadd.s32 %s241, 1
      %p245 = scmp.eq.s32.totalorder %s45, 1
      %p246 = scmp.ne.s32.totalorder %s241, %s243
      %p247 = scmp.eq.s32.totalorder %s45, 0
      %p248 = por %p246, %p247
      %p249 = scmp.ne.s32.totalorder %s241, %s243
      %p250 = scmp.eq.s32.totalorder %s50, 1
      %p251 = por %p249, %p250
      %p252 = scmp.ne.s32.totalorder %s243, %s244
      %p253 = scmp.eq.s32.totalorder %s50, 0
      %p254 = por %p252, %p253
      %p255 = scmp.ne.s32.totalorder %s243, %s244
      %p256 = scmp.eq.s32.totalorder %s51, 1
      %p257 = por %p255, %p256
      %p259 = scmp.ne.s32.totalorder %s244, %s258
      %p260 = scmp.eq.s32.totalorder %s51, 0
      %p261 = por %p259, %p260
      %s263 = sadd.s32 %s262, 1
      %p266 = scmp.eq.s32.totalorder %s45, 1
      %p267 = scmp.ne.s32.totalorder %s262, %s264
      %p268 = scmp.eq.s32.totalorder %s45, 0
      %p269 = por %p267, %p268
      %p270 = scmp.ne.s32.totalorder %s262, %s264
      %p271 = scmp.eq.s32.totalorder %s50, 1
      %p272 = por %p270, %p271
      %p273 = scmp.ne.s32.totalorder %s264, %s265
      %p274 = scmp.eq.s32.totalorder %s50, 0
      %p275 = por %p273, %p274
      %p276 = scmp.ne.s32.totalorder %s264, %s265
      %p277 = scmp.eq.s32.totalorder %s51, 1
      %p278 = por %p276, %p277
      %p280 = scmp.ne.s32.totalorder %s265, %s279
      %p281 = scmp.eq.s32.totalorder %s51, 0
      %p282 = por %p280, %p281
      %s284 = sadd.s32 %s283, 1
      %p287 = scmp.eq.s32.totalorder %s45, 1
      %p288 = scmp.ne.s32.totalorder %s283, %s285
      %p289 = scmp.eq.s32.totalorder %s45, 0
      %p290 = por %p288, %p289
      %p291 = scmp.ne.s32.totalorder %s283, %s285
      %p292 = scmp.eq.s32.totalorder %s50, 1
      %p293 = por %p291, %p292
      %p294 = scmp.ne.s32.totalorder %s285, %s286
      %p295 = scmp.eq.s32.totalorder %s50, 0
      %p296 = por %p294, %p295
      %p297 = scmp.ne.s32.totalorder %s285, %s286
      %p298 = scmp.eq.s32.totalorder %s51, 1
      %p299 = por %p297, %p298
      %p301 = scmp.ne.s32.totalorder %s286, %s300
      %p302 = scmp.eq.s32.totalorder %s51, 0
      %p303 = por %p301, %p302
      %s305 = sadd.s32 %s304, 1
      %p308 = scmp.eq.s32.totalorder %s45, 1
      %p309 = scmp.ne.s32.totalorder %s304, %s306
      %p310 = scmp.eq.s32.totalorder %s45, 0
      %p311 = por %p309, %p310
      %p312 = scmp.ne.s32.totalorder %s304, %s306
      %p313 = scmp.eq.s32.totalorder %s50, 1
      %p314 = por %p312, %p313
      %p315 = scmp.ne.s32.totalorder %s306, %s307
      %p316 = scmp.eq.s32.totalorder %s50, 0
      %p317 = por %p315, %p316
      %p318 = scmp.ne.s32.totalorder %s306, %s307
      %p319 = scmp.eq.s32.totalorder %s51, 1
      %p320 = por %p318, %p319
      %p322 = scmp.ne.s32.totalorder %s307, %s321
      %p323 = scmp.eq.s32.totalorder %s51, 0
      %p324 = por %p322, %p323
      %s326 = sadd.s32 %s325, 1
      %p329 = scmp.eq.s32.totalorder %s45, 1
      %p330 = scmp.ne.s32.totalorder %s325, %s327
      %p331 = scmp.eq.s32.totalorder %s45, 0
      %p332 = por %p330, %p331
      %p333 = scmp.ne.s32.totalorder %s325, %s327
      %p334 = scmp.eq.s32.totalorder %s50, 1
      %p335 = por %p333, %p334
      %p336 = scmp.ne.s32.totalorder %s327, %s328
      %p337 = scmp.eq.s32.totalorder %s50, 0
      %p338 = por %p336, %p337
      %p339 = scmp.ne.s32.totalorder %s327, %s328
      %p340 = scmp.eq.s32.totalorder %s51, 1
      %p341 = por %p339, %p340
      %p343 = scmp.ne.s32.totalorder %s328, %s342
      %p344 = scmp.eq.s32.totalorder %s51, 0
      %p345 = por %p343, %p344
      %s347 = sadd.s32 %s346, 1
      %p350 = scmp.eq.s32.totalorder %s45, 1
      %p351 = scmp.ne.s32.totalorder %s346, %s348
      %p352 = scmp.eq.s32.totalorder %s45, 0
      %p353 = por %p351, %p352
      %p354 = scmp.ne.s32.totalorder %s346, %s348
      %p355 = scmp.eq.s32.totalorder %s50, 1
      %p356 = por %p354, %p355
      %p357 = scmp.ne.s32.totalorder %s348, %s349
      %p358 = scmp.eq.s32.totalorder %s50, 0
      %p359 = por %p357, %p358
      %p360 = scmp.ne.s32.totalorder %s348, %s349
      %p361 = scmp.eq.s32.totalorder %s51, 1
      %p362 = por %p360, %p361
      %p364 = scmp.ne.s32.totalorder %s349, %s363
      %p365 = scmp.eq.s32.totalorder %s51, 0
      %p366 = por %p364, %p365
      %s368 = sadd.s32 %s367, 1
      %p371 = scmp.eq.s32.totalorder %s45, 1
      %p372 = scmp.ne.s32.totalorder %s367, %s369
      %p373 = scmp.eq.s32.totalorder %s45, 0
      %p374 = por %p372, %p373
      %p375 = scmp.ne.s32.totalorder %s367, %s369
      %p376 = scmp.eq.s32.totalorder %s50, 1
      %p377 = por %p375, %p376
      %p378 = scmp.ne.s32.totalorder %s369, %s370
      %p379 = scmp.eq.s32.totalorder %s50, 0
      %p380 = por %p378, %p379
      %p381 = scmp.ne.s32.totalorder %s369, %s370
      %p382 = scmp.eq.s32.totalorder %s51, 1
      %p383 = por %p381, %p382
      %p385 = scmp.ne.s32.totalorder %s370, %s384
      %p386 = scmp.eq.s32.totalorder %s51, 0
      %p387 = por %p385, %p386
      %s389 = sadd.s32 %s388, 1
      %p392 = scmp.eq.s32.totalorder %s45, 1
      %p393 = scmp.ne.s32.totalorder %s388, %s390
      %p394 = scmp.eq.s32.totalorder %s45, 0
      %p395 = por %p393, %p394
      %p396 = scmp.ne.s32.totalorder %s388, %s390
      %p397 = scmp.eq.s32.totalorder %s50, 1
      %p398 = por %p396, %p397
      %p399 = scmp.ne.s32.totalorder %s390, %s391
      %p400 = scmp.eq.s32.totalorder %s50, 0
      %p401 = por %p399, %p400
      %p402 = scmp.ne.s32.totalorder %s390, %s391
      %p403 = scmp.eq.s32.totalorder %s51, 1
      %p404 = por %p402, %p403
      %p406 = scmp.ne.s32.totalorder %s391, %s405
      %p407 = scmp.eq.s32.totalorder %s51, 0
      %p408 = por %p406, %p407
      %s410 = sadd.s32 %s409, 1
      %p413 = scmp.eq.s32.totalorder %s45, 1
      %p414 = scmp.ne.s32.totalorder %s409, %s411
      %p415 = scmp.eq.s32.totalorder %s45, 0
      %p416 = por %p414, %p415
      %p417 = scmp.ne.s32.totalorder %s409, %s411
      %p418 = scmp.eq.s32.totalorder %s50, 1
      %p419 = por %p417, %p418
      %p420 = scmp.ne.s32.totalorder %s411, %s412
      %p421 = scmp.eq.s32.totalorder %s50, 0
      %p422 = por %p420, %p421
      %p423 = scmp.ne.s32.totalorder %s411, %s412
      %p424 = scmp.eq.s32.totalorder %s51, 1
      %p425 = por %p423, %p424
      %p427 = scmp.ne.s32.totalorder %s412, %s426
      %p428 = scmp.eq.s32.totalorder %s51, 0
      %p429 = por %p427, %p428
      %s431 = sadd.s32 %s430, 1
      %p434 = scmp.eq.s32.totalorder %s45, 1
      %p435 = scmp.ne.s32.totalorder %s430, %s432
      %p436 = scmp.eq.s32.totalorder %s45, 0
      %p437 = por %p435, %p436
      %p438 = scmp.ne.s32.totalorder %s430, %s432
      %p439 = scmp.eq.s32.totalorder %s50, 1
      %p440 = por %p438, %p439
      %p441 = scmp.ne.s32.totalorder %s432, %s433
      %p442 = scmp.eq.s32.totalorder %s50, 0
      %p443 = por %p441, %p442
      %p444 = scmp.ne.s32.totalorder %s432, %s433
      %p445 = scmp.eq.s32.totalorder %s51, 1
      %p446 = por %p444, %p445
      %p448 = scmp.ne.s32.totalorder %s433, %s447
      %p449 = scmp.eq.s32.totalorder %s51, 0
      %p450 = por %p448, %p449
      %s452 = sadd.s32 %s451, 1
      %p455 = scmp.eq.s32.totalorder %s45, 1
      %p456 = scmp.ne.s32.totalorder %s451, %s453
      %p457 = scmp.eq.s32.totalorder %s45, 0
      %p458 = por %p456, %p457
      %p459 = scmp.ne.s32.totalorder %s451, %s453
      %p460 = scmp.eq.s32.totalorder %s50, 1
      %p461 = por %p459, %p460
      %p462 = scmp.ne.s32.totalorder %s453, %s454
      %p463 = scmp.eq.s32.totalorder %s50, 0
      %p464 = por %p462, %p463
      %p465 = scmp.ne.s32.totalorder %s453, %s454
      %p466 = scmp.eq.s32.totalorder %s51, 1
      %p467 = por %p465, %p466
      %p469 = scmp.ne.s32.totalorder %s454, %s468
      %p470 = scmp.eq.s32.totalorder %s51, 0
      %p471 = por %p469, %p470
      %s473 = sadd.s32 %s472, 1
      %p476 = scmp.eq.s32.totalorder %s45, 1
      %p477 = scmp.ne.s32.totalorder %s472, %s474
      %p478 = scmp.eq.s32.totalorder %s45, 0
      %p479 = por %p477, %p478
      %p480 = scmp.ne.s32.totalorder %s472, %s474
      %p481 = scmp.eq.s32.totalorder %s50, 1
      %p482 = por %p480, %p481
      %p483 = scmp.ne.s32.totalorder %s474, %s475
      %p484 = scmp.eq.s32.totalorder %s50, 0
      %p485 = por %p483, %p484
      %p486 = scmp.ne.s32.totalorder %s474, %s475
      %p487 = scmp.eq.s32.totalorder %s51, 1
      %p488 = por %p486, %p487
      %p490 = scmp.ne.s32.totalorder %s475, %s489
      %p491 = scmp.eq.s32.totalorder %s51, 0
      %p492 = por %p490, %p491
      %s494 = sadd.s32 %s493, 1
      %p497 = scmp.eq.s32.totalorder %s45, 1
      %p498 = scmp.ne.s32.totalorder %s493, %s495
      %p499 = scmp.eq.s32.totalorder %s45, 0
      %p500 = por %p498, %p499
      %p501 = scmp.ne.s32.totalorder %s493, %s495
      %p502 = scmp.eq.s32.totalorder %s50, 1
      %p503 = por %p501, %p502
      %p504 = scmp.ne.s32.totalorder %s495, %s496
      %p505 = scmp.eq.s32.totalorder %s50, 0
      %p506 = por %p504, %p505
      %p507 = scmp.ne.s32.totalorder %s495, %s496
      %p508 = scmp.eq.s32.totalorder %s51, 1
      %p509 = por %p507, %p508
      %p511 = scmp.ne.s32.totalorder %s496, %s510
      %p512 = scmp.eq.s32.totalorder %s51, 0
      %p513 = por %p511, %p512
      %s514 = ssub.s32 %s45, %s52
      %p515 = scmp.eq.s32.totalorder %s514, 0
      %s517 = sadd.s32 %s516, 1
      %s518 = scalar_select %p515, %s516, %s517
      %p521 = pneg %p515
      %p522 = scmp.eq.s32.totalorder %s45, 1
      %p523 = por %p521, %p522
      %p524 = scmp.ne.s32.totalorder %s516, %s519
      %p525 = scmp.eq.s32.totalorder %s45, 0
      %p526 = por %p524, %p525
      %p527 = scmp.ne.s32.totalorder %s516, %s519
      %p528 = scmp.eq.s32.totalorder %s50, 1
      %p529 = por %p527, %p528
      %p530 = scmp.ne.s32.totalorder %s519, %s520
      %p531 = scmp.eq.s32.totalorder %s50, 0
      %p532 = por %p530, %p531
      %p533 = scmp.ne.s32.totalorder %s519, %s520
      %p534 = scmp.eq.s32.totalorder %s51, 1
      %p535 = por %p533, %p534
      %p537 = scmp.ne.s32.totalorder %s520, %s536
      %p538 = scmp.eq.s32.totalorder %s51, 0
      %p539 = por %p537, %p538
      %s540 = ssub.s32 %s45, %s52
      %p541 = scmp.eq.s32.totalorder %s540, 0
      %s543 = sadd.s32 %s542, 1
      %s544 = scalar_select %p541, %s542, %s543
      %p547 = pneg %p541
      %p548 = scmp.eq.s32.totalorder %s45, 1
      %p549 = por %p547, %p548
      %p550 = scmp.ne.s32.totalorder %s542, %s545
      %p551 = scmp.eq.s32.totalorder %s45, 0
      %p552 = por %p550, %p551
      %p553 = scmp.ne.s32.totalorder %s542, %s545
      %p554 = scmp.eq.s32.totalorder %s50, 1
      %p555 = por %p553, %p554
      %p556 = scmp.ne.s32.totalorder %s545, %s546
      %p557 = scmp.eq.s32.totalorder %s50, 0
      %p558 = por %p556, %p557
      %p559 = scmp.ne.s32.totalorder %s545, %s546
      %p560 = scmp.eq.s32.totalorder %s51, 1
      %p561 = por %p559, %p560
      %p563 = scmp.ne.s32.totalorder %s546, %s562
      %p564 = scmp.eq.s32.totalorder %s51, 0
      %p565 = por %p563, %p564
      %s566 = ssub.s32 %s45, %s52
      %p567 = scmp.eq.s32.totalorder %s566, 0
      %s569 = sadd.s32 %s568, 1
      %s570 = scalar_select %p567, %s568, %s569
      %p573 = pneg %p567
      %p574 = scmp.eq.s32.totalorder %s45, 1
      %p575 = por %p573, %p574
      %p576 = scmp.ne.s32.totalorder %s568, %s571
      %p577 = scmp.eq.s32.totalorder %s45, 0
      %p578 = por %p576, %p577
      %p579 = scmp.ne.s32.totalorder %s568, %s571
      %p580 = scmp.eq.s32.totalorder %s50, 1
      %p581 = por %p579, %p580
      %p582 = scmp.ne.s32.totalorder %s571, %s572
      %p583 = scmp.eq.s32.totalorder %s50, 0
      %p584 = por %p582, %p583
      %p585 = scmp.ne.s32.totalorder %s571, %s572
      %p586 = scmp.eq.s32.totalorder %s51, 1
      %p587 = por %p585, %p586
      %p589 = scmp.ne.s32.totalorder %s572, %s588
      %p590 = scmp.eq.s32.totalorder %s51, 0
      %p591 = por %p589, %p590
      %s592 = ssub.s32 %s45, %s52
      %p593 = scmp.eq.s32.totalorder %s592, 0
      %s595 = sadd.s32 %s594, 1
      %s596 = scalar_select %p593, %s594, %s595
      %p599 = pneg %p593
      %p600 = scmp.eq.s32.totalorder %s45, 1
      %p601 = por %p599, %p600
      %p602 = scmp.ne.s32.totalorder %s594, %s597
      %p603 = scmp.eq.s32.totalorder %s45, 0
      %p604 = por %p602, %p603
      %p605 = scmp.ne.s32.totalorder %s594, %s597
      %p606 = scmp.eq.s32.totalorder %s50, 1
      %p607 = por %p605, %p606
      %p608 = scmp.ne.s32.totalorder %s597, %s598
      %p609 = scmp.eq.s32.totalorder %s50, 0
      %p610 = por %p608, %p609
      %p611 = scmp.ne.s32.totalorder %s597, %s598
      %p612 = scmp.eq.s32.totalorder %s51, 1
      %p613 = por %p611, %p612
      %p615 = scmp.ne.s32.totalorder %s598, %s614
      %p616 = scmp.eq.s32.totalorder %s51, 0
      %p617 = por %p615, %p616
      %s618 = ssub.s32 %s45, %s52
      %p619 = scmp.eq.s32.totalorder %s618, 0
      %s621 = sadd.s32 %s620, 1
      %s622 = scalar_select %p619, %s620, %s621
      %p625 = pneg %p619
      %p626 = scmp.eq.s32.totalorder %s45, 1
      %p627 = por %p625, %p626
      %p628 = scmp.ne.s32.totalorder %s620, %s623
      %p629 = scmp.eq.s32.totalorder %s45, 0
      %p630 = por %p628, %p629
      %p631 = scmp.ne.s32.totalorder %s620, %s623
      %p632 = scmp.eq.s32.totalorder %s50, 1
      %p633 = por %p631, %p632
      %p634 = scmp.ne.s32.totalorder %s623, %s624
      %p635 = scmp.eq.s32.totalorder %s50, 0
      %p636 = por %p634, %p635
      %p637 = scmp.ne.s32.totalorder %s623, %s624
      %p638 = scmp.eq.s32.totalorder %s51, 1
      %p639 = por %p637, %p638
      %p641 = scmp.ne.s32.totalorder %s624, %s640
      %p642 = scmp.eq.s32.totalorder %s51, 0
      %p643 = por %p641, %p642
      %p644 = scmp.le.s32.totalorder 1, %s45
      %p645 = scmp.lt.s32.totalorder %s45, 3
      %p646 = pnand %p644, %p645
      %p647 = pneg %p646
      // Predicated region
      $region9: #{rescl_forward.1} parent=5 // pred_check
        _
      $region10: #{rescl_forward.1} parent=5 // pred_check_branch
        %649 = sbr.rel (%p646) target = $region12
      $region11: #{rescl_forward.1} parent=5 // pred_region
        %s650 = ssub.s32 %s45, 1
        // Predicated region
        $region13: #{rescl_forward.1} parent=11 // pred_check
          %p651 = pneg %p170
        $region14: #{rescl_forward.1} parent=11 // pred_check_branch
          %653 = sbr.rel (%p651) target = $region16
        $region15: #{rescl_forward.1} parent=11 // pred_region
          _
        $region16: #{rescl_forward.1} parent=11 // pred_fallthru
          _
        // Predicated region
        $region17: #{rescl_forward.1} parent=11 // pred_check
          %p654 = pneg %p191
        $region18: #{rescl_forward.1} parent=11 // pred_check_branch
          %656 = sbr.rel (%p654) target = $region20
        $region19: #{rescl_forward.1} parent=11 // pred_region
          _
        $region20: #{rescl_forward.1} parent=11 // pred_fallthru
          _
        // Predicated region
        $region21: #{rescl_forward.1} parent=11 // pred_check
          %p657 = pneg %p212
        $region22: #{rescl_forward.1} parent=11 // pred_check_branch
          %659 = sbr.rel (%p657) target = $region24
        $region23: #{rescl_forward.1} parent=11 // pred_region
          _
        $region24: #{rescl_forward.1} parent=11 // pred_fallthru
          _
        // Predicated region
        $region25: #{rescl_forward.1} parent=11 // pred_check
          %p660 = pneg %p233
        $region26: #{rescl_forward.1} parent=11 // pred_check_branch
          %662 = sbr.rel (%p660) target = $region28
        $region27: #{rescl_forward.1} parent=11 // pred_region
          _
        $region28: #{rescl_forward.1} parent=11 // pred_fallthru
          _
        // Predicated region
        $region29: #{rescl_forward.1} parent=11 // pred_check
          %p663 = pneg %p254
        $region30: #{rescl_forward.1} parent=11 // pred_check_branch
          %665 = sbr.rel (%p663) target = $region32
        $region31: #{rescl_forward.1} parent=11 // pred_region
          _
        $region32: #{rescl_forward.1} parent=11 // pred_fallthru
          _
        // Predicated region
        $region33: #{rescl_forward.1} parent=11 // pred_check
          %p666 = pneg %p275
        $region34: #{rescl_forward.1} parent=11 // pred_check_branch
          %668 = sbr.rel (%p666) target = $region36
        $region35: #{rescl_forward.1} parent=11 // pred_region
          _
        $region36: #{rescl_forward.1} parent=11 // pred_fallthru
          _
        // Predicated region
        $region37: #{rescl_forward.1} parent=11 // pred_check
          %p669 = pneg %p296
        $region38: #{rescl_forward.1} parent=11 // pred_check_branch
          %671 = sbr.rel (%p669) target = $region40
        $region39: #{rescl_forward.1} parent=11 // pred_region
          _
        $region40: #{rescl_forward.1} parent=11 // pred_fallthru
          _
        // Predicated region
        $region41: #{rescl_forward.1} parent=11 // pred_check
          %p672 = pneg %p317
        $region42: #{rescl_forward.1} parent=11 // pred_check_branch
          %674 = sbr.rel (%p672) target = $region44
        $region43: #{rescl_forward.1} parent=11 // pred_region
          _
        $region44: #{rescl_forward.1} parent=11 // pred_fallthru
          _
        // Predicated region
        $region45: #{rescl_forward.1} parent=11 // pred_check
          %p675 = pneg %p338
        $region46: #{rescl_forward.1} parent=11 // pred_check_branch
          %677 = sbr.rel (%p675) target = $region48
        $region47: #{rescl_forward.1} parent=11 // pred_region
          _
        $region48: #{rescl_forward.1} parent=11 // pred_fallthru
          _
        // Predicated region
        $region49: #{rescl_forward.1} parent=11 // pred_check
          %p678 = pneg %p359
        $region50: #{rescl_forward.1} parent=11 // pred_check_branch
          %680 = sbr.rel (%p678) target = $region52
        $region51: #{rescl_forward.1} parent=11 // pred_region
          _
        $region52: #{rescl_forward.1} parent=11 // pred_fallthru
          _
        // Predicated region
        $region53: #{rescl_forward.1} parent=11 // pred_check
          %p681 = pneg %p380
        $region54: #{rescl_forward.1} parent=11 // pred_check_branch
          %683 = sbr.rel (%p681) target = $region56
        $region55: #{rescl_forward.1} parent=11 // pred_region
          _
        $region56: #{rescl_forward.1} parent=11 // pred_fallthru
          _
        // Predicated region
        $region57: #{rescl_forward.1} parent=11 // pred_check
          %p684 = pneg %p401
        $region58: #{rescl_forward.1} parent=11 // pred_check_branch
          %686 = sbr.rel (%p684) target = $region60
        $region59: #{rescl_forward.1} parent=11 // pred_region
          _
        $region60: #{rescl_forward.1} parent=11 // pred_fallthru
          _
        // Predicated region
        $region61: #{rescl_forward.1} parent=11 // pred_check
          %p687 = pneg %p422
        $region62: #{rescl_forward.1} parent=11 // pred_check_branch
          %689 = sbr.rel (%p687) target = $region64
        $region63: #{rescl_forward.1} parent=11 // pred_region
          _
        $region64: #{rescl_forward.1} parent=11 // pred_fallthru
          _
        // Predicated region
        $region65: #{rescl_forward.1} parent=11 // pred_check
          %p690 = pneg %p443
        $region66: #{rescl_forward.1} parent=11 // pred_check_branch
          %692 = sbr.rel (%p690) target = $region68
        $region67: #{rescl_forward.1} parent=11 // pred_region
          _
        $region68: #{rescl_forward.1} parent=11 // pred_fallthru
          _
        // Predicated region
        $region69: #{rescl_forward.1} parent=11 // pred_check
          %p693 = pneg %p464
        $region70: #{rescl_forward.1} parent=11 // pred_check_branch
          %695 = sbr.rel (%p693) target = $region72
        $region71: #{rescl_forward.1} parent=11 // pred_region
          _
        $region72: #{rescl_forward.1} parent=11 // pred_fallthru
          _
        // Predicated region
        $region73: #{rescl_forward.1} parent=11 // pred_check
          %p696 = pneg %p485
        $region74: #{rescl_forward.1} parent=11 // pred_check_branch
          %698 = sbr.rel (%p696) target = $region76
        $region75: #{rescl_forward.1} parent=11 // pred_region
          _
        $region76: #{rescl_forward.1} parent=11 // pred_fallthru
          _
        // Predicated region
        $region77: #{rescl_forward.1} parent=11 // pred_check
          %p699 = pneg %p506
        $region78: #{rescl_forward.1} parent=11 // pred_check_branch
          %701 = sbr.rel (%p699) target = $region80
        $region79: #{rescl_forward.1} parent=11 // pred_region
          _
        $region80: #{rescl_forward.1} parent=11 // pred_fallthru
          _
      $region12: #{rescl_forward.1} parent=5 // pred_fallthru
        _
      %p702 = scmp.lt.s32.totalorder %s45, 2
      // Predicated region
      $region81: #{rescl_forward.1} parent=5 // pred_check
        %p703 = pneg %p702
      $region82: #{rescl_forward.1} parent=5 // pred_check_branch
        %705 = sbr.rel (%p703) target = $region84
      $region83: #{rescl_forward.1} parent=5 // pred_region
        // Predicated region
        $region85: #{rescl_forward.1} parent=83 // pred_check
          %p706 = pneg %p65
        $region86: #{rescl_forward.1} parent=83 // pred_check_branch
          %708 = sbr.rel (%p706) target = $region88
        $region87: #{rescl_forward.1} parent=83 // pred_region
          %p709 = scmp.lt.s32.totalorder %s45, 1
          %s710 = scalar_select %p709, %s45, 1
          %s711 = smul.addr %s710, 8
          %s712 = scalar_lea.vmem %s1, %s711
        $region88: #{rescl_forward.1} parent=83 // pred_fallthru
          _
        // Predicated region
        $region89: #{rescl_forward.1} parent=83 // pred_check
          %p713 = pneg %p91
        $region90: #{rescl_forward.1} parent=83 // pred_check_branch
          %715 = sbr.rel (%p713) target = $region92
        $region91: #{rescl_forward.1} parent=83 // pred_region
          %p716 = scmp.lt.s32.totalorder %s45, 1
          %s717 = scalar_select %p716, %s45, 1
          %s718 = scalar_lea.vmem %s2, %s717
        $region92: #{rescl_forward.1} parent=83 // pred_fallthru
          _
        // Predicated region
        $region93: #{rescl_forward.1} parent=83 // pred_check
          %p719 = pneg %p117
        $region94: #{rescl_forward.1} parent=83 // pred_check_branch
          %721 = sbr.rel (%p719) target = $region96
        $region95: #{rescl_forward.1} parent=83 // pred_region
          %p722 = scmp.lt.s32.totalorder %s45, 1
          %s723 = scalar_select %p722, %s45, 1
          %s724 = smul.addr %s723, 8
          %s725 = scalar_lea.vmem %s3, %s724
        $region96: #{rescl_forward.1} parent=83 // pred_fallthru
          _
        // Predicated region
        $region97: #{rescl_forward.1} parent=83 // pred_check
          %p726 = pneg %p143
        $region98: #{rescl_forward.1} parent=83 // pred_check_branch
          %728 = sbr.rel (%p726) target = $region100
        $region99: #{rescl_forward.1} parent=83 // pred_region
          %p729 = scmp.lt.s32.totalorder %s45, 1
          %s730 = scalar_select %p729, %s45, 1
          %s731 = smul.addr %s730, 8
          %s732 = scalar_lea.vmem %s4, %s731
        $region100: #{rescl_forward.1} parent=83 // pred_fallthru
          _
      $region84: #{rescl_forward.1} parent=5 // pred_fallthru
        _
      %p733 = scmp.le.s32.totalorder 1, %s45
      %p734 = scmp.lt.s32.totalorder %s45, 3
      %p735 = pnand %p733, %p734
      %p736 = pneg %p735
      // Predicated region
      $region101: #{rescl_forward.1} parent=5 // pred_check
        _
      $region102: #{rescl_forward.1} parent=5 // pred_check_branch
        %738 = sbr.rel (%p735) target = $region104
      $region103: #{rescl_forward.1} parent=5 // pred_region
        %s739 = ssub.s32 %s45, 1
        %p740 = scmp.lt.s32.totalorder %s50, 1
        %s741 = scalar_select %p740, %s50, 1
        %s742 = smul.addr %s741, 8
        %s743 = scalar_lea.vmem %s1, %s742
        %p744 = pneg %p71
        %p745 = pneg %p68
        %p746 = scmp.lt.s32.totalorder %s50, 1
        %s747 = scalar_select %p746, %s50, 1
        %s748 = scalar_lea.vmem %s2, %s747
        %p749 = pneg %p97
        %p750 = pneg %p94
        %p751 = scmp.lt.s32.totalorder %s50, 1
        %s752 = scalar_select %p751, %s50, 1
        %s753 = smul.addr %s752, 8
        %s754 = scalar_lea.vmem %s3, %s753
        %p755 = pneg %p123
        %p756 = pneg %p120
        %p757 = scmp.lt.s32.totalorder %s50, 1
        %s758 = scalar_select %p757, %s50, 1
        %s759 = smul.addr %s758, 8
        %s760 = scalar_lea.vmem %s4, %s759
        %p761 = pneg %p149
        %p762 = pneg %p146
        %p763 = pneg %p170
        %p764 = pneg %p167
        %p765 = pneg %p191
        %p766 = pneg %p188
        %p767 = pneg %p212
        %p768 = pneg %p209
        %p769 = pneg %p233
        %p770 = pneg %p230
        %p771 = pneg %p254
        %p772 = pneg %p251
        %p773 = pneg %p275
        %p774 = pneg %p272
        %p775 = pneg %p296
        %p776 = pneg %p293
        %p777 = pneg %p317
        %p778 = pneg %p314
        %p779 = pneg %p338
        %p780 = pneg %p335
        %p781 = pneg %p359
        %p782 = pneg %p356
        %p783 = pneg %p380
        %p784 = pneg %p377
        %p785 = pneg %p401
        %p786 = pneg %p398
        %p787 = pneg %p422
        %p788 = pneg %p419
        %p789 = pneg %p443
        %p790 = pneg %p440
        %p791 = pneg %p464
        %p792 = pneg %p461
        %p793 = pneg %p485
        %p794 = pneg %p482
        %p795 = pneg %p506
        %p796 = pneg %p503
        %p797 = pneg %p532
        %p798 = pneg %p529
        %s799 = sand.u32 %s519, 1
        %s800 = scalar_lea.sflag [#allocation5], %s799
        %s801 = sand.u32 %s519, 1
        %s802 = smul.addr %s801, 8
        %s803 = scalar_lea.vmem [#allocation4], %s802
        %p804 = pneg %p558
        %p805 = pneg %p555
        %s806 = sand.u32 %s50, 1
        %s807 = scalar_lea.sflag [#allocation7], %s806
        %s808 = sand.u32 %s545, 1
        %s809 = scalar_lea.vmem [#allocation6], %s808
        %p810 = pneg %p584
        %p811 = pneg %p581
        %s812 = sand.u32 %s50, 1
        %s813 = scalar_lea.sflag [#allocation7], %s812
        %s814 = sand.u32 %s571, 1
        %s815 = scalar_lea.vmem [#allocation8], %s814
        %p816 = pneg %p610
        %p817 = pneg %p607
        %p818 = scmp.lt.s32.totalorder %s50, 1
        %s819 = scalar_select %p818, %s50, 1
        %s820 = scalar_lea.vmem %s25, %s819
        %p821 = pneg %p636
        %p822 = pneg %p633
        %p823 = scmp.lt.s32.totalorder %s50, 1
        %s824 = scalar_select %p823, %s50, 1
        %s825 = scalar_lea.vmem %s26, %s824
        %p826 = scmp.lt.s32.totalorder %s50, 1
        %s827 = scalar_select %p826, %s50, 1
        %s828 = smul.addr %s827, 8
        %s829 = scalar_lea.vmem %s1, %s828
        %p830 = scmp.lt.s32.totalorder %s50, 1
        %s831 = scalar_select %p830, %s50, 1
        %s832 = scalar_lea.vmem %s2, %s831
        %p833 = scmp.lt.s32.totalorder %s50, 1
        %s834 = scalar_select %p833, %s50, 1
        %s835 = smul.addr %s834, 8
        %s836 = scalar_lea.vmem %s3, %s835
        %p837 = scmp.lt.s32.totalorder %s50, 1
        %s838 = scalar_select %p837, %s50, 1
        %s839 = smul.addr %s838, 8
        %s840 = scalar_lea.vmem %s4, %s839
        %p841 = scmp.lt.s32.totalorder %s50, 1
        %s842 = scalar_select %p841, %s50, 1
        %s843 = scalar_lea.vmem %s25, %s842
        %p844 = scmp.lt.s32.totalorder %s50, 1
        %s845 = scalar_select %p844, %s50, 1
        %s846 = scalar_lea.vmem %s26, %s845
        %v848 = vld [vmem:[%s832] sm:$0x1]
        %v849 = vsub.f32 1.0, %v848
        %v850 = vmul.f32 %v849, -10000.0
        %v852 = vlaneseq
        %v853 = vshrl.u32 %v852, 7
        %v854 = vsub.s32 0, %v853
        %v855 = vrot.slane %v850, %v854
        %v857 = vld [vmem:[%s829] sm:$0xff]
        %v858 = vld [vmem:[%s5] sm:$0x3]
        %vm859 = vcmask 261120
        %v860 = vsel %vm859, %v857, 0.0
        %861 = vadd.xlane.f32.xlu0 %v860
        %v862 = vpop.xlane.xlu0 %861
        %v863 = vrcp.pop 32.0
        %v864 = vmul.f32 %v862, %v863
        %v865 = vsub.f32 %v857, %v864
        %v866 = vmul.f32 %v865, %v865
        %v867 = vsel %vm859, %v866, 0.0
        %868 = vadd.xlane.f32.xlu0 %v867
        %v869 = vpop.xlane.xlu0 %868
        %v870 = vmul.f32 %v869, %v863
        %v871 = vadd.f32 %v870, 1e-12
        %v872 = vrsqrt.pop %v871
        %v873 = vmul.f32 %v865, %v872
        %v874 = vlaneseq
        %v875 = vshrl.u32 %v874, 7
        %v876 = vsub.s32 0, %v875
        %v877 = vrot.slane %v858, %v876
        %v878 = vmul.f32 %v873, %v877
        %v879 = vlaneseq
        %v880 = vshrl.u32 %v879, 7
        %v881 = vsub.s32 1, %v880
        %v882 = vrot.slane %v858, %v881
        %v883 = vadd.f32 %v878, %v882
        %v884 = vld [vmem:[%s13] sm:$0x1]
        %v885 = vld [vmem:[%s6] sm:$0xf]
        %v886 = vld [vmem:[%s6 + $0x4] sm:$0xf]
        %v887 = vld [vmem:[%s6 + $0x8] sm:$0xf]
        %v888 = vld [vmem:[%s6 + $0xc] sm:$0xf]
        %v889 = vpack.c.bf16 %v883, %v883
        %v890 = vld [vmem:[%s7] sm:$0x1]
        %v892 = vlaneseq
        %v893 = vshrl.u32 %v892, 7
        %v894 = vsub.s32 0, %v893
        %v895 = vrot.slane %v890, %v894
        %v901 = vunpack.c.l.b16 %v885
        %v902 = vunpack.c.l.b16 %v886
        %v903 = vunpack.c.l.b16 %v887
        %v904 = vunpack.c.l.b16 %v888
        %v905 = vpack.c.b16 %v902, %v901
        %v906 = vpack.c.b16 %v904, %v903
        %v910 = vsel %vm859, %v889, 0
        %912 = vmatprep.subr.bf16.mxu0 0
        %913 = vmatpush1.bf16.msra.mxu0 %v905
        %914 = vmatprep.subr.bf16.mxu0 0
        %915 = vmatpush1.bf16.msra.mxu0 %v906
        %916 = vmatprep.subr.bf16.mxu0 0
        %917 = vmatpush1.bf16.msra.mxu0 0
        %918 = vmatprep.subr.bf16.mxu0 0
        %919 = vmatpush1.bf16.msra.mxu0 0
        %920 = vmatprep.subr.bf16.mxu0 0
        %921 = vmatpush1.bf16.msra.mxu0 0
        %922 = vmatprep.subr.bf16.mxu0 0
        %923 = vmatpush1.bf16.msra.mxu0 0
        %924 = vmatprep.subr.bf16.mxu0 0
        %925 = vmatpush1.bf16.msra.mxu0 0
        %926 = vmatprep.subr.bf16.mxu0 0
        %927 = vmatpush1.bf16.msra.mxu0 0
        %928 = vmatprep.subr.bf16.mxu0 0
        %929 = vmatpush1.bf16.msra.mxu0 0
        %930 = vmatprep.subr.bf16.mxu0 0
        %931 = vmatpush1.bf16.msra.mxu0 0
        %932 = vmatprep.subr.bf16.mxu0 0
        %933 = vmatpush1.bf16.msra.mxu0 0
        %934 = vmatprep.subr.bf16.mxu0 0
        %935 = vmatpush1.bf16.msra.mxu0 0
        %936 = vmatprep.subr.bf16.mxu0 0
        %937 = vmatpush1.bf16.msra.mxu0 0
        %938 = vmatprep.subr.bf16.mxu0 0
        %939 = vmatpush1.bf16.msra.mxu0 0
        %940 = vmatprep.subr.bf16.mxu0 0
        %941 = vmatpush1.bf16.msra.mxu0 0
        %942 = vmatprep.subr.bf16.mxu0 0
        %943 = vmatpush1.bf16.msra.mxu0 0
        %944 = vmatprep.mubr.bf16.mxu0 0
        %945 = vmatmul.mubr.bf16.gmra.mrb[0].mxu0 %v910
        %v946 = vpop.f32.mrb[0].mxu0
        %v947 = vadd.f32 %v895, %v946
        %v948 = vpop.f32.mrb[0].mxu0
        %v949 = vpop.f32.mrb[0].mxu0
        %v950 = vpop.f32.mrb[0].mxu0
        %951 = vdwg.mxu0
        %v952 = vld [vmem:[%s8] sm:$0xf]
        %v953 = vld [vmem:[%s8 + $0x4] sm:$0xf]
        %v954 = vld [vmem:[%s8 + $0x8] sm:$0xf]
        %v955 = vld [vmem:[%s8 + $0xc] sm:$0xf]
        %v956 = vld [vmem:[%s9] sm:$0x1]
        %v958 = vlaneseq
        %v959 = vshrl.u32 %v958, 7
        %v960 = vsub.s32 0, %v959
        %v961 = vrot.slane %v956, %v960
        %v967 = vunpack.c.l.b16 %v952
        %v968 = vunpack.c.l.b16 %v953
        %v969 = vunpack.c.l.b16 %v954
        %v970 = vunpack.c.l.b16 %v955
        %v971 = vpack.c.b16 %v968, %v967
        %v972 = vpack.c.b16 %v970, %v969
        %975 = vmatprep.subr.bf16.mxu0 0
        %976 = vmatpush1.bf16.msra.mxu0 %v971
        %977 = vmatprep.subr.bf16.mxu0 0
        %978 = vmatpush1.bf16.msra.mxu0 %v972
        %979 = vmatprep.subr.bf16.mxu0 0
        %980 = vmatpush1.bf16.msra.mxu0 0
        %981 = vmatprep.subr.bf16.mxu0 0
        %982 = vmatpush1.bf16.msra.mxu0 0
        %983 = vmatprep.subr.bf16.mxu0 0
        %984 = vmatpush1.bf16.msra.mxu0 0
        %985 = vmatprep.subr.bf16.mxu0 0
        %986 = vmatpush1.bf16.msra.mxu0 0
        %987 = vmatprep.subr.bf16.mxu0 0
        %988 = vmatpush1.bf16.msra.mxu0 0
        %989 = vmatprep.subr.bf16.mxu0 0
        %990 = vmatpush1.bf16.msra.mxu0 0
        %991 = vmatprep.subr.bf16.mxu0 0
        %992 = vmatpush1.bf16.msra.mxu0 0
        %993 = vmatprep.subr.bf16.mxu0 0
        %994 = vmatpush1.bf16.msra.mxu0 0
        %995 = vmatprep.subr.bf16.mxu0 0
        %996 = vmatpush1.bf16.msra.mxu0 0
        %997 = vmatprep.subr.bf16.mxu0 0
        %998 = vmatpush1.bf16.msra.mxu0 0
        %999 = vmatprep.subr.bf16.mxu0 0
        %1000 = vmatpush1.bf16.msra.mxu0 0
        %1001 = vmatprep.subr.bf16.mxu0 0
        %1002 = vmatpush1.bf16.msra.mxu0 0
        %1003 = vmatprep.subr.bf16.mxu0 0
        %1004 = vmatpush1.bf16.msra.mxu0 0
        %1005 = vmatprep.subr.bf16.mxu0 0
        %1006 = vmatpush1.bf16.msra.mxu0 0
        %1007 = vmatprep.mubr.bf16.mxu0 0
        %1008 = vmatmul.mubr.bf16.gmra.mrb[0].mxu0 %v910
        %v1009 = vpop.f32.mrb[0].mxu0
        %v1010 = vadd.f32 %v961, %v1009
        %v1011 = vpop.f32.mrb[0].mxu0
        %v1012 = vpop.f32.mrb[0].mxu0
        %v1013 = vpop.f32.mrb[0].mxu0
        %1014 = vdwg.mxu0
        %v1015 = vld [vmem:[%s10] sm:$0xf]
        %v1016 = vld [vmem:[%s10 + $0x4] sm:$0xf]
        %v1017 = vld [vmem:[%s10 + $0x8] sm:$0xf]
        %v1018 = vld [vmem:[%s10 + $0xc] sm:$0xf]
        %v1019 = vld [vmem:[%s11] sm:$0x1]
        %v1021 = vlaneseq
        %v1022 = vshrl.u32 %v1021, 7
        %v1023 = vsub.s32 0, %v1022
        %v1024 = vrot.slane %v1019, %v1023
        %v1030 = vunpack.c.l.b16 %v1015
        %v1031 = vunpack.c.l.b16 %v1016
        %v1032 = vunpack.c.l.b16 %v1017
        %v1033 = vunpack.c.l.b16 %v1018
        %v1034 = vpack.c.b16 %v1031, %v1030
        %v1035 = vpack.c.b16 %v1033, %v1032
        %1038 = vmatprep.subr.bf16.mxu0 0
        %1039 = vmatpush1.bf16.msra.mxu0 %v1034
        %1040 = vmatprep.subr.bf16.mxu0 0
        %1041 = vmatpush1.bf16.msra.mxu0 %v1035
        %1042 = vmatprep.subr.bf16.mxu0 0
        %1043 = vmatpush1.bf16.msra.mxu0 0
        %1044 = vmatprep.subr.bf16.mxu0 0
        %1045 = vmatpush1.bf16.msra.mxu0 0
        %1046 = vmatprep.subr.bf16.mxu0 0
        %1047 = vmatpush1.bf16.msra.mxu0 0
        %1048 = vmatprep.subr.bf16.mxu0 0
        %1049 = vmatpush1.bf16.msra.mxu0 0
        %1050 = vmatprep.subr.bf16.mxu0 0
        %1051 = vmatpush1.bf16.msra.mxu0 0
        %1052 = vmatprep.subr.bf16.mxu0 0
        %1053 = vmatpush1.bf16.msra.mxu0 0
        %1054 = vmatprep.subr.bf16.mxu0 0
        %1055 = vmatpush1.bf16.msra.mxu0 0
        %1056 = vmatprep.subr.bf16.mxu0 0
        %1057 = vmatpush1.bf16.msra.mxu0 0
        %1058 = vmatprep.subr.bf16.mxu0 0
        %1059 = vmatpush1.bf16.msra.mxu0 0
        %1060 = vmatprep.subr.bf16.mxu0 0
        %1061 = vmatpush1.bf16.msra.mxu0 0
        %1062 = vmatprep.subr.bf16.mxu0 0
        %1063 = vmatpush1.bf16.msra.mxu0 0
        %1064 = vmatprep.subr.bf16.mxu0 0
        %1065 = vmatpush1.bf16.msra.mxu0 0
        %1066 = vmatprep.subr.bf16.mxu0 0
        %1067 = vmatpush1.bf16.msra.mxu0 0
        %1068 = vmatprep.subr.bf16.mxu0 0
        %1069 = vmatpush1.bf16.msra.mxu0 0
        %1070 = vmatprep.mubr.bf16.mxu0 0
        %1071 = vmatmul.mubr.bf16.gmra.mrb[0].mxu0 %v910
        %v1072 = vpop.f32.mrb[0].mxu0
        %v1073 = vadd.f32 %v1024, %v1072
        %v1074 = vpop.f32.mrb[0].mxu0
        %v1075 = vpop.f32.mrb[0].mxu0
        %v1076 = vpop.f32.mrb[0].mxu0
        %1077 = vdwg.mxu0
        %v1078 = vpack.c.bf16 %v947, %v947
        %v1079 = vpack.c.bf16 %v1010, %v1010
        %vm1080 = vcmask 130048
        %v1082 = vsel %vm1080, %v1078, 0
        %v1085 = vsel %vm1080, %v1079, 0
        %1087 = vmatprep.subr.bf16.mxu0 0
        %1088 = vmatpush1.bf16.xpose.msra.mxu0 %v1085
        %1089 = vmatprep.subr.bf16.mxu0 0
        %1090 = vmatpush1.bf16.xpose.msra.mxu0 0
        %1091 = vmatprep.subr.bf16.mxu0 0
        %1092 = vmatpush1.bf16.xpose.msra.mxu0 0
        %1093 = vmatprep.subr.bf16.mxu0 0
        %1094 = vmatpush1.bf16.xpose.msra.mxu0 0
        %1095 = vmatprep.subr.bf16.mxu0 0
        %1096 = vmatpush1.bf16.xpose.msra.mxu0 0
        %1097 = vmatprep.subr.bf16.mxu0 0
        %1098 = vmatpush1.bf16.xpose.msra.mxu0 0
        %1099 = vmatprep.subr.bf16.mxu0 0
        %1100 = vmatpush1.bf16.xpose.msra.mxu0 0
        %1101 = vmatprep.subr.bf16.mxu0 0
        %1102 = vmatpush1.bf16.xpose.msra.mxu0 0
        %1103 = vmatprep.subr.bf16.mxu0 0
        %1104 = vmatpush1.bf16.xpose.msra.mxu0 0
        %1105 = vmatprep.subr.bf16.mxu0 0
        %1106 = vmatpush1.bf16.xpose.msra.mxu0 0
        %1107 = vmatprep.subr.bf16.mxu0 0
        %1108 = vmatpush1.bf16.xpose.msra.mxu0 0
        %1109 = vmatprep.subr.bf16.mxu0 0
        %1110 = vmatpush1.bf16.xpose.msra.mxu0 0
        %1111 = vmatprep.subr.bf16.mxu0 0
        %1112 = vmatpush1.bf16.xpose.msra.mxu0 0
        %1113 = vmatprep.subr.bf16.mxu0 0
        %1114 = vmatpush1.bf16.xpose.msra.mxu0 0
        %1115 = vmatprep.subr.bf16.mxu0 0
        %1116 = vmatpush1.bf16.xpose.msra.mxu0 0
        %1117 = vmatprep.subr.bf16.mxu0 0
        %1118 = vmatpush1.bf16.xpose.msra.mxu0 0
        %1119 = vmatprep.mubr.bf16.mxu0 0
        %1120 = vmatmul.mubr.bf16.gmra.mrb[0].mxu0 %v1082
        %v1121 = vpop.f32.mrb[0].mxu0
        %v1122 = vadd.f32 0.0, %v1121
        %v1123 = vpop.f32.mrb[0].mxu0
        %v1124 = vpop.f32.mrb[0].mxu0
        %v1125 = vpop.f32.mrb[0].mxu0
        %1126 = vdwg.mxu0
        %v1127 = vmul.f32 %v1122, 0.25
        %v1128 = vadd.f32 %v1127, %v855
        %vm1129 = vcmask 64512
        %v1130 = vsel %vm1129, %v1128, -inf
        %1131 = vmax.xlane.f32.xlu0 %v1130
        %v1132 = vpop.xlane.xlu0 %1131
        %v1133 = vsub.f32 %v1128, %v1132
        %v1134 = vmul.f32 %v1133, 1.442695
        %v1135 = vpow.pop %v1134
        %v1136 = vsel %vm1129, %v1135, 0.0
        %1137 = vadd.xlane.f32.xlu0 %v1136
        %v1138 = vpop.xlane.xlu0 %1137
        %v1139 = vrcp.pop %v1138
        %v1140 = vmul.f32 %v1135, %v1139
        %v1141 = vpack.c.bf16 %v1140, %v1140
        %v1142 = vpack.c.bf16 %v1073, %v1073
        %v1144 = vsel %vm1129, %v1141, 0
        %vm1146 = vcmask 1043456
        %v1148 = vsel %vm1146, %v1142, 0
        %1150 = vmatprep.subr.bf16.mxu0 0
        %1151 = vmatpush1.bf16.msra.mxu0 %v1148
        %1152 = vmatprep.subr.bf16.mxu0 0
        %1153 = vmatpush1.bf16.msra.mxu0 0
        %1154 = vmatprep.subr.bf16.mxu0 0
        %1155 = vmatpush1.bf16.msra.mxu0 0
        %1156 = vmatprep.subr.bf16.mxu0 0
        %1157 = vmatpush1.bf16.msra.mxu0 0
        %1158 = vmatprep.subr.bf16.mxu0 0
        %1159 = vmatpush1.bf16.msra.mxu0 0
        %1160 = vmatprep.subr.bf16.mxu0 0
        %1161 = vmatpush1.bf16.msra.mxu0 0
        %1162 = vmatprep.subr.bf16.mxu0 0
        %1163 = vmatpush1.bf16.msra.mxu0 0
        %1164 = vmatprep.subr.bf16.mxu0 0
        %1165 = vmatpush1.bf16.msra.mxu0 0
        %1166 = vmatprep.subr.bf16.mxu0 0
        %1167 = vmatpush1.bf16.msra.mxu0 0
        %1168 = vmatprep.subr.bf16.mxu0 0
        %1169 = vmatpush1.bf16.msra.mxu0 0
        %1170 = vmatprep.subr.bf16.mxu0 0
        %1171 = vmatpush1.bf16.msra.mxu0 0
        %1172 = vmatprep.subr.bf16.mxu0 0
        %1173 = vmatpush1.bf16.msra.mxu0 0
        %1174 = vmatprep.subr.bf16.mxu0 0
        %1175 = vmatpush1.bf16.msra.mxu0 0
        %1176 = vmatprep.subr.bf16.mxu0 0
        %1177 = vmatpush1.bf16.msra.mxu0 0
        %1178 = vmatprep.subr.bf16.mxu0 0
        %1179 = vmatpush1.bf16.msra.mxu0 0
        %1180 = vmatprep.subr.bf16.mxu0 0
        %1181 = vmatpush1.bf16.msra.mxu0 0
        %1182 = vmatprep.mubr.bf16.mxu0 0
        %1183 = vmatmul.mubr.bf16.gmra.mrb[0].mxu0 %v1144
        %v1184 = vpop.f32.mrb[0].mxu0
        %v1185 = vadd.f32 0.0, %v1184
        %v1186 = vpop.f32.mrb[0].mxu0
        %v1187 = vpop.f32.mrb[0].mxu0
        %v1188 = vpop.f32.mrb[0].mxu0
        %1189 = vdwg.mxu0
        %v1190 = vpack.c.bf16 %v1185, %v1185
        %v1191 = vld [vmem:[%s12] sm:$0xf]
        %v1192 = vld [vmem:[%s12 + $0x4] sm:$0xf]
        %v1195 = vunpack.c.l.b16 %v1191
        %v1196 = vunpack.c.l.b16 %v1192
        %v1197 = vpack.c.b16 %v1196, %v1195
        %v1200 = vsel %vm1080, %v1190, 0
        %1202 = vmatprep.subr.bf16.mxu0 0
        %1203 = vmatpush1.bf16.msra.mxu0 %v1197
        %1204 = vmatprep.subr.bf16.mxu0 0
        %1205 = vmatpush1.bf16.msra.mxu0 0
        %1206 = vmatprep.subr.bf16.mxu0 0
        %1207 = vmatpush1.bf16.msra.mxu0 0
        %1208 = vmatprep.subr.bf16.mxu0 0
        %1209 = vmatpush1.bf16.msra.mxu0 0
        %1210 = vmatprep.subr.bf16.mxu0 0
        %1211 = vmatpush1.bf16.msra.mxu0 0
        %1212 = vmatprep.subr.bf16.mxu0 0
        %1213 = vmatpush1.bf16.msra.mxu0 0
        %1214 = vmatprep.subr.bf16.mxu0 0
        %1215 = vmatpush1.bf16.msra.mxu0 0
        %1216 = vmatprep.subr.bf16.mxu0 0
        %1217 = vmatpush1.bf16.msra.mxu0 0
        %1218 = vmatprep.subr.bf16.mxu0 0
        %1219 = vmatpush1.bf16.msra.mxu0 0
        %1220 = vmatprep.subr.bf16.mxu0 0
        %1221 = vmatpush1.bf16.msra.mxu0 0
        %1222 = vmatprep.subr.bf16.mxu0 0
        %1223 = vmatpush1.bf16.msra.mxu0 0
        %1224 = vmatprep.subr.bf16.mxu0 0
        %1225 = vmatpush1.bf16.msra.mxu0 0
        %1226 = vmatprep.subr.bf16.mxu0 0
        %1227 = vmatpush1.bf16.msra.mxu0 0
        %1228 = vmatprep.subr.bf16.mxu0 0
        %1229 = vmatpush1.bf16.msra.mxu0 0
        %1230 = vmatprep.subr.bf16.mxu0 0
        %1231 = vmatpush1.bf16.msra.mxu0 0
        %1232 = vmatprep.subr.bf16.mxu0 0
        %1233 = vmatpush1.bf16.msra.mxu0 0
        %1234 = vmatprep.mubr.bf16.mxu0 0
        %1235 = vmatmul.mubr.bf16.gmra.mrb[0].mxu0 %v1200
        %v1236 = vpop.f32.mrb[0].mxu0
        %v1237 = vadd.f32 0.0, %v1236
        %v1238 = vpop.f32.mrb[0].mxu0
        %v1239 = vpop.f32.mrb[0].mxu0
        %v1240 = vpop.f32.mrb[0].mxu0
        %1241 = vdwg.mxu0
        %v1243 = vlaneseq
        %v1244 = vshrl.u32 %v1243, 7
        %v1245 = vsub.s32 0, %v1244
        %v1246 = vrot.slane %v884, %v1245
        %v1248 = vadd.f32 %v1246, %v1237
        %s1249 = scalar_lea.vmem %s6, 16
        %v1250 = vld [vmem:[%s1249] sm:$0xf]
        %v1251 = vld [vmem:[%s1249 + $0x4] sm:$0xf]
        %v1252 = vld [vmem:[%s1249 + $0x8] sm:$0xf]
        %v1253 = vld [vmem:[%s1249 + $0xc] sm:$0xf]
        %s1254 = scalar_lea.vmem %s7, 1
        %v1255 = vld [vmem:[%s1254] sm:$0x1]
        %v1257 = vlaneseq
        %v1258 = vshrl.u32 %v1257, 7
        %v1259 = vsub.s32 0, %v1258
        %v1260 = vrot.slane %v1255, %v1259
        %v1266 = vunpack.c.l.b16 %v1250
        %v1267 = vunpack.c.l.b16 %v1251
        %v1268 = vunpack.c.l.b16 %v1252
        %v1269 = vunpack.c.l.b16 %v1253
        %v1270 = vpack.c.b16 %v1267, %v1266
        %v1271 = vpack.c.b16 %v1269, %v1268
        %1274 = vmatprep.subr.bf16.mxu0 0
        %1275 = vmatpush1.bf16.msra.mxu0 %v1270
        %1276 = vmatprep.subr.bf16.mxu0 0
        %1277 = vmatpush1.bf16.msra.mxu0 %v1271
        %1278 = vmatprep.subr.bf16.mxu0 0
        %1279 = vmatpush1.bf16.msra.mxu0 0
        %1280 = vmatprep.subr.bf16.mxu0 0
        %1281 = vmatpush1.bf16.msra.mxu0 0
        %1282 = vmatprep.subr.bf16.mxu0 0
        %1283 = vmatpush1.bf16.msra.mxu0 0
        %1284 = vmatprep.subr.bf16.mxu0 0
        %1285 = vmatpush1.bf16.msra.mxu0 0
        %1286 = vmatprep.subr.bf16.mxu0 0
        %1287 = vmatpush1.bf16.msra.mxu0 0
        %1288 = vmatprep.subr.bf16.mxu0 0
        %1289 = vmatpush1.bf16.msra.mxu0 0
        %1290 = vmatprep.subr.bf16.mxu0 0
        %1291 = vmatpush1.bf16.msra.mxu0 0
        %1292 = vmatprep.subr.bf16.mxu0 0
        %1293 = vmatpush1.bf16.msra.mxu0 0
        %1294 = vmatprep.subr.bf16.mxu0 0
        %1295 = vmatpush1.bf16.msra.mxu0 0
        %1296 = vmatprep.subr.bf16.mxu0 0
        %1297 = vmatpush1.bf16.msra.mxu0 0
        %1298 = vmatprep.subr.bf16.mxu0 0
        %1299 = vmatpush1.bf16.msra.mxu0 0
        %1300 = vmatprep.subr.bf16.mxu0 0
        %1301 = vmatpush1.bf16.msra.mxu0 0
        %1302 = vmatprep.subr.bf16.mxu0 0
        %1303 = vmatpush1.bf16.msra.mxu0 0
        %1304 = vmatprep.subr.bf16.mxu0 0
        %1305 = vmatpush1.bf16.msra.mxu0 0
        %1306 = vmatprep.mubr.bf16.mxu0 0
        %1307 = vmatmul.mubr.bf16.gmra.mrb[0].mxu0 %v910
        %v1308 = vpop.f32.mrb[0].mxu0
        %v1309 = vadd.f32 %v1260, %v1308
        %v1310 = vpop.f32.mrb[0].mxu0
        %v1311 = vpop.f32.mrb[0].mxu0
        %v1312 = vpop.f32.mrb[0].mxu0
        %1313 = vdwg.mxu0
        %s1314 = scalar_lea.vmem %s8, 16
        %v1315 = vld [vmem:[%s1314] sm:$0xf]
        %v1316 = vld [vmem:[%s1314 + $0x4] sm:$0xf]
        %v1317 = vld [vmem:[%s1314 + $0x8] sm:$0xf]
        %v1318 = vld [vmem:[%s1314 + $0xc] sm:$0xf]
        %s1319 = scalar_lea.vmem %s9, 1
        %v1320 = vld [vmem:[%s1319] sm:$0x1]
        %v1322 = vlaneseq
        %v1323 = vshrl.u32 %v1322, 7
        %v1324 = vsub.s32 0, %v1323
        %v1325 = vrot.slane %v1320, %v1324
        %v1331 = vunpack.c.l.b16 %v1315
        %v1332 = vunpack.c.l.b16 %v1316
        %v1333 = vunpack.c.l.b16 %v1317
        %v1334 = vunpack.c.l.b16 %v1318
        %v1335 = vpack.c.b16 %v1332, %v1331
        %v1336 = vpack.c.b16 %v1334, %v1333
        %1339 = vmatprep.subr.bf16.mxu0 0
        %1340 = vmatpush1.bf16.msra.mxu0 %v1335
        %1341 = vmatprep.subr.bf16.mxu0 0
        %1342 = vmatpush1.bf16.msra.mxu0 %v1336
        %1343 = vmatprep.subr.bf16.mxu0 0
        %1344 = vmatpush1.bf16.msra.mxu0 0
        %1345 = vmatprep.subr.bf16.mxu0 0
        %1346 = vmatpush1.bf16.msra.mxu0 0
        %1347 = vmatprep.subr.bf16.mxu0 0
        %1348 = vmatpush1.bf16.msra.mxu0 0
        %1349 = vmatprep.subr.bf16.mxu0 0
        %1350 = vmatpush1.bf16.msra.mxu0 0
        %1351 = vmatprep.subr.bf16.mxu0 0
        %1352 = vmatpush1.bf16.msra.mxu0 0
        %1353 = vmatprep.subr.bf16.mxu0 0
        %1354 = vmatpush1.bf16.msra.mxu0 0
        %1355 = vmatprep.subr.bf16.mxu0 0
        %1356 = vmatpush1.bf16.msra.mxu0 0
        %1357 = vmatprep.subr.bf16.mxu0 0
        %1358 = vmatpush1.bf16.msra.mxu0 0
        %1359 = vmatprep.subr.bf16.mxu0 0
        %1360 = vmatpush1.bf16.msra.mxu0 0
        %1361 = vmatprep.subr.bf16.mxu0 0
        %1362 = vmatpush1.bf16.msra.mxu0 0
        %1363 = vmatprep.subr.bf16.mxu0 0
        %1364 = vmatpush1.bf16.msra.mxu0 0
        %1365 = vmatprep.subr.bf16.mxu0 0
        %1366 = vmatpush1.bf16.msra.mxu0 0
        %1367 = vmatprep.subr.bf16.mxu0 0
        %1368 = vmatpush1.bf16.msra.mxu0 0
        %1369 = vmatprep.subr.bf16.mxu0 0
        %1370 = vmatpush1.bf16.msra.mxu0 0
        %1371 = vmatprep.mubr.bf16.mxu0 0
        %1372 = vmatmul.mubr.bf16.gmra.mrb[0].mxu0 %v910
        %v1373 = vpop.f32.mrb[0].mxu0
        %v1374 = vadd.f32 %v1325, %v1373
        %v1375 = vpop.f32.mrb[0].mxu0
        %v1376 = vpop.f32.mrb[0].mxu0
        %v1377 = vpop.f32.mrb[0].mxu0
        %1378 = vdwg.mxu0
        %s1379 = scalar_lea.vmem %s10, 16
        %v1380 = vld [vmem:[%s1379] sm:$0xf]
        %v1381 = vld [vmem:[%s1379 + $0x4] sm:$0xf]
        %v1382 = vld [vmem:[%s1379 + $0x8] sm:$0xf]
        %v1383 = vld [vmem:[%s1379 + $0xc] sm:$0xf]
        %s1384 = scalar_lea.vmem %s11, 1
        %v1385 = vld [vmem:[%s1384] sm:$0x1]
        %v1387 = vlaneseq
        %v1388 = vshrl.u32 %v1387, 7
        %v1389 = vsub.s32 0, %v1388
        %v1390 = vrot.slane %v1385, %v1389
        %v1396 = vunpack.c.l.b16 %v1380
        %v1397 = vunpack.c.l.b16 %v1381
        %v1398 = vunpack.c.l.b16 %v1382
        %v1399 = vunpack.c.l.b16 %v1383
        %v1400 = vpack.c.b16 %v1397, %v1396
        %v1401 = vpack.c.b16 %v1399, %v1398
        %1404 = vmatprep.subr.bf16.mxu0 0
        %1405 = vmatpush1.bf16.msra.mxu0 %v1400
        %1406 = vmatprep.subr.bf16.mxu0 0
        %1407 = vmatpush1.bf16.msra.mxu0 %v1401
        %1408 = vmatprep.subr.bf16.mxu0 0
        %1409 = vmatpush1.bf16.msra.mxu0 0
        %1410 = vmatprep.subr.bf16.mxu0 0
        %1411 = vmatpush1.bf16.msra.mxu0 0
        %1412 = vmatprep.subr.bf16.mxu0 0
        %1413 = vmatpush1.bf16.msra.mxu0 0
        %1414 = vmatprep.subr.bf16.mxu0 0
        %1415 = vmatpush1.bf16.msra.mxu0 0
        %1416 = vmatprep.subr.bf16.mxu0 0
        %1417 = vmatpush1.bf16.msra.mxu0 0
        %1418 = vmatprep.subr.bf16.mxu0 0
        %1419 = vmatpush1.bf16.msra.mxu0 0
        %1420 = vmatprep.subr.bf16.mxu0 0
        %1421 = vmatpush1.bf16.msra.mxu0 0
        %1422 = vmatprep.subr.bf16.mxu0 0
        %1423 = vmatpush1.bf16.msra.mxu0 0
        %1424 = vmatprep.subr.bf16.mxu0 0
        %1425 = vmatpush1.bf16.msra.mxu0 0
        %1426 = vmatprep.subr.bf16.mxu0 0
        %1427 = vmatpush1.bf16.msra.mxu0 0
        %1428 = vmatprep.subr.bf16.mxu0 0
        %1429 = vmatpush1.bf16.msra.mxu0 0
        %1430 = vmatprep.subr.bf16.mxu0 0
        %1431 = vmatpush1.bf16.msra.mxu0 0
        %1432 = vmatprep.subr.bf16.mxu0 0
        %1433 = vmatpush1.bf16.msra.mxu0 0
        %1434 = vmatprep.subr.bf16.mxu0 0
        %1435 = vmatpush1.bf16.msra.mxu0 0
        %1436 = vmatprep.mubr.bf16.mxu0 0
        %1437 = vmatmul.mubr.bf16.gmra.mrb[0].mxu0 %v910
        %v1438 = vpop.f32.mrb[0].mxu0
        %v1439 = vadd.f32 %v1390, %v1438
        %v1440 = vpop.f32.mrb[0].mxu0
        %v1441 = vpop.f32.mrb[0].mxu0
        %v1442 = vpop.f32.mrb[0].mxu0
        %1443 = vdwg.mxu0
        %v1444 = vpack.c.bf16 %v1309, %v1309
        %v1445 = vpack.c.bf16 %v1374, %v1374
        %v1447 = vsel %vm1080, %v1444, 0
        %v1450 = vsel %vm1080, %v1445, 0
        %1452 = vmatprep.subr.bf16.mxu0 0
        %1453 = vmatpush1.bf16.xpose.msra.mxu0 %v1450
        %1454 = vmatprep.subr.bf16.mxu0 0
        %1455 = vmatpush1.bf16.xpose.msra.mxu0 0
        %1456 = vmatprep.subr.bf16.mxu0 0
        %1457 = vmatpush1.bf16.xpose.msra.mxu0 0
        %1458 = vmatprep.subr.bf16.mxu0 0
        %1459 = vmatpush1.bf16.xpose.msra.mxu0 0
        %1460 = vmatprep.subr.bf16.mxu0 0
        %1461 = vmatpush1.bf16.xpose.msra.mxu0 0
        %1462 = vmatprep.subr.bf16.mxu0 0
        %1463 = vmatpush1.bf16.xpose.msra.mxu0 0
        %1464 = vmatprep.subr.bf16.mxu0 0
        %1465 = vmatpush1.bf16.xpose.msra.mxu0 0
        %1466 = vmatprep.subr.bf16.mxu0 0
        %1467 = vmatpush1.bf16.xpose.msra.mxu0 0
        %1468 = vmatprep.subr.bf16.mxu0 0
        %1469 = vmatpush1.bf16.xpose.msra.mxu0 0
        %1470 = vmatprep.subr.bf16.mxu0 0
        %1471 = vmatpush1.bf16.xpose.msra.mxu0 0
        %1472 = vmatprep.subr.bf16.mxu0 0
        %1473 = vmatpush1.bf16.xpose.msra.mxu0 0
        %1474 = vmatprep.subr.bf16.mxu0 0
        %1475 = vmatpush1.bf16.xpose.msra.mxu0 0
        %1476 = vmatprep.subr.bf16.mxu0 0
        %1477 = vmatpush1.bf16.xpose.msra.mxu0 0
        %1478 = vmatprep.subr.bf16.mxu0 0
        %1479 = vmatpush1.bf16.xpose.msra.mxu0 0
        %1480 = vmatprep.subr.bf16.mxu0 0
        %1481 = vmatpush1.bf16.xpose.msra.mxu0 0
        %1482 = vmatprep.subr.bf16.mxu0 0
        %1483 = vmatpush1.bf16.xpose.msra.mxu0 0
        %1484 = vmatprep.mubr.bf16.mxu0 0
        %1485 = vmatmul.mubr.bf16.gmra.mrb[0].mxu0 %v1447
        %v1486 = vpop.f32.mrb[0].mxu0
        %v1487 = vadd.f32 0.0, %v1486
        %v1488 = vpop.f32.mrb[0].mxu0
        %v1489 = vpop.f32.mrb[0].mxu0
        %v1490 = vpop.f32.mrb[0].mxu0
        %1491 = vdwg.mxu0
        %v1492 = vmul.f32 %v1487, 0.25
        %v1493 = vadd.f32 %v1492, %v855
        %v1494 = vsel %vm1129, %v1493, -inf
        %1495 = vmax.xlane.f32.xlu0 %v1494
        %v1496 = vpop.xlane.xlu0 %1495
        %v1497 = vsub.f32 %v1493, %v1496
        %v1498 = vmul.f32 %v1497, 1.442695
        %v1499 = vpow.pop %v1498
        %v1500 = vsel %vm1129, %v1499, 0.0
        %1501 = vadd.xlane.f32.xlu0 %v1500
        %v1502 = vpop.xlane.xlu0 %1501
        %v1503 = vrcp.pop %v1502
        %v1504 = vmul.f32 %v1499, %v1503
        %v1505 = vpack.c.bf16 %v1504, %v1504
        %v1506 = vpack.c.bf16 %v1439, %v1439
        %v1508 = vsel %vm1129, %v1505, 0
        %v1511 = vsel %vm1146, %v1506, 0
        %1513 = vmatprep.subr.bf16.mxu0 0
        %1514 = vmatpush1.bf16.msra.mxu0 %v1511
        %1515 = vmatprep.subr.bf16.mxu0 0
        %1516 = vmatpush1.bf16.msra.mxu0 0
        %1517 = vmatprep.subr.bf16.mxu0 0
        %1518 = vmatpush1.bf16.msra.mxu0 0
        %1519 = vmatprep.subr.bf16.mxu0 0
        %1520 = vmatpush1.bf16.msra.mxu0 0
        %1521 = vmatprep.subr.bf16.mxu0 0
        %1522 = vmatpush1.bf16.msra.mxu0 0
        %1523 = vmatprep.subr.bf16.mxu0 0
        %1524 = vmatpush1.bf16.msra.mxu0 0
        %1525 = vmatprep.subr.bf16.mxu0 0
        %1526 = vmatpush1.bf16.msra.mxu0 0
        %1527 = vmatprep.subr.bf16.mxu0 0
        %1528 = vmatpush1.bf16.msra.mxu0 0
        %1529 = vmatprep.subr.bf16.mxu0 0
        %1530 = vmatpush1.bf16.msra.mxu0 0
        %1531 = vmatprep.subr.bf16.mxu0 0
        %1532 = vmatpush1.bf16.msra.mxu0 0
        %1533 = vmatprep.subr.bf16.mxu0 0
        %1534 = vmatpush1.bf16.msra.mxu0 0
        %1535 = vmatprep.subr.bf16.mxu0 0
        %1536 = vmatpush1.bf16.msra.mxu0 0
        %1537 = vmatprep.subr.bf16.mxu0 0
        %1538 = vmatpush1.bf16.msra.mxu0 0
        %1539 = vmatprep.subr.bf16.mxu0 0
        %1540 = vmatpush1.bf16.msra.mxu0 0
        %1541 = vmatprep.subr.bf16.mxu0 0
        %1542 = vmatpush1.bf16.msra.mxu0 0
        %1543 = vmatprep.subr.bf16.mxu0 0
        %1544 = vmatpush1.bf16.msra.mxu0 0
        %1545 = vmatprep.mubr.bf16.mxu0 0
        %1546 = vmatmul.mubr.bf16.gmra.mrb[0].mxu0 %v1508
        %v1547 = vpop.f32.mrb[0].mxu0
        %v1548 = vadd.f32 0.0, %v1547
        %v1549 = vpop.f32.mrb[0].mxu0
        %v1550 = vpop.f32.mrb[0].mxu0
        %v1551 = vpop.f32.mrb[0].mxu0
        %1552 = vdwg.mxu0
        %v1553 = vpack.c.bf16 %v1548, %v1548
        %s1554 = scalar_lea.vmem %s12, 8
        %v1555 = vld [vmem:[%s1554] sm:$0xf]
        %v1556 = vld [vmem:[%s1554 + $0x4] sm:$0xf]
        %v1559 = vunpack.c.l.b16 %v1555
        %v1560 = vunpack.c.l.b16 %v1556
        %v1561 = vpack.c.b16 %v1560, %v1559
        %v1564 = vsel %vm1080, %v1553, 0
        %1566 = vmatprep.subr.bf16.mxu0 0
        %1567 = vmatpush1.bf16.msra.mxu0 %v1561
        %1568 = vmatprep.subr.bf16.mxu0 0
        %1569 = vmatpush1.bf16.msra.mxu0 0
        %1570 = vmatprep.subr.bf16.mxu0 0
        %1571 = vmatpush1.bf16.msra.mxu0 0
        %1572 = vmatprep.subr.bf16.mxu0 0
        %1573 = vmatpush1.bf16.msra.mxu0 0
        %1574 = vmatprep.subr.bf16.mxu0 0
        %1575 = vmatpush1.bf16.msra.mxu0 0
        %1576 = vmatprep.subr.bf16.mxu0 0
        %1577 = vmatpush1.bf16.msra.mxu0 0
        %1578 = vmatprep.subr.bf16.mxu0 0
        %1579 = vmatpush1.bf16.msra.mxu0 0
        %1580 = vmatprep.subr.bf16.mxu0 0
        %1581 = vmatpush1.bf16.msra.mxu0 0
        %1582 = vmatprep.subr.bf16.mxu0 0
        %1583 = vmatpush1.bf16.msra.mxu0 0
        %1584 = vmatprep.subr.bf16.mxu0 0
        %1585 = vmatpush1.bf16.msra.mxu0 0
        %1586 = vmatprep.subr.bf16.mxu0 0
        %1587 = vmatpush1.bf16.msra.mxu0 0
        %1588 = vmatprep.subr.bf16.mxu0 0
        %1589 = vmatpush1.bf16.msra.mxu0 0
        %1590 = vmatprep.subr.bf16.mxu0 0
        %1591 = vmatpush1.bf16.msra.mxu0 0
        %1592 = vmatprep.subr.bf16.mxu0 0
        %1593 = vmatpush1.bf16.msra.mxu0 0
        %1594 = vmatprep.subr.bf16.mxu0 0
        %1595 = vmatpush1.bf16.msra.mxu0 0
        %1596 = vmatprep.subr.bf16.mxu0 0
        %1597 = vmatpush1.bf16.msra.mxu0 0
        %1598 = vmatprep.mubr.bf16.mxu0 0
        %1599 = vmatmul.mubr.bf16.gmra.mrb[0].mxu0 %v1564
        %v1600 = vpop.f32.mrb[0].mxu0
        %v1601 = vadd.f32 0.0, %v1600
        %v1602 = vpop.f32.mrb[0].mxu0
        %v1603 = vpop.f32.mrb[0].mxu0
        %v1604 = vpop.f32.mrb[0].mxu0
        %1605 = vdwg.mxu0
        %v1606 = vadd.f32 %v1248, %v1601
        %v1607 = vadd.f32 %v1606, %v883
        %v1608 = vld [vmem:[%s14] sm:$0x3]
        %v1609 = vsel %vm859, %v1607, 0.0
        %1610 = vadd.xlane.f32.xlu0 %v1609
        %v1611 = vpop.xlane.xlu0 %1610
        %v1612 = vmul.f32 %v1611, %v863
        %v1613 = vsub.f32 %v1607, %v1612
        %v1614 = vmul.f32 %v1613, %v1613
        %v1615 = vsel %vm859, %v1614, 0.0
        %1616 = vadd.xlane.f32.xlu0 %v1615
        %v1617 = vpop.xlane.xlu0 %1616
        %v1618 = vmul.f32 %v1617, %v863
        %v1619 = vadd.f32 %v1618, 1e-12
        %v1620 = vrsqrt.pop %v1619
        %v1621 = vmul.f32 %v1613, %v1620
        %v1622 = vlaneseq
        %v1623 = vshrl.u32 %v1622, 7
        %v1624 = vsub.s32 0, %v1623
        %v1625 = vrot.slane %v1608, %v1624
        %v1626 = vmul.f32 %v1621, %v1625
        %v1627 = vlaneseq
        %v1628 = vshrl.u32 %v1627, 7
        %v1629 = vsub.s32 1, %v1628
        %v1630 = vrot.slane %v1608, %v1629
        %v1631 = vadd.f32 %v1626, %v1630
        %v1632 = vld [vmem:[%s15] sm:$0xf]
        %v1633 = vld [vmem:[%s15 + $0x4] sm:$0xf]
        %v1634 = vld [vmem:[%s15 + $0x8] sm:$0xf]
        %v1635 = vld [vmem:[%s15 + $0xc] sm:$0xf]
        %v1636 = vpack.c.bf16 %v1631, %v1631
        %v1637 = vld [vmem:[%s16] sm:$0x1]
        %v1639 = vlaneseq
        %v1640 = vshrl.u32 %v1639, 7
        %v1641 = vsub.s32 0, %v1640
        %v1642 = vrot.slane %v1637, %v1641
        %v1648 = vunpack.c.l.b16 %v1632
        %v1649 = vunpack.c.l.b16 %v1633
        %v1650 = vunpack.c.l.b16 %v1634
        %v1651 = vunpack.c.l.b16 %v1635
        %v1652 = vpack.c.b16 %v1649, %v1648
        %v1653 = vpack.c.b16 %v1651, %v1650
        %v1657 = vsel %vm859, %v1636, 0
        %1659 = vmatprep.subr.bf16.mxu0 0
        %1660 = vmatpush1.bf16.msra.mxu0 %v1652
        %1661 = vmatprep.subr.bf16.mxu0 0
        %1662 = vmatpush1.bf16.msra.mxu0 %v1653
        %1663 = vmatprep.subr.bf16.mxu0 0
        %1664 = vmatpush1.bf16.msra.mxu0 0
        %1665 = vmatprep.subr.bf16.mxu0 0
        %1666 = vmatpush1.bf16.msra.mxu0 0
        %1667 = vmatprep.subr.bf16.mxu0 0
        %1668 = vmatpush1.bf16.msra.mxu0 0
        %1669 = vmatprep.subr.bf16.mxu0 0
        %1670 = vmatpush1.bf16.msra.mxu0 0
        %1671 = vmatprep.subr.bf16.mxu0 0
        %1672 = vmatpush1.bf16.msra.mxu0 0
        %1673 = vmatprep.subr.bf16.mxu0 0
        %1674 = vmatpush1.bf16.msra.mxu0 0
        %1675 = vmatprep.subr.bf16.mxu0 0
        %1676 = vmatpush1.bf16.msra.mxu0 0
        %1677 = vmatprep.subr.bf16.mxu0 0
        %1678 = vmatpush1.bf16.msra.mxu0 0
        %1679 = vmatprep.subr.bf16.mxu0 0
        %1680 = vmatpush1.bf16.msra.mxu0 0
        %1681 = vmatprep.subr.bf16.mxu0 0
        %1682 = vmatpush1.bf16.msra.mxu0 0
        %1683 = vmatprep.subr.bf16.mxu0 0
        %1684 = vmatpush1.bf16.msra.mxu0 0
        %1685 = vmatprep.subr.bf16.mxu0 0
        %1686 = vmatpush1.bf16.msra.mxu0 0
        %1687 = vmatprep.subr.bf16.mxu0 0
        %1688 = vmatpush1.bf16.msra.mxu0 0
        %1689 = vmatprep.subr.bf16.mxu0 0
        %1690 = vmatpush1.bf16.msra.mxu0 0
        %1691 = vmatprep.mubr.bf16.mxu0 0
        %1692 = vmatmul.mubr.bf16.gmra.mrb[0].mxu0 %v1657
        %v1693 = vpop.f32.mrb[0].mxu0
        %v1694 = vadd.f32 %v1642, %v1693
        %v1695 = vpop.f32.mrb[0].mxu0
        %v1696 = vpop.f32.mrb[0].mxu0
        %v1697 = vpop.f32.mrb[0].mxu0
        %1698 = vdwg.mxu0
        %v1699 = vmul.f32 %v1694, 0.70710677
        %vm1700 = vcmp.ge.f32.partialorder %v1699, 0.0
        %v1701 = vsel %vm1700, 1.0, -1.0
        %v1702 = vand.u32 2147483647, %v1699
        %v1703 = vmul.f32 %v1702, 0.3275911
        %v1704 = vadd.f32 %v1703, 1.0
        %v1705 = vrcp.pop %v1704
        %v1706 = vmul.f32 %v1704, %v1705
        %v1707 = vsub.f32 2.0, %v1706
        %v1708 = vmul.f32 %v1705, %v1707
        %v1709 = vmul.f32 %v1708, 1.0614054
        %v1710 = vadd.f32 %v1709, -1.4531521
        %v1711 = vmul.f32 %v1708, %v1710
        %v1712 = vadd.f32 %v1711, 1.4214138
        %v1713 = vmul.f32 %v1708, %v1712
        %v1714 = vadd.f32 %v1713, -0.28449672
        %v1715 = vmul.f32 %v1708, %v1714
        %v1716 = vadd.f32 %v1715, 0.2548296
        %v1717 = vmul.f32 %v1708, %v1716
        %v1718 = vsub.f32 0.0, %v1702
        %v1719 = vmul.f32 %v1718, %v1702
        %v1720 = vmul.f32 %v1719, 1.442695
        %v1721 = vpow.pop %v1720
        %v1722 = vmul.f32 %v1717, %v1721
        %v1723 = vsub.f32 1.0, %v1722
        %v1724 = vmul.f32 %v1701, %v1723
        %v1725 = vmul.f32 %v1694, 0.5
        %v1726 = vadd.f32 %v1724, 1.0
        %v1727 = vmul.f32 %v1725, %v1726
        %v1728 = vld [vmem:[%s17] sm:$0xf]
        %v1729 = vld [vmem:[%s17 + $0x4] sm:$0xf]
        %v1730 = vld [vmem:[%s17 + $0x8] sm:$0xf]
        %v1731 = vld [vmem:[%s17 + $0xc] sm:$0xf]
        %v1732 = vld [vmem:[%s17 + $0x10] sm:$0xf]
        %v1733 = vld [vmem:[%s17 + $0x14] sm:$0xf]
        %v1734 = vld [vmem:[%s17 + $0x18] sm:$0xf]
        %v1735 = vld [vmem:[%s17 + $0x1c] sm:$0xf]
        %v1736 = vld [vmem:[%s17 + $0x20] sm:$0xf]
        %v1737 = vld [vmem:[%s17 + $0x24] sm:$0xf]
        %v1738 = vld [vmem:[%s17 + $0x28] sm:$0xf]
        %v1739 = vld [vmem:[%s17 + $0x2c] sm:$0xf]
        %v1740 = vld [vmem:[%s17 + $0x30] sm:$0xf]
        %v1741 = vld [vmem:[%s17 + $0x34] sm:$0xf]
        %v1742 = vld [vmem:[%s17 + $0x38] sm:$0xf]
        %v1743 = vld [vmem:[%s17 + $0x3c] sm:$0xf]
        %v1744 = vpack.c.bf16 %v1727, %v1727
        %v1745 = vld [vmem:[%s18] sm:$0x1]
        %v1747 = vlaneseq
        %v1748 = vshrl.u32 %v1747, 7
        %v1749 = vsub.s32 0, %v1748
        %v1750 = vrot.slane %v1745, %v1749
        %v1768 = vunpack.c.l.b16 %v1728
        %v1769 = vunpack.c.l.b16 %v1729
        %v1770 = vunpack.c.l.b16 %v1730
        %v1771 = vunpack.c.l.b16 %v1731
        %v1772 = vunpack.c.l.b16 %v1732
        %v1773 = vunpack.c.l.b16 %v1733
        %v1774 = vunpack.c.l.b16 %v1734
        %v1775 = vunpack.c.l.b16 %v1735
        %v1776 = vunpack.c.l.b16 %v1736
        %v1777 = vunpack.c.l.b16 %v1737
        %v1778 = vunpack.c.l.b16 %v1738
        %v1779 = vunpack.c.l.b16 %v1739
        %v1780 = vunpack.c.l.b16 %v1740
        %v1781 = vunpack.c.l.b16 %v1741
        %v1782 = vunpack.c.l.b16 %v1742
        %v1783 = vunpack.c.l.b16 %v1743
        %v1784 = vpack.c.b16 %v1769, %v1768
        %v1785 = vpack.c.b16 %v1771, %v1770
        %v1786 = vpack.c.b16 %v1773, %v1772
        %v1787 = vpack.c.b16 %v1775, %v1774
        %v1788 = vpack.c.b16 %v1777, %v1776
        %v1789 = vpack.c.b16 %v1779, %v1778
        %v1790 = vpack.c.b16 %v1781, %v1780
        %v1791 = vpack.c.b16 %v1783, %v1782
        %1800 = vmatprep.subr.bf16.mxu0 0
        %1801 = vmatpush1.bf16.msra.mxu0 %v1784
        %1802 = vmatprep.subr.bf16.mxu0 0
        %1803 = vmatpush1.bf16.msra.mxu0 %v1785
        %1804 = vmatprep.subr.bf16.mxu0 0
        %1805 = vmatpush1.bf16.msra.mxu0 %v1786
        %1806 = vmatprep.subr.bf16.mxu0 0
        %1807 = vmatpush1.bf16.msra.mxu0 %v1787
        %1808 = vmatprep.subr.bf16.mxu0 0
        %1809 = vmatpush1.bf16.msra.mxu0 %v1788
        %1810 = vmatprep.subr.bf16.mxu0 0
        %1811 = vmatpush1.bf16.msra.mxu0 %v1789
        %1812 = vmatprep.subr.bf16.mxu0 0
        %1813 = vmatpush1.bf16.msra.mxu0 %v1790
        %1814 = vmatprep.subr.bf16.mxu0 0
        %1815 = vmatpush1.bf16.msra.mxu0 %v1791
        %1816 = vmatprep.subr.bf16.mxu0 0
        %1817 = vmatpush1.bf16.msra.mxu0 0
        %1818 = vmatprep.subr.bf16.mxu0 0
        %1819 = vmatpush1.bf16.msra.mxu0 0
        %1820 = vmatprep.subr.bf16.mxu0 0
        %1821 = vmatpush1.bf16.msra.mxu0 0
        %1822 = vmatprep.subr.bf16.mxu0 0
        %1823 = vmatpush1.bf16.msra.mxu0 0
        %1824 = vmatprep.subr.bf16.mxu0 0
        %1825 = vmatpush1.bf16.msra.mxu0 0
        %1826 = vmatprep.subr.bf16.mxu0 0
        %1827 = vmatpush1.bf16.msra.mxu0 0
        %1828 = vmatprep.subr.bf16.mxu0 0
        %1829 = vmatpush1.bf16.msra.mxu0 0
        %1830 = vmatprep.subr.bf16.mxu0 0
        %1831 = vmatpush1.bf16.msra.mxu0 0
        %1832 = vmatprep.mubr.bf16.mxu0 0
        %1833 = vmatmul.mubr.bf16.gmra.mrb[0].mxu0 %v1744
        %v1834 = vpop.f32.mrb[0].mxu0
        %v1835 = vadd.f32 %v1750, %v1834
        %v1836 = vpop.f32.mrb[0].mxu0
        %v1837 = vpop.f32.mrb[0].mxu0
        %v1838 = vpop.f32.mrb[0].mxu0
        %1839 = vdwg.mxu0
        %v1840 = vadd.f32 %v1835, %v1631
        %v1841 = vld [vmem:[%s19] sm:$0x3]
        %v1842 = vsel %vm859, %v1840, 0.0
        %1843 = vadd.xlane.f32.xlu0 %v1842
        %v1844 = vpop.xlane.xlu0 %1843
        %v1845 = vmul.f32 %v1844, %v863
        %v1846 = vsub.f32 %v1840, %v1845
        %v1847 = vmul.f32 %v1846, %v1846
        %v1848 = vsel %vm859, %v1847, 0.0
        %1849 = vadd.xlane.f32.xlu0 %v1848
        %v1850 = vpop.xlane.xlu0 %1849
        %v1851 = vmul.f32 %v1850, %v863
        %v1852 = vadd.f32 %v1851, 1e-12
        %v1853 = vrsqrt.pop %v1852
        %v1854 = vmul.f32 %v1846, %v1853
        %v1855 = vlaneseq
        %v1856 = vshrl.u32 %v1855, 7
        %v1857 = vsub.s32 0, %v1856
        %v1858 = vrot.slane %v1841, %v1857
        %v1859 = vmul.f32 %v1854, %v1858
        %v1860 = vlaneseq
        %v1861 = vshrl.u32 %v1860, 7
        %v1862 = vsub.s32 1, %v1861
        %v1863 = vrot.slane %v1841, %v1862
        %v1864 = vadd.f32 %v1859, %v1863
        %s1865 = scalar_lea.vmem %s13, 1
        %v1866 = vld [vmem:[%s1865] sm:$0x1]
        %s1867 = scalar_lea.vmem %s6, 32
        %v1868 = vld [vmem:[%s1867] sm:$0xf]
        %v1869 = vld [vmem:[%s1867 + $0x4] sm:$0xf]
        %v1870 = vld [vmem:[%s1867 + $0x8] sm:$0xf]
        %v1871 = vld [vmem:[%s1867 + $0xc] sm:$0xf]
        %v1872 = vpack.c.bf16 %v1864, %v1864
        %s1873 = scalar_lea.vmem %s7, 2
        %v1874 = vld [vmem:[%s1873] sm:$0x1]
        %v1876 = vlaneseq
        %v1877 = vshrl.u32 %v1876, 7
        %v1878 = vsub.s32 0, %v1877
        %v1879 = vrot.slane %v1874, %v1878
        %v1885 = vunpack.c.l.b16 %v1868
        %v1886 = vunpack.c.l.b16 %v1869
        %v1887 = vunpack.c.l.b16 %v1870
        %v1888 = vunpack.c.l.b16 %v1871
        %v1889 = vpack.c.b16 %v1886, %v1885
        %v1890 = vpack.c.b16 %v1888, %v1887
        %v1894 = vsel %vm859, %v1872, 0
        %1896 = vmatprep.subr.bf16.mxu0 0
        %1897 = vmatpush1.bf16.msra.mxu0 %v1889
        %1898 = vmatprep.subr.bf16.mxu0 0
        %1899 = vmatpush1.bf16.msra.mxu0 %v1890
        %1900 = vmatprep.subr.bf16.mxu0 0
        %1901 = vmatpush1.bf16.msra.mxu0 0
        %1902 = vmatprep.subr.bf16.mxu0 0
        %1903 = vmatpush1.bf16.msra.mxu0 0
        %1904 = vmatprep.subr.bf16.mxu0 0
        %1905 = vmatpush1.bf16.msra.mxu0 0
        %1906 = vmatprep.subr.bf16.mxu0 0
        %1907 = vmatpush1.bf16.msra.mxu0 0
        %1908 = vmatprep.subr.bf16.mxu0 0
        %1909 = vmatpush1.bf16.msra.mxu0 0
        %1910 = vmatprep.subr.bf16.mxu0 0
        %1911 = vmatpush1.bf16.msra.mxu0 0
        %1912 = vmatprep.subr.bf16.mxu0 0
        %1913 = vmatpush1.bf16.msra.mxu0 0
        %1914 = vmatprep.subr.bf16.mxu0 0
        %1915 = vmatpush1.bf16.msra.mxu0 0
        %1916 = vmatprep.subr.bf16.mxu0 0
        %1917 = vmatpush1.bf16.msra.mxu0 0
        %1918 = vmatprep.subr.bf16.mxu0 0
        %1919 = vmatpush1.bf16.msra.mxu0 0
        %1920 = vmatprep.subr.bf16.mxu0 0
        %1921 = vmatpush1.bf16.msra.mxu0 0
        %1922 = vmatprep.subr.bf16.mxu0 0
        %1923 = vmatpush1.bf16.msra.mxu0 0
        %1924 = vmatprep.subr.bf16.mxu0 0
        %1925 = vmatpush1.bf16.msra.mxu0 0
        %1926 = vmatprep.subr.bf16.mxu0 0
        %1927 = vmatpush1.bf16.msra.mxu0 0
        %1928 = vmatprep.mubr.bf16.mxu0 0
        %1929 = vmatmul.mubr.bf16.gmra.mrb[0].mxu0 %v1894
        %v1930 = vpop.f32.mrb[0].mxu0
        %v1931 = vadd.f32 %v1879, %v1930
        %v1932 = vpop.f32.mrb[0].mxu0
        %v1933 = vpop.f32.mrb[0].mxu0
        %v1934 = vpop.f32.mrb[0].mxu0
        %1935 = vdwg.mxu0
        %s1936 = scalar_lea.vmem %s8, 32
        %v1937 = vld [vmem:[%s1936] sm:$0xf]
        %v1938 = vld [vmem:[%s1936 + $0x4] sm:$0xf]
        %v1939 = vld [vmem:[%s1936 + $0x8] sm:$0xf]
        %v1940 = vld [vmem:[%s1936 + $0xc] sm:$0xf]
        %s1941 = scalar_lea.vmem %s9, 2
        %v1942 = vld [vmem:[%s1941] sm:$0x1]
        %v1944 = vlaneseq
        %v1945 = vshrl.u32 %v1944, 7
        %v1946 = vsub.s32 0, %v1945
        %v1947 = vrot.slane %v1942, %v1946
        %v1953 = vunpack.c.l.b16 %v1937
        %v1954 = vunpack.c.l.b16 %v1938
        %v1955 = vunpack.c.l.b16 %v1939
        %v1956 = vunpack.c.l.b16 %v1940
        %v1957 = vpack.c.b16 %v1954, %v1953
        %v1958 = vpack.c.b16 %v1956, %v1955
        %1961 = vmatprep.subr.bf16.mxu0 0
        %1962 = vmatpush1.bf16.msra.mxu0 %v1957
        %1963 = vmatprep.subr.bf16.mxu0 0
        %1964 = vmatpush1.bf16.msra.mxu0 %v1958
        %1965 = vmatprep.subr.bf16.mxu0 0
        %1966 = vmatpush1.bf16.msra.mxu0 0
        %1967 = vmatprep.subr.bf16.mxu0 0
        %1968 = vmatpush1.bf16.msra.mxu0 0
        %1969 = vmatprep.subr.bf16.mxu0 0
        %1970 = vmatpush1.bf16.msra.mxu0 0
        %1971 = vmatprep.subr.bf16.mxu0 0
        %1972 = vmatpush1.bf16.msra.mxu0 0
        %1973 = vmatprep.subr.bf16.mxu0 0
        %1974 = vmatpush1.bf16.msra.mxu0 0
        %1975 = vmatprep.subr.bf16.mxu0 0
        %1976 = vmatpush1.bf16.msra.mxu0 0
        %1977 = vmatprep.subr.bf16.mxu0 0
        %1978 = vmatpush1.bf16.msra.mxu0 0
        %1979 = vmatprep.subr.bf16.mxu0 0
        %1980 = vmatpush1.bf16.msra.mxu0 0
        %1981 = vmatprep.subr.bf16.mxu0 0
        %1982 = vmatpush1.bf16.msra.mxu0 0
        %1983 = vmatprep.subr.bf16.mxu0 0
        %1984 = vmatpush1.bf16.msra.mxu0 0
        %1985 = vmatprep.subr.bf16.mxu0 0
        %1986 = vmatpush1.bf16.msra.mxu0 0
        %1987 = vmatprep.subr.bf16.mxu0 0
        %1988 = vmatpush1.bf16.msra.mxu0 0
        %1989 = vmatprep.subr.bf16.mxu0 0
        %1990 = vmatpush1.bf16.msra.mxu0 0
        %1991 = vmatprep.subr.bf16.mxu0 0
        %1992 = vmatpush1.bf16.msra.mxu0 0
        %1993 = vmatprep.mubr.bf16.mxu0 0
        %1994 = vmatmul.mubr.bf16.gmra.mrb[0].mxu0 %v1894
        %v1995 = vpop.f32.mrb[0].mxu0
        %v1996 = vadd.f32 %v1947, %v1995
        %v1997 = vpop.f32.mrb[0].mxu0
        %v1998 = vpop.f32.mrb[0].mxu0
        %v1999 = vpop.f32.mrb[0].mxu0
        %2000 = vdwg.mxu0
        %s2001 = scalar_lea.vmem %s10, 32
        %v2002 = vld [vmem:[%s2001] sm:$0xf]
        %v2003 = vld [vmem:[%s2001 + $0x4] sm:$0xf]
        %v2004 = vld [vmem:[%s2001 + $0x8] sm:$0xf]
        %v2005 = vld [vmem:[%s2001 + $0xc] sm:$0xf]
        %s2006 = scalar_lea.vmem %s11, 2
        %v2007 = vld [vmem:[%s2006] sm:$0x1]
        %v2009 = vlaneseq
        %v2010 = vshrl.u32 %v2009, 7
        %v2011 = vsub.s32 0, %v2010
        %v2012 = vrot.slane %v2007, %v2011
        %v2018 = vunpack.c.l.b16 %v2002
        %v2019 = vunpack.c.l.b16 %v2003
        %v2020 = vunpack.c.l.b16 %v2004
        %v2021 = vunpack.c.l.b16 %v2005
        %v2022 = vpack.c.b16 %v2019, %v2018
        %v2023 = vpack.c.b16 %v2021, %v2020
        %2026 = vmatprep.subr.bf16.mxu0 0
        %2027 = vmatpush1.bf16.msra.mxu0 %v2022
        %2028 = vmatprep.subr.bf16.mxu0 0
        %2029 = vmatpush1.bf16.msra.mxu0 %v2023
        %2030 = vmatprep.subr.bf16.mxu0 0
        %2031 = vmatpush1.bf16.msra.mxu0 0
        %2032 = vmatprep.subr.bf16.mxu0 0
        %2033 = vmatpush1.bf16.msra.mxu0 0
        %2034 = vmatprep.subr.bf16.mxu0 0
        %2035 = vmatpush1.bf16.msra.mxu0 0
        %2036 = vmatprep.subr.bf16.mxu0 0
        %2037 = vmatpush1.bf16.msra.mxu0 0
        %2038 = vmatprep.subr.bf16.mxu0 0
        %2039 = vmatpush1.bf16.msra.mxu0 0
        %2040 = vmatprep.subr.bf16.mxu0 0
        %2041 = vmatpush1.bf16.msra.mxu0 0
        %2042 = vmatprep.subr.bf16.mxu0 0
        %2043 = vmatpush1.bf16.msra.mxu0 0
        %2044 = vmatprep.subr.bf16.mxu0 0
        %2045 = vmatpush1.bf16.msra.mxu0 0
        %2046 = vmatprep.subr.bf16.mxu0 0
        %2047 = vmatpush1.bf16.msra.mxu0 0
        %2048 = vmatprep.subr.bf16.mxu0 0
        %2049 = vmatpush1.bf16.msra.mxu0 0
        %2050 = vmatprep.subr.bf16.mxu0 0
        %2051 = vmatpush1.bf16.msra.mxu0 0
        %2052 = vmatprep.subr.bf16.mxu0 0
        %2053 = vmatpush1.bf16.msra.mxu0 0
        %2054 = vmatprep.subr.bf16.mxu0 0
        %2055 = vmatpush1.bf16.msra.mxu0 0
        %2056 = vmatprep.subr.bf16.mxu0 0
        %2057 = vmatpush1.bf16.msra.mxu0 0
        %2058 = vmatprep.mubr.bf16.mxu0 0
        %2059 = vmatmul.mubr.bf16.gmra.mrb[0].mxu0 %v1894
        %v2060 = vpop.f32.mrb[0].mxu0
        %v2061 = vadd.f32 %v2012, %v2060
        %v2062 = vpop.f32.mrb[0].mxu0
        %v2063 = vpop.f32.mrb[0].mxu0
        %v2064 = vpop.f32.mrb[0].mxu0
        %2065 = vdwg.mxu0
        %v2066 = vpack.c.bf16 %v1931, %v1931
        %v2067 = vpack.c.bf16 %v1996, %v1996
        %v2069 = vsel %vm1080, %v2066, 0
        %v2072 = vsel %vm1080, %v2067, 0
        %2074 = vmatprep.subr.bf16.mxu0 0
        %2075 = vmatpush1.bf16.xpose.msra.mxu0 %v2072
        %2076 = vmatprep.subr.bf16.mxu0 0
        %2077 = vmatpush1.bf16.xpose.msra.mxu0 0
        %2078 = vmatprep.subr.bf16.mxu0 0
        %2079 = vmatpush1.bf16.xpose.msra.mxu0 0
        %2080 = vmatprep.subr.bf16.mxu0 0
        %2081 = vmatpush1.bf16.xpose.msra.mxu0 0
        %2082 = vmatprep.subr.bf16.mxu0 0
        %2083 = vmatpush1.bf16.xpose.msra.mxu0 0
        %2084 = vmatprep.subr.bf16.mxu0 0
        %2085 = vmatpush1.bf16.xpose.msra.mxu0 0
        %2086 = vmatprep.subr.bf16.mxu0 0
        %2087 = vmatpush1.bf16.xpose.msra.mxu0 0
        %2088 = vmatprep.subr.bf16.mxu0 0
        %2089 = vmatpush1.bf16.xpose.msra.mxu0 0
        %2090 = vmatprep.subr.bf16.mxu0 0
        %2091 = vmatpush1.bf16.xpose.msra.mxu0 0
        %2092 = vmatprep.subr.bf16.mxu0 0
        %2093 = vmatpush1.bf16.xpose.msra.mxu0 0
        %2094 = vmatprep.subr.bf16.mxu0 0
        %2095 = vmatpush1.bf16.xpose.msra.mxu0 0
        %2096 = vmatprep.subr.bf16.mxu0 0
        %2097 = vmatpush1.bf16.xpose.msra.mxu0 0
        %2098 = vmatprep.subr.bf16.mxu0 0
        %2099 = vmatpush1.bf16.xpose.msra.mxu0 0
        %2100 = vmatprep.subr.bf16.mxu0 0
        %2101 = vmatpush1.bf16.xpose.msra.mxu0 0
        %2102 = vmatprep.subr.bf16.mxu0 0
        %2103 = vmatpush1.bf16.xpose.msra.mxu0 0
        %2104 = vmatprep.subr.bf16.mxu0 0
        %2105 = vmatpush1.bf16.xpose.msra.mxu0 0
        %2106 = vmatprep.mubr.bf16.mxu0 0
        %2107 = vmatmul.mubr.bf16.gmra.mrb[0].mxu0 %v2069
        %v2108 = vpop.f32.mrb[0].mxu0
        %v2109 = vadd.f32 0.0, %v2108
        %v2110 = vpop.f32.mrb[0].mxu0
        %v2111 = vpop.f32.mrb[0].mxu0
        %v2112 = vpop.f32.mrb[0].mxu0
        %2113 = vdwg.mxu0
        %v2114 = vmul.f32 %v2109, 0.25
        %v2115 = vadd.f32 %v2114, %v855
        %v2116 = vsel %vm1129, %v2115, -inf
        %2117 = vmax.xlane.f32.xlu0 %v2116
        %v2118 = vpop.xlane.xlu0 %2117
        %v2119 = vsub.f32 %v2115, %v2118
        %v2120 = vmul.f32 %v2119, 1.442695
        %v2121 = vpow.pop %v2120
        %v2122 = vsel %vm1129, %v2121, 0.0
        %2123 = vadd.xlane.f32.xlu0 %v2122
        %v2124 = vpop.xlane.xlu0 %2123
        %v2125 = vrcp.pop %v2124
        %v2126 = vmul.f32 %v2121, %v2125
        %v2127 = vpack.c.bf16 %v2126, %v2126
        %v2128 = vpack.c.bf16 %v2061, %v2061
        %v2130 = vsel %vm1129, %v2127, 0
        %v2133 = vsel %vm1146, %v2128, 0
        %2135 = vmatprep.subr.bf16.mxu0 0
        %2136 = vmatpush1.bf16.msra.mxu0 %v2133
        %2137 = vmatprep.subr.bf16.mxu0 0
        %2138 = vmatpush1.bf16.msra.mxu0 0
        %2139 = vmatprep.subr.bf16.mxu0 0
        %2140 = vmatpush1.bf16.msra.mxu0 0
        %2141 = vmatprep.subr.bf16.mxu0 0
        %2142 = vmatpush1.bf16.msra.mxu0 0
        %2143 = vmatprep.subr.bf16.mxu0 0
        %2144 = vmatpush1.bf16.msra.mxu0 0
        %2145 = vmatprep.subr.bf16.mxu0 0
        %2146 = vmatpush1.bf16.msra.mxu0 0
        %2147 = vmatprep.subr.bf16.mxu0 0
        %2148 = vmatpush1.bf16.msra.mxu0 0
        %2149 = vmatprep.subr.bf16.mxu0 0
        %2150 = vmatpush1.bf16.msra.mxu0 0
        %2151 = vmatprep.subr.bf16.mxu0 0
        %2152 = vmatpush1.bf16.msra.mxu0 0
        %2153 = vmatprep.subr.bf16.mxu0 0
        %2154 = vmatpush1.bf16.msra.mxu0 0
        %2155 = vmatprep.subr.bf16.mxu0 0
        %2156 = vmatpush1.bf16.msra.mxu0 0
        %2157 = vmatprep.subr.bf16.mxu0 0
        %2158 = vmatpush1.bf16.msra.mxu0 0
        %2159 = vmatprep.subr.bf16.mxu0 0
        %2160 = vmatpush1.bf16.msra.mxu0 0
        %2161 = vmatprep.subr.bf16.mxu0 0
        %2162 = vmatpush1.bf16.msra.mxu0 0
        %2163 = vmatprep.subr.bf16.mxu0 0
        %2164 = vmatpush1.bf16.msra.mxu0 0
        %2165 = vmatprep.subr.bf16.mxu0 0
        %2166 = vmatpush1.bf16.msra.mxu0 0
        %2167 = vmatprep.mubr.bf16.mxu0 0
        %2168 = vmatmul.mubr.bf16.gmra.mrb[0].mxu0 %v2130
        %v2169 = vpop.f32.mrb[0].mxu0
        %v2170 = vadd.f32 0.0, %v2169
        %v2171 = vpop.f32.mrb[0].mxu0
        %v2172 = vpop.f32.mrb[0].mxu0
        %v2173 = vpop.f32.mrb[0].mxu0
        %2174 = vdwg.mxu0
        %v2175 = vpack.c.bf16 %v2170, %v2170
        %s2176 = scalar_lea.vmem %s12, 16
        %v2177 = vld [vmem:[%s2176] sm:$0xf]
        %v2178 = vld [vmem:[%s2176 + $0x4] sm:$0xf]
        %v2181 = vunpack.c.l.b16 %v2177
        %v2182 = vunpack.c.l.b16 %v2178
        %v2183 = vpack.c.b16 %v2182, %v2181
        %v2186 = vsel %vm1080, %v2175, 0
        %2188 = vmatprep.subr.bf16.mxu0 0
        %2189 = vmatpush1.bf16.msra.mxu0 %v2183
        %2190 = vmatprep.subr.bf16.mxu0 0
        %2191 = vmatpush1.bf16.msra.mxu0 0
        %2192 = vmatprep.subr.bf16.mxu0 0
        %2193 = vmatpush1.bf16.msra.mxu0 0
        %2194 = vmatprep.subr.bf16.mxu0 0
        %2195 = vmatpush1.bf16.msra.mxu0 0
        %2196 = vmatprep.subr.bf16.mxu0 0
        %2197 = vmatpush1.bf16.msra.mxu0 0
        %2198 = vmatprep.subr.bf16.mxu0 0
        %2199 = vmatpush1.bf16.msra.mxu0 0
        %2200 = vmatprep.subr.bf16.mxu0 0
        %2201 = vmatpush1.bf16.msra.mxu0 0
        %2202 = vmatprep.subr.bf16.mxu0 0
        %2203 = vmatpush1.bf16.msra.mxu0 0
        %2204 = vmatprep.subr.bf16.mxu0 0
        %2205 = vmatpush1.bf16.msra.mxu0 0
        %2206 = vmatprep.subr.bf16.mxu0 0
        %2207 = vmatpush1.bf16.msra.mxu0 0
        %2208 = vmatprep.subr.bf16.mxu0 0
        %2209 = vmatpush1.bf16.msra.mxu0 0
        %2210 = vmatprep.subr.bf16.mxu0 0
        %2211 = vmatpush1.bf16.msra.mxu0 0
        %2212 = vmatprep.subr.bf16.mxu0 0
        %2213 = vmatpush1.bf16.msra.mxu0 0
        %2214 = vmatprep.subr.bf16.mxu0 0
        %2215 = vmatpush1.bf16.msra.mxu0 0
        %2216 = vmatprep.subr.bf16.mxu0 0
        %2217 = vmatpush1.bf16.msra.mxu0 0
        %2218 = vmatprep.subr.bf16.mxu0 0
        %2219 = vmatpush1.bf16.msra.mxu0 0
        %2220 = vmatprep.mubr.bf16.mxu0 0
        %2221 = vmatmul.mubr.bf16.gmra.mrb[0].mxu0 %v2186
        %v2222 = vpop.f32.mrb[0].mxu0
        %v2223 = vadd.f32 0.0, %v2222
        %v2224 = vpop.f32.mrb[0].mxu0
        %v2225 = vpop.f32.mrb[0].mxu0
        %v2226 = vpop.f32.mrb[0].mxu0
        %2227 = vdwg.mxu0
        %v2229 = vlaneseq
        %v2230 = vshrl.u32 %v2229, 7
        %v2231 = vsub.s32 0, %v2230
        %v2232 = vrot.slane %v1866, %v2231
        %v2234 = vadd.f32 %v2232, %v2223
        %s2235 = scalar_lea.vmem %s6, 48
        %v2236 = vld [vmem:[%s2235] sm:$0xf]
        %v2237 = vld [vmem:[%s2235 + $0x4] sm:$0xf]
        %v2238 = vld [vmem:[%s2235 + $0x8] sm:$0xf]
        %v2239 = vld [vmem:[%s2235 + $0xc] sm:$0xf]
        %s2240 = scalar_lea.vmem %s7, 3
        %v2241 = vld [vmem:[%s2240] sm:$0x1]
        %v2243 = vlaneseq
        %v2244 = vshrl.u32 %v2243, 7
        %v2245 = vsub.s32 0, %v2244
        %v2246 = vrot.slane %v2241, %v2245
        %v2252 = vunpack.c.l.b16 %v2236
        %v2253 = vunpack.c.l.b16 %v2237
        %v2254 = vunpack.c.l.b16 %v2238
        %v2255 = vunpack.c.l.b16 %v2239
        %v2256 = vpack.c.b16 %v2253, %v2252
        %v2257 = vpack.c.b16 %v2255, %v2254
        %2260 = vmatprep.subr.bf16.mxu0 0
        %2261 = vmatpush1.bf16.msra.mxu0 %v2256
        %2262 = vmatprep.subr.bf16.mxu0 0
        %2263 = vmatpush1.bf16.msra.mxu0 %v2257
        %2264 = vmatprep.subr.bf16.mxu0 0
        %2265 = vmatpush1.bf16.msra.mxu0 0
        %2266 = vmatprep.subr.bf16.mxu0 0
        %2267 = vmatpush1.bf16.msra.mxu0 0
        %2268 = vmatprep.subr.bf16.mxu0 0
        %2269 = vmatpush1.bf16.msra.mxu0 0
        %2270 = vmatprep.subr.bf16.mxu0 0
        %2271 = vmatpush1.bf16.msra.mxu0 0
        %2272 = vmatprep.subr.bf16.mxu0 0
        %2273 = vmatpush1.bf16.msra.mxu0 0
        %2274 = vmatprep.subr.bf16.mxu0 0
        %2275 = vmatpush1.bf16.msra.mxu0 0
        %2276 = vmatprep.subr.bf16.mxu0 0
        %2277 = vmatpush1.bf16.msra.mxu0 0
        %2278 = vmatprep.subr.bf16.mxu0 0
        %2279 = vmatpush1.bf16.msra.mxu0 0
        %2280 = vmatprep.subr.bf16.mxu0 0
        %2281 = vmatpush1.bf16.msra.mxu0 0
        %2282 = vmatprep.subr.bf16.mxu0 0
        %2283 = vmatpush1.bf16.msra.mxu0 0
        %2284 = vmatprep.subr.bf16.mxu0 0
        %2285 = vmatpush1.bf16.msra.mxu0 0
        %2286 = vmatprep.subr.bf16.mxu0 0
        %2287 = vmatpush1.bf16.msra.mxu0 0
        %2288 = vmatprep.subr.bf16.mxu0 0
        %2289 = vmatpush1.bf16.msra.mxu0 0
        %2290 = vmatprep.subr.bf16.mxu0 0
        %2291 = vmatpush1.bf16.msra.mxu0 0
        %2292 = vmatprep.mubr.bf16.mxu0 0
        %2293 = vmatmul.mubr.bf16.gmra.mrb[0].mxu0 %v1894
        %v2294 = vpop.f32.mrb[0].mxu0
        %v2295 = vadd.f32 %v2246, %v2294
        %v2296 = vpop.f32.mrb[0].mxu0
        %v2297 = vpop.f32.mrb[0].mxu0
        %v2298 = vpop.f32.mrb[0].mxu0
        %2299 = vdwg.mxu0
        %s2300 = scalar_lea.vmem %s8, 48
        %v2301 = vld [vmem:[%s2300] sm:$0xf]
        %v2302 = vld [vmem:[%s2300 + $0x4] sm:$0xf]
        %v2303 = vld [vmem:[%s2300 + $0x8] sm:$0xf]
        %v2304 = vld [vmem:[%s2300 + $0xc] sm:$0xf]
        %s2305 = scalar_lea.vmem %s9, 3
        %v2306 = vld [vmem:[%s2305] sm:$0x1]
        %v2308 = vlaneseq
        %v2309 = vshrl.u32 %v2308, 7
        %v2310 = vsub.s32 0, %v2309
        %v2311 = vrot.slane %v2306, %v2310
        %v2317 = vunpack.c.l.b16 %v2301
        %v2318 = vunpack.c.l.b16 %v2302
        %v2319 = vunpack.c.l.b16 %v2303
        %v2320 = vunpack.c.l.b16 %v2304
        %v2321 = vpack.c.b16 %v2318, %v2317
        %v2322 = vpack.c.b16 %v2320, %v2319
        %2325 = vmatprep.subr.bf16.mxu0 0
        %2326 = vmatpush1.bf16.msra.mxu0 %v2321
        %2327 = vmatprep.subr.bf16.mxu0 0
        %2328 = vmatpush1.bf16.msra.mxu0 %v2322
        %2329 = vmatprep.subr.bf16.mxu0 0
        %2330 = vmatpush1.bf16.msra.mxu0 0
        %2331 = vmatprep.subr.bf16.mxu0 0
        %2332 = vmatpush1.bf16.msra.mxu0 0
        %2333 = vmatprep.subr.bf16.mxu0 0
        %2334 = vmatpush1.bf16.msra.mxu0 0
        %2335 = vmatprep.subr.bf16.mxu0 0
        %2336 = vmatpush1.bf16.msra.mxu0 0
        %2337 = vmatprep.subr.bf16.mxu0 0
        %2338 = vmatpush1.bf16.msra.mxu0 0
        %2339 = vmatprep.subr.bf16.mxu0 0
        %2340 = vmatpush1.bf16.msra.mxu0 0
        %2341 = vmatprep.subr.bf16.mxu0 0
        %2342 = vmatpush1.bf16.msra.mxu0 0
        %2343 = vmatprep.subr.bf16.mxu0 0
        %2344 = vmatpush1.bf16.msra.mxu0 0
        %2345 = vmatprep.subr.bf16.mxu0 0
        %2346 = vmatpush1.bf16.msra.mxu0 0
        %2347 = vmatprep.subr.bf16.mxu0 0
        %2348 = vmatpush1.bf16.msra.mxu0 0
        %2349 = vmatprep.subr.bf16.mxu0 0
        %2350 = vmatpush1.bf16.msra.mxu0 0
        %2351 = vmatprep.subr.bf16.mxu0 0
        %2352 = vmatpush1.bf16.msra.mxu0 0
        %2353 = vmatprep.subr.bf16.mxu0 0
        %2354 = vmatpush1.bf16.msra.mxu0 0
        %2355 = vmatprep.subr.bf16.mxu0 0
        %2356 = vmatpush1.bf16.msra.mxu0 0
        %2357 = vmatprep.mubr.bf16.mxu0 0
        %2358 = vmatmul.mubr.bf16.gmra.mrb[0].mxu0 %v1894
        %v2359 = vpop.f32.mrb[0].mxu0
        %v2360 = vadd.f32 %v2311, %v2359
        %v2361 = vpop.f32.mrb[0].mxu0
        %v2362 = vpop.f32.mrb[0].mxu0
        %v2363 = vpop.f32.mrb[0].mxu0
        %2364 = vdwg.mxu0
        %s2365 = scalar_lea.vmem %s10, 48
        %v2366 = vld [vmem:[%s2365] sm:$0xf]
        %v2367 = vld [vmem:[%s2365 + $0x4] sm:$0xf]
        %v2368 = vld [vmem:[%s2365 + $0x8] sm:$0xf]
        %v2369 = vld [vmem:[%s2365 + $0xc] sm:$0xf]
        %s2370 = scalar_lea.vmem %s11, 3
        %v2371 = vld [vmem:[%s2370] sm:$0x1]
        %v2373 = vlaneseq
        %v2374 = vshrl.u32 %v2373, 7
        %v2375 = vsub.s32 0, %v2374
        %v2376 = vrot.slane %v2371, %v2375
        %v2382 = vunpack.c.l.b16 %v2366
        %v2383 = vunpack.c.l.b16 %v2367
        %v2384 = vunpack.c.l.b16 %v2368
        %v2385 = vunpack.c.l.b16 %v2369
        %v2386 = vpack.c.b16 %v2383, %v2382
        %v2387 = vpack.c.b16 %v2385, %v2384
        %2390 = vmatprep.subr.bf16.mxu0 0
        %2391 = vmatpush1.bf16.msra.mxu0 %v2386
        %2392 = vmatprep.subr.bf16.mxu0 0
        %2393 = vmatpush1.bf16.msra.mxu0 %v2387
        %2394 = vmatprep.subr.bf16.mxu0 0
        %2395 = vmatpush1.bf16.msra.mxu0 0
        %2396 = vmatprep.subr.bf16.mxu0 0
        %2397 = vmatpush1.bf16.msra.mxu0 0
        %2398 = vmatprep.subr.bf16.mxu0 0
        %2399 = vmatpush1.bf16.msra.mxu0 0
        %2400 = vmatprep.subr.bf16.mxu0 0
        %2401 = vmatpush1.bf16.msra.mxu0 0
        %2402 = vmatprep.subr.bf16.mxu0 0
        %2403 = vmatpush1.bf16.msra.mxu0 0
        %2404 = vmatprep.subr.bf16.mxu0 0
        %2405 = vmatpush1.bf16.msra.mxu0 0
        %2406 = vmatprep.subr.bf16.mxu0 0
        %2407 = vmatpush1.bf16.msra.mxu0 0
        %2408 = vmatprep.subr.bf16.mxu0 0
        %2409 = vmatpush1.bf16.msra.mxu0 0
        %2410 = vmatprep.subr.bf16.mxu0 0
        %2411 = vmatpush1.bf16.msra.mxu0 0
        %2412 = vmatprep.subr.bf16.mxu0 0
        %2413 = vmatpush1.bf16.msra.mxu0 0
        %2414 = vmatprep.subr.bf16.mxu0 0
        %2415 = vmatpush1.bf16.msra.mxu0 0
        %2416 = vmatprep.subr.bf16.mxu0 0
        %2417 = vmatpush1.bf16.msra.mxu0 0
        %2418 = vmatprep.subr.bf16.mxu0 0
        %2419 = vmatpush1.bf16.msra.mxu0 0
        %2420 = vmatprep.subr.bf16.mxu0 0
        %2421 = vmatpush1.bf16.msra.mxu0 0
        %2422 = vmatprep.mubr.bf16.mxu0 0
        %2423 = vmatmul.mubr.bf16.gmra.mrb[0].mxu0 %v1894
        %v2424 = vpop.f32.mrb[0].mxu0
        %v2425 = vadd.f32 %v2376, %v2424
        %v2426 = vpop.f32.mrb[0].mxu0
        %v2427 = vpop.f32.mrb[0].mxu0
        %v2428 = vpop.f32.mrb[0].mxu0
        %2429 = vdwg.mxu0
        %v2430 = vpack.c.bf16 %v2295, %v2295
        %v2431 = vpack.c.bf16 %v2360, %v2360
        %v2433 = vsel %vm1080, %v2430, 0
        %v2436 = vsel %vm1080, %v2431, 0
        %2438 = vmatprep.subr.bf16.mxu0 0
        %2439 = vmatpush1.bf16.xpose.msra.mxu0 %v2436
        %2440 = vmatprep.subr.bf16.mxu0 0
        %2441 = vmatpush1.bf16.xpose.msra.mxu0 0
        %2442 = vmatprep.subr.bf16.mxu0 0
        %2443 = vmatpush1.bf16.xpose.msra.mxu0 0
        %2444 = vmatprep.subr.bf16.mxu0 0
        %2445 = vmatpush1.bf16.xpose.msra.mxu0 0
        %2446 = vmatprep.subr.bf16.mxu0 0
        %2447 = vmatpush1.bf16.xpose.msra.mxu0 0
        %2448 = vmatprep.subr.bf16.mxu0 0
        %2449 = vmatpush1.bf16.xpose.msra.mxu0 0
        %2450 = vmatprep.subr.bf16.mxu0 0
        %2451 = vmatpush1.bf16.xpose.msra.mxu0 0
        %2452 = vmatprep.subr.bf16.mxu0 0
        %2453 = vmatpush1.bf16.xpose.msra.mxu0 0
        %2454 = vmatprep.subr.bf16.mxu0 0
        %2455 = vmatpush1.bf16.xpose.msra.mxu0 0
        %2456 = vmatprep.subr.bf16.mxu0 0
        %2457 = vmatpush1.bf16.xpose.msra.mxu0 0
        %2458 = vmatprep.subr.bf16.mxu0 0
        %2459 = vmatpush1.bf16.xpose.msra.mxu0 0
        %2460 = vmatprep.subr.bf16.mxu0 0
        %2461 = vmatpush1.bf16.xpose.msra.mxu0 0
        %2462 = vmatprep.subr.bf16.mxu0 0
        %2463 = vmatpush1.bf16.xpose.msra.mxu0 0
        %2464 = vmatprep.subr.bf16.mxu0 0
        %2465 = vmatpush1.bf16.xpose.msra.mxu0 0
        %2466 = vmatprep.subr.bf16.mxu0 0
        %2467 = vmatpush1.bf16.xpose.msra.mxu0 0
        %2468 = vmatprep.subr.bf16.mxu0 0
        %2469 = vmatpush1.bf16.xpose.msra.mxu0 0
        %2470 = vmatprep.mubr.bf16.mxu0 0
        %2471 = vmatmul.mubr.bf16.gmra.mrb[0].mxu0 %v2433
        %v2472 = vpop.f32.mrb[0].mxu0
        %v2473 = vadd.f32 0.0, %v2472
        %v2474 = vpop.f32.mrb[0].mxu0
        %v2475 = vpop.f32.mrb[0].mxu0
        %v2476 = vpop.f32.mrb[0].mxu0
        %2477 = vdwg.mxu0
        %v2478 = vmul.f32 %v2473, 0.25
        %v2479 = vadd.f32 %v2478, %v855
        %v2480 = vsel %vm1129, %v2479, -inf
        %2481 = vmax.xlane.f32.xlu0 %v2480
        %v2482 = vpop.xlane.xlu0 %2481
        %v2483 = vsub.f32 %v2479, %v2482
        %v2484 = vmul.f32 %v2483, 1.442695
        %v2485 = vpow.pop %v2484
        %v2486 = vsel %vm1129, %v2485, 0.0
        %2487 = vadd.xlane.f32.xlu0 %v2486
        %v2488 = vpop.xlane.xlu0 %2487
        %v2489 = vrcp.pop %v2488
        %v2490 = vmul.f32 %v2485, %v2489
        %v2491 = vpack.c.bf16 %v2490, %v2490
        %v2492 = vpack.c.bf16 %v2425, %v2425
        %v2494 = vsel %vm1129, %v2491, 0
        %v2497 = vsel %vm1146, %v2492, 0
        %2499 = vmatprep.subr.bf16.mxu0 0
        %2500 = vmatpush1.bf16.msra.mxu0 %v2497
        %2501 = vmatprep.subr.bf16.mxu0 0
        %2502 = vmatpush1.bf16.msra.mxu0 0
        %2503 = vmatprep.subr.bf16.mxu0 0
        %2504 = vmatpush1.bf16.msra.mxu0 0
        %2505 = vmatprep.subr.bf16.mxu0 0
        %2506 = vmatpush1.bf16.msra.mxu0 0
        %2507 = vmatprep.subr.bf16.mxu0 0
        %2508 = vmatpush1.bf16.msra.mxu0 0
        %2509 = vmatprep.subr.bf16.mxu0 0
        %2510 = vmatpush1.bf16.msra.mxu0 0
        %2511 = vmatprep.subr.bf16.mxu0 0
        %2512 = vmatpush1.bf16.msra.mxu0 0
        %2513 = vmatprep.subr.bf16.mxu0 0
        %2514 = vmatpush1.bf16.msra.mxu0 0
        %2515 = vmatprep.subr.bf16.mxu0 0
        %2516 = vmatpush1.bf16.msra.mxu0 0
        %2517 = vmatprep.subr.bf16.mxu0 0
        %2518 = vmatpush1.bf16.msra.mxu0 0
        %2519 = vmatprep.subr.bf16.mxu0 0
        %2520 = vmatpush1.bf16.msra.mxu0 0
        %2521 = vmatprep.subr.bf16.mxu0 0
        %2522 = vmatpush1.bf16.msra.mxu0 0
        %2523 = vmatprep.subr.bf16.mxu0 0
        %2524 = vmatpush1.bf16.msra.mxu0 0
        %2525 = vmatprep.subr.bf16.mxu0 0
        %2526 = vmatpush1.bf16.msra.mxu0 0
        %2527 = vmatprep.subr.bf16.mxu0 0
        %2528 = vmatpush1.bf16.msra.mxu0 0
        %2529 = vmatprep.subr.bf16.mxu0 0
        %2530 = vmatpush1.bf16.msra.mxu0 0
        %2531 = vmatprep.mubr.bf16.mxu0 0
        %2532 = vmatmul.mubr.bf16.gmra.mrb[0].mxu0 %v2494
        %v2533 = vpop.f32.mrb[0].mxu0
        %v2534 = vadd.f32 0.0, %v2533
        %v2535 = vpop.f32.mrb[0].mxu0
        %v2536 = vpop.f32.mrb[0].mxu0
        %v2537 = vpop.f32.mrb[0].mxu0
        %2538 = vdwg.mxu0
        %v2539 = vpack.c.bf16 %v2534, %v2534
        %s2540 = scalar_lea.vmem %s12, 24
        %v2541 = vld [vmem:[%s2540] sm:$0xf]
        %v2542 = vld [vmem:[%s2540 + $0x4] sm:$0xf]
        %v2545 = vunpack.c.l.b16 %v2541
        %v2546 = vunpack.c.l.b16 %v2542
        %v2547 = vpack.c.b16 %v2546, %v2545
        %v2550 = vsel %vm1080, %v2539, 0
        %2552 = vmatprep.subr.bf16.mxu0 0
        %2553 = vmatpush1.bf16.msra.mxu0 %v2547
        %2554 = vmatprep.subr.bf16.mxu0 0
        %2555 = vmatpush1.bf16.msra.mxu0 0
        %2556 = vmatprep.subr.bf16.mxu0 0
        %2557 = vmatpush1.bf16.msra.mxu0 0
        %2558 = vmatprep.subr.bf16.mxu0 0
        %2559 = vmatpush1.bf16.msra.mxu0 0
        %2560 = vmatprep.subr.bf16.mxu0 0
        %2561 = vmatpush1.bf16.msra.mxu0 0
        %2562 = vmatprep.subr.bf16.mxu0 0
        %2563 = vmatpush1.bf16.msra.mxu0 0
        %2564 = vmatprep.subr.bf16.mxu0 0
        %2565 = vmatpush1.bf16.msra.mxu0 0
        %2566 = vmatprep.subr.bf16.mxu0 0
        %2567 = vmatpush1.bf16.msra.mxu0 0
        %2568 = vmatprep.subr.bf16.mxu0 0
        %2569 = vmatpush1.bf16.msra.mxu0 0
        %2570 = vmatprep.subr.bf16.mxu0 0
        %2571 = vmatpush1.bf16.msra.mxu0 0
        %2572 = vmatprep.subr.bf16.mxu0 0
        %2573 = vmatpush1.bf16.msra.mxu0 0
        %2574 = vmatprep.subr.bf16.mxu0 0
        %2575 = vmatpush1.bf16.msra.mxu0 0
        %2576 = vmatprep.subr.bf16.mxu0 0
        %2577 = vmatpush1.bf16.msra.mxu0 0
        %2578 = vmatprep.subr.bf16.mxu0 0
        %2579 = vmatpush1.bf16.msra.mxu0 0
        %2580 = vmatprep.subr.bf16.mxu0 0
        %2581 = vmatpush1.bf16.msra.mxu0 0
        %2582 = vmatprep.subr.bf16.mxu0 0
        %2583 = vmatpush1.bf16.msra.mxu0 0
        %2584 = vmatprep.mubr.bf16.mxu0 0
        %2585 = vmatmul.mubr.bf16.gmra.mrb[0].mxu0 %v2550
        %v2586 = vpop.f32.mrb[0].mxu0
        %v2587 = vadd.f32 0.0, %v2586
        %v2588 = vpop.f32.mrb[0].mxu0
        %v2589 = vpop.f32.mrb[0].mxu0
        %v2590 = vpop.f32.mrb[0].mxu0
        %2591 = vdwg.mxu0
        %v2592 = vadd.f32 %v2234, %v2587
        %v2593 = vadd.f32 %v2592, %v1864
        %s2594 = scalar_lea.vmem %s14, 2
        %v2595 = vld [vmem:[%s2594] sm:$0x3]
        %v2596 = vsel %vm859, %v2593, 0.0
        %2597 = vadd.xlane.f32.xlu0 %v2596
        %v2598 = vpop.xlane.xlu0 %2597
        %v2599 = vmul.f32 %v2598, %v863
        %v2600 = vsub.f32 %v2593, %v2599
        %v2601 = vmul.f32 %v2600, %v2600
        %v2602 = vsel %vm859, %v2601, 0.0
        %2603 = vadd.xlane.f32.xlu0 %v2602
        %v2604 = vpop.xlane.xlu0 %2603
        %v2605 = vmul.f32 %v2604, %v863
        %v2606 = vadd.f32 %v2605, 1e-12
        %v2607 = vrsqrt.pop %v2606
        %v2608 = vmul.f32 %v2600, %v2607
        %v2609 = vlaneseq
        %v2610 = vshrl.u32 %v2609, 7
        %v2611 = vsub.s32 0, %v2610
        %v2612 = vrot.slane %v2595, %v2611
        %v2613 = vmul.f32 %v2608, %v2612
        %v2614 = vlaneseq
        %v2615 = vshrl.u32 %v2614, 7
        %v2616 = vsub.s32 1, %v2615
        %v2617 = vrot.slane %v2595, %v2616
        %v2618 = vadd.f32 %v2613, %v2617
        %s2619 = scalar_lea.vmem %s15, 16
        %v2620 = vld [vmem:[%s2619] sm:$0xf]
        %v2621 = vld [vmem:[%s2619 + $0x4] sm:$0xf]
        %v2622 = vld [vmem:[%s2619 + $0x8] sm:$0xf]
        %v2623 = vld [vmem:[%s2619 + $0xc] sm:$0xf]
        %v2624 = vpack.c.bf16 %v2618, %v2618
        %s2625 = scalar_lea.vmem %s16, 1
        %v2626 = vld [vmem:[%s2625] sm:$0x1]
        %v2628 = vlaneseq
        %v2629 = vshrl.u32 %v2628, 7
        %v2630 = vsub.s32 0, %v2629
        %v2631 = vrot.slane %v2626, %v2630
        %v2637 = vunpack.c.l.b16 %v2620
        %v2638 = vunpack.c.l.b16 %v2621
        %v2639 = vunpack.c.l.b16 %v2622
        %v2640 = vunpack.c.l.b16 %v2623
        %v2641 = vpack.c.b16 %v2638, %v2637
        %v2642 = vpack.c.b16 %v2640, %v2639
        %v2646 = vsel %vm859, %v2624, 0
        %2648 = vmatprep.subr.bf16.mxu0 0
        %2649 = vmatpush1.bf16.msra.mxu0 %v2641
        %2650 = vmatprep.subr.bf16.mxu0 0
        %2651 = vmatpush1.bf16.msra.mxu0 %v2642
        %2652 = vmatprep.subr.bf16.mxu0 0
        %2653 = vmatpush1.bf16.msra.mxu0 0
        %2654 = vmatprep.subr.bf16.mxu0 0
        %2655 = vmatpush1.bf16.msra.mxu0 0
        %2656 = vmatprep.subr.bf16.mxu0 0
        %2657 = vmatpush1.bf16.msra.mxu0 0
        %2658 = vmatprep.subr.bf16.mxu0 0
        %2659 = vmatpush1.bf16.msra.mxu0 0
        %2660 = vmatprep.subr.bf16.mxu0 0
        %2661 = vmatpush1.bf16.msra.mxu0 0
        %2662 = vmatprep.subr.bf16.mxu0 0
        %2663 = vmatpush1.bf16.msra.mxu0 0
        %2664 = vmatprep.subr.bf16.mxu0 0
        %2665 = vmatpush1.bf16.msra.mxu0 0
        %2666 = vmatprep.subr.bf16.mxu0 0
        %2667 = vmatpush1.bf16.msra.mxu0 0
        %2668 = vmatprep.subr.bf16.mxu0 0
        %2669 = vmatpush1.bf16.msra.mxu0 0
        %2670 = vmatprep.subr.bf16.mxu0 0
        %2671 = vmatpush1.bf16.msra.mxu0 0
        %2672 = vmatprep.subr.bf16.mxu0 0
        %2673 = vmatpush1.bf16.msra.mxu0 0
        %2674 = vmatprep.subr.bf16.mxu0 0
        %2675 = vmatpush1.bf16.msra.mxu0 0
        %2676 = vmatprep.subr.bf16.mxu0 0
        %2677 = vmatpush1.bf16.msra.mxu0 0
        %2678 = vmatprep.subr.bf16.mxu0 0
        %2679 = vmatpush1.bf16.msra.mxu0 0
        %2680 = vmatprep.mubr.bf16.mxu0 0
        %2681 = vmatmul.mubr.bf16.gmra.mrb[0].mxu0 %v2646
        %v2682 = vpop.f32.mrb[0].mxu0
        %v2683 = vadd.f32 %v2631, %v2682
        %v2684 = vpop.f32.mrb[0].mxu0
        %v2685 = vpop.f32.mrb[0].mxu0
        %v2686 = vpop.f32.mrb[0].mxu0
        %2687 = vdwg.mxu0
        %v2688 = vmul.f32 %v2683, 0.70710677
        %vm2689 = vcmp.ge.f32.partialorder %v2688, 0.0
        %v2690 = vsel %vm2689, 1.0, -1.0
        %v2691 = vand.u32 2147483647, %v2688
        %v2692 = vmul.f32 %v2691, 0.3275911
        %v2693 = vadd.f32 %v2692, 1.0
        %v2694 = vrcp.pop %v2693
        %v2695 = vmul.f32 %v2693, %v2694
        %v2696 = vsub.f32 2.0, %v2695
        %v2697 = vmul.f32 %v2694, %v2696
        %v2698 = vmul.f32 %v2697, 1.0614054
        %v2699 = vadd.f32 %v2698, -1.4531521
        %v2700 = vmul.f32 %v2697, %v2699
        %v2701 = vadd.f32 %v2700, 1.4214138
        %v2702 = vmul.f32 %v2697, %v2701
        %v2703 = vadd.f32 %v2702, -0.28449672
        %v2704 = vmul.f32 %v2697, %v2703
        %v2705 = vadd.f32 %v2704, 0.2548296
        %v2706 = vmul.f32 %v2697, %v2705
        %v2707 = vsub.f32 0.0, %v2691
        %v2708 = vmul.f32 %v2707, %v2691
        %v2709 = vmul.f32 %v2708, 1.442695
        %v2710 = vpow.pop %v2709
        %v2711 = vmul.f32 %v2706, %v2710
        %v2712 = vsub.f32 1.0, %v2711
        %v2713 = vmul.f32 %v2690, %v2712
        %v2714 = vmul.f32 %v2683, 0.5
        %v2715 = vadd.f32 %v2713, 1.0
        %v2716 = vmul.f32 %v2714, %v2715
        %s2717 = scalar_lea.vmem %s17, 64
        %v2718 = vld [vmem:[%s2717] sm:$0xf]
        %v2719 = vld [vmem:[%s2717 + $0x4] sm:$0xf]
        %v2720 = vld [vmem:[%s2717 + $0x8] sm:$0xf]
        %v2721 = vld [vmem:[%s2717 + $0xc] sm:$0xf]
        %v2722 = vld [vmem:[%s2717 + $0x10] sm:$0xf]
        %v2723 = vld [vmem:[%s2717 + $0x14] sm:$0xf]
        %v2724 = vld [vmem:[%s2717 + $0x18] sm:$0xf]
        %v2725 = vld [vmem:[%s2717 + $0x1c] sm:$0xf]
        %v2726 = vld [vmem:[%s2717 + $0x20] sm:$0xf]
        %v2727 = vld [vmem:[%s2717 + $0x24] sm:$0xf]
        %v2728 = vld [vmem:[%s2717 + $0x28] sm:$0xf]
        %v2729 = vld [vmem:[%s2717 + $0x2c] sm:$0xf]
        %v2730 = vld [vmem:[%s2717 + $0x30] sm:$0xf]
        %v2731 = vld [vmem:[%s2717 + $0x34] sm:$0xf]
        %v2732 = vld [vmem:[%s2717 + $0x38] sm:$0xf]
        %v2733 = vld [vmem:[%s2717 + $0x3c] sm:$0xf]
        %v2734 = vpack.c.bf16 %v2716, %v2716
        %s2735 = scalar_lea.vmem %s18, 1
        %v2736 = vld [vmem:[%s2735] sm:$0x1]
        %v2738 = vlaneseq
        %v2739 = vshrl.u32 %v2738, 7
        %v2740 = vsub.s32 0, %v2739
        %v2741 = vrot.slane %v2736, %v2740
        %v2759 = vunpack.c.l.b16 %v2718
        %v2760 = vunpack.c.l.b16 %v2719
        %v2761 = vunpack.c.l.b16 %v2720
        %v2762 = vunpack.c.l.b16 %v2721
        %v2763 = vunpack.c.l.b16 %v2722
        %v2764 = vunpack.c.l.b16 %v2723
        %v2765 = vunpack.c.l.b16 %v2724
        %v2766 = vunpack.c.l.b16 %v2725
        %v2767 = vunpack.c.l.b16 %v2726
        %v2768 = vunpack.c.l.b16 %v2727
        %v2769 = vunpack.c.l.b16 %v2728
        %v2770 = vunpack.c.l.b16 %v2729
        %v2771 = vunpack.c.l.b16 %v2730
        %v2772 = vunpack.c.l.b16 %v2731
        %v2773 = vunpack.c.l.b16 %v2732
        %v2774 = vunpack.c.l.b16 %v2733
        %v2775 = vpack.c.b16 %v2760, %v2759
        %v2776 = vpack.c.b16 %v2762, %v2761
        %v2777 = vpack.c.b16 %v2764, %v2763
        %v2778 = vpack.c.b16 %v2766, %v2765
        %v2779 = vpack.c.b16 %v2768, %v2767
        %v2780 = vpack.c.b16 %v2770, %v2769
        %v2781 = vpack.c.b16 %v2772, %v2771
        %v2782 = vpack.c.b16 %v2774, %v2773
        %2791 = vmatprep.subr.bf16.mxu0 0
        %2792 = vmatpush1.bf16.msra.mxu0 %v2775
        %2793 = vmatprep.subr.bf16.mxu0 0
        %2794 = vmatpush1.bf16.msra.mxu0 %v2776
        %2795 = vmatprep.subr.bf16.mxu0 0
        %2796 = vmatpush1.bf16.msra.mxu0 %v2777
        %2797 = vmatprep.subr.bf16.mxu0 0
        %2798 = vmatpush1.bf16.msra.mxu0 %v2778
        %2799 = vmatprep.subr.bf16.mxu0 0
        %2800 = vmatpush1.bf16.msra.mxu0 %v2779
        %2801 = vmatprep.subr.bf16.mxu0 0
        %2802 = vmatpush1.bf16.msra.mxu0 %v2780
        %2803 = vmatprep.subr.bf16.mxu0 0
        %2804 = vmatpush1.bf16.msra.mxu0 %v2781
        %2805 = vmatprep.subr.bf16.mxu0 0
        %2806 = vmatpush1.bf16.msra.mxu0 %v2782
        %2807 = vmatprep.subr.bf16.mxu0 0
        %2808 = vmatpush1.bf16.msra.mxu0 0
        %2809 = vmatprep.subr.bf16.mxu0 0
        %2810 = vmatpush1.bf16.msra.mxu0 0
        %2811 = vmatprep.subr.bf16.mxu0 0
        %2812 = vmatpush1.bf16.msra.mxu0 0
        %2813 = vmatprep.subr.bf16.mxu0 0
        %2814 = vmatpush1.bf16.msra.mxu0 0
        %2815 = vmatprep.subr.bf16.mxu0 0
        %2816 = vmatpush1.bf16.msra.mxu0 0
        %2817 = vmatprep.subr.bf16.mxu0 0
        %2818 = vmatpush1.bf16.msra.mxu0 0
        %2819 = vmatprep.subr.bf16.mxu0 0
        %2820 = vmatpush1.bf16.msra.mxu0 0
        %2821 = vmatprep.subr.bf16.mxu0 0
        %2822 = vmatpush1.bf16.msra.mxu0 0
        %2823 = vmatprep.mubr.bf16.mxu0 0
        %2824 = vmatmul.mubr.bf16.gmra.mrb[0].mxu0 %v2734
        %v2825 = vpop.f32.mrb[0].mxu0
        %v2826 = vadd.f32 %v2741, %v2825
        %v2827 = vpop.f32.mrb[0].mxu0
        %v2828 = vpop.f32.mrb[0].mxu0
        %v2829 = vpop.f32.mrb[0].mxu0
        %2830 = vdwg.mxu0
        %v2831 = vadd.f32 %v2826, %v2618
        %s2832 = scalar_lea.vmem %s19, 2
        %v2833 = vld [vmem:[%s2832] sm:$0x3]
        %v2834 = vsel %vm859, %v2831, 0.0
        %2835 = vadd.xlane.f32.xlu0 %v2834
        %v2836 = vpop.xlane.xlu0 %2835
        %v2837 = vmul.f32 %v2836, %v863
        %v2838 = vsub.f32 %v2831, %v2837
        %v2839 = vmul.f32 %v2838, %v2838
        %v2840 = vsel %vm859, %v2839, 0.0
        %2841 = vadd.xlane.f32.xlu0 %v2840
        %v2842 = vpop.xlane.xlu0 %2841
        %v2843 = vmul.f32 %v2842, %v863
        %v2844 = vadd.f32 %v2843, 1e-12
        %v2845 = vrsqrt.pop %v2844
        %v2846 = vmul.f32 %v2838, %v2845
        %v2847 = vlaneseq
        %v2848 = vshrl.u32 %v2847, 7
        %v2849 = vsub.s32 0, %v2848
        %v2850 = vrot.slane %v2833, %v2849
        %v2851 = vmul.f32 %v2846, %v2850
        %v2852 = vlaneseq
        %v2853 = vshrl.u32 %v2852, 7
        %v2854 = vsub.s32 1, %v2853
        %v2855 = vrot.slane %v2833, %v2854
        %v2856 = vadd.f32 %v2851, %v2855
        %2857 = vst.msk [vmem:[%s803] sm:$0xff] %vm859, %v2856
        %v2858 = vld [vmem:[%s836] sm:$0xff]
        %vm2859 = vcmp.gt.f32.partialorder %v2858, 0.0
        %v2860 = vsel %vm2859, 1, 0
        %2861 = vset.pattern.permute.xlu0 0
        %2862 = vperm.xlu0 %2861, %v2860
        %v2863 = vpop.permute.xlu0 %2862
        %vm2864 = vcmp.eq.s32.totalorder %v2863, 1
        %v2865 = vsel %vm2864, %v2856, -1e+30
        %v2866 = vsel %vm859, %v2865, -inf
        %v2867 = vrot.slane %v2866, 4
        %v2868 = vmax.f32 %v2866, %v2867
        %v2869 = vrot.slane %v2868, 2
        %v2870 = vmax.f32 %v2868, %v2869
        %v2871 = vrot.slane %v2870, 1
        %v2872 = vmax.f32 %v2870, %v2871
        %v2873 = vld [vmem:[%s840] sm:$0xff]
        %vm2874 = vcmp.gt.f32.partialorder %v2873, 0.0
        %v2875 = vsel %vm2874, 1, 0
        %2876 = vset.pattern.permute.xlu0 0
        %2877 = vperm.xlu0 %2876, %v2875
        %v2878 = vpop.permute.xlu0 %2877
        %vm2879 = vcmp.eq.s32.totalorder %v2878, 1
        %v2880 = vsel %vm2879, %v2856, -1e+30
        %v2881 = vsel %vm859, %v2880, -inf
        %v2882 = vrot.slane %v2881, 4
        %v2883 = vmax.f32 %v2881, %v2882
        %v2884 = vrot.slane %v2883, 2
        %v2885 = vmax.f32 %v2883, %v2884
        %v2886 = vrot.slane %v2885, 1
        %v2887 = vmax.f32 %v2885, %v2886
        %2889 = vrot.lane.b32.xlu0 %v2887, 32
        %v2890 = vpop.permute.xlu0 %2889
        %v2892 = vsel %vm859, %v2872, %v2890
        %vm2893 = vcmask 516096
        %2894 = vst.msk [vmem:[%s809] sm:$0x1] %vm2893, %v2892
        %v2895 = vld [vmem:[%s20] sm:$0xf]
        %v2896 = vld [vmem:[%s20 + $0x4] sm:$0xf]
        %v2897 = vld [vmem:[%s20 + $0x8] sm:$0xf]
        %v2898 = vld [vmem:[%s20 + $0xc] sm:$0xf]
        %v2899 = vld [vmem:[%s20 + $0x10] sm:$0xf]
        %v2900 = vld [vmem:[%s20 + $0x14] sm:$0xf]
        %v2901 = vld [vmem:[%s20 + $0x18] sm:$0xf]
        %v2902 = vld [vmem:[%s20 + $0x1c] sm:$0xf]
        %v2903 = vpack.c.bf16 %v2892, %v2892
        %v2904 = vld [vmem:[%s21] sm:$0x1]
        %v2913 = vunpack.c.l.b16 %v2895
        %v2914 = vunpack.c.l.b16 %v2896
        %v2915 = vunpack.c.l.b16 %v2897
        %v2916 = vunpack.c.l.b16 %v2898
        %v2917 = vunpack.c.l.b16 %v2899
        %v2918 = vunpack.c.l.b16 %v2900
        %v2919 = vunpack.c.l.b16 %v2901
        %v2920 = vunpack.c.l.b16 %v2902
        %v2921 = vpack.c.b16 %v2914, %v2913
        %v2922 = vpack.c.b16 %v2916, %v2915
        %v2923 = vpack.c.b16 %v2918, %v2917
        %v2924 = vpack.c.b16 %v2920, %v2919
        %vm2929 = vcmask 523264
        %v2931 = vsel %vm2929, %v2903, 0
        %2933 = vmatprep.subr.bf16.mxu0 0
        %2934 = vmatpush1.bf16.msra.mxu0 %v2921
        %2935 = vmatprep.subr.bf16.mxu0 0
        %2936 = vmatpush1.bf16.msra.mxu0 %v2922
        %2937 = vmatprep.subr.bf16.mxu0 0
        %2938 = vmatpush1.bf16.msra.mxu0 %v2923
        %2939 = vmatprep.subr.bf16.mxu0 0
        %2940 = vmatpush1.bf16.msra.mxu0 %v2924
        %2941 = vmatprep.subr.bf16.mxu0 0
        %2942 = vmatpush1.bf16.msra.mxu0 0
        %2943 = vmatprep.subr.bf16.mxu0 0
        %2944 = vmatpush1.bf16.msra.mxu0 0
        %2945 = vmatprep.subr.bf16.mxu0 0
        %2946 = vmatpush1.bf16.msra.mxu0 0
        %2947 = vmatprep.subr.bf16.mxu0 0
        %2948 = vmatpush1.bf16.msra.mxu0 0
        %2949 = vmatprep.subr.bf16.mxu0 0
        %2950 = vmatpush1.bf16.msra.mxu0 0
        %2951 = vmatprep.subr.bf16.mxu0 0
        %2952 = vmatpush1.bf16.msra.mxu0 0
        %2953 = vmatprep.subr.bf16.mxu0 0
        %2954 = vmatpush1.bf16.msra.mxu0 0
        %2955 = vmatprep.subr.bf16.mxu0 0
        %2956 = vmatpush1.bf16.msra.mxu0 0
        %2957 = vmatprep.subr.bf16.mxu0 0
        %2958 = vmatpush1.bf16.msra.mxu0 0
        %2959 = vmatprep.subr.bf16.mxu0 0
        %2960 = vmatpush1.bf16.msra.mxu0 0
        %2961 = vmatprep.subr.bf16.mxu0 0
        %2962 = vmatpush1.bf16.msra.mxu0 0
        %2963 = vmatprep.subr.bf16.mxu0 0
        %2964 = vmatpush1.bf16.msra.mxu0 0
        %2965 = vmatprep.mubr.bf16.mxu0 0
        %2966 = vmatmul.mubr.bf16.gmra.mrb[0].mxu0 %v2931
        %v2967 = vpop.f32.mrb[0].mxu0
        %v2968 = vadd.f32 %v2904, %v2967
        %v2969 = vpop.f32.mrb[0].mxu0
        %v2970 = vpop.f32.mrb[0].mxu0
        %v2971 = vpop.f32.mrb[0].mxu0
        %2972 = vdwg.mxu0
        %2973 = vst [vmem:[%s815] sm:$0x1] %v2968
        %s2974 = sld [smem:[#allocation3 + %s50]]
        %vm2975 = vcmask 1040384
        %v2976 = vsel %vm2975, %v2968, -inf
        %2977 = vmax.xlane.f32.xlu0 %v2976
        %v2978 = vpop.xlane.xlu0 %2977
        %v2979 = vsub.f32 %v2968, %v2978
        %v2980 = vmul.f32 %v2979, 1.442695
        %v2981 = vpow.pop %v2980
        %v2982 = vsel %vm2975, %v2981, 0.0
        %2983 = vadd.xlane.f32.xlu0 %v2982
        %v2984 = vpop.xlane.xlu0 %2983
        %v2985 = vlog2.pop %v2984
        %v2986 = vmul.f32 %v2985, 0.6931472
        %v2987 = vadd.f32 %v2986, %v2978
        %v2988 = vlaneseq
        %v2989 = vand.u32 %v2988, 127
        %v2990 = vstv %s2974
        %vm2991 = vcmp.eq.s32.totalorder %v2989, %v2990
        %v2992 = vsel %vm2991, %v2968, 0.0
        %v2993 = vsel %vm2975, %v2992, 0.0
        %2994 = vadd.xlane.f32.xlu0 %v2993
        %v2995 = vpop.xlane.xlu0 %2994
        %p2996 = scmp.ne.s32.totalorder %s2974, 4294967196
        %v2997 = vsub.f32 %v2987, %v2995
        %s2998 = scalar_select %p2996, 1, 0
        %v2999 = vstv %s2998
        %vm3000 = vcmp.eq.s32.totalorder %v2999, 1
        %v3001 = vsel %vm3000, %v2997, 0.0
        %vm3002 = vcmask 0
        %3003 = vst.msk [vmem:[%s843] sm:$0x1] %vm3002, %v3001
        %v3004 = vsel %vm3000, 1.0, 0.0
        %3005 = vst.msk [vmem:[%s846] sm:$0x1] %vm3002, %v3004
        %s3006 = sand.u32 %s519, 1
        %s3007 = scalar_lea.sflag [#allocation5], %s3006
        %s3008 = sand.u32 %s519, 1
        %s3009 = smul.addr %s3008, 8
        %s3010 = scalar_lea.vmem [#allocation4], %s3009
        %s3011 = sand.u32 %s50, 1
        %s3012 = scalar_lea.sflag [#allocation7], %s3011
        %s3013 = sand.u32 %s545, 1
        %s3014 = scalar_lea.vmem [#allocation6], %s3013
        %s3015 = sand.u32 %s50, 1
        %s3016 = scalar_lea.sflag [#allocation7], %s3015
        %s3017 = sand.u32 %s571, 1
        %s3018 = scalar_lea.vmem [#allocation8], %s3017
        %p3019 = scmp.lt.s32.totalorder %s50, 1
        %s3020 = scalar_select %p3019, %s50, 1
        %s3021 = scalar_lea.vmem %s25, %s3020
        %p3022 = scmp.lt.s32.totalorder %s50, 1
        %s3023 = scalar_select %p3022, %s50, 1
        %s3024 = scalar_lea.vmem %s26, %s3023
        // Predicated region
        $region105: #{rescl_forward.1} parent=103 // pred_check
          %p3025 = pneg %p529
        $region106: #{rescl_forward.1} parent=103 // pred_check_branch
          %3027 = sbr.rel (%p3025) target = $region108
        $region107: #{rescl_forward.1} parent=103 // pred_region
          %s3029 = ssub.s32 128, 128
          %3030 = vsyncadd %s3007, %s3029
          %s3031 = smul.addr %s50, 128
          %s3032 = scalar_lea.hbm %s22, %s3031
          %s3034 = sshll.u32 %s3010, 4
          %s3035 = int_to_ptr.vmem [resolvable:$true] %s3034
          %3037 = dma.vmem_to_hbm [thread:$0]  %s3035, 128, %s3032, %s3007
        $region108: #{rescl_forward.1} parent=103 // pred_fallthru
          _
        // Predicated region
        $region109: #{rescl_forward.1} parent=103 // pred_check
          %p3038 = pneg %p555
        $region110: #{rescl_forward.1} parent=103 // pred_check_branch
          %3040 = sbr.rel (%p3038) target = $region112
        $region111: #{rescl_forward.1} parent=103 // pred_region
          %s3042 = ssub.s32 16, 16
          %3043 = vsyncadd %s3012, %s3042
          %s3044 = smul.addr %s50, 16
          %s3045 = scalar_lea.hbm %s23, %s3044
          %s3047 = sshll.u32 %s3014, 4
          %s3048 = int_to_ptr.vmem [resolvable:$true] %s3047
          %3050 = dma.vmem_to_hbm [thread:$0]  %s3048, 16, %s3045, %s3012
        $region112: #{rescl_forward.1} parent=103 // pred_fallthru
          _
        // Predicated region
        $region113: #{rescl_forward.1} parent=103 // pred_check
          %p3051 = pneg %p581
        $region114: #{rescl_forward.1} parent=103 // pred_check_branch
          %3053 = sbr.rel (%p3051) target = $region116
        $region115: #{rescl_forward.1} parent=103 // pred_region
          %s3055 = ssub.s32 16, 16
          %3056 = vsyncadd %s3016, %s3055
          %s3057 = smul.addr %s50, 16
          %s3058 = scalar_lea.hbm %s24, %s3057
          %s3060 = sshll.u32 %s3018, 4
          %s3061 = int_to_ptr.vmem [resolvable:$true] %s3060
          %3063 = dma.vmem_to_hbm [thread:$0]  %s3061, 16, %s3058, %s3016
        $region116: #{rescl_forward.1} parent=103 // pred_fallthru
          _
        // Predicated region
        $region117: #{rescl_forward.1} parent=103 // pred_check
          %p3064 = pneg %p607
        $region118: #{rescl_forward.1} parent=103 // pred_check_branch
          %3066 = sbr.rel (%p3064) target = $region120
        $region119: #{rescl_forward.1} parent=103 // pred_region
          _
        $region120: #{rescl_forward.1} parent=103 // pred_fallthru
          _
        // Predicated region
        $region121: #{rescl_forward.1} parent=103 // pred_check
          %p3067 = pneg %p633
        $region122: #{rescl_forward.1} parent=103 // pred_check_branch
          %3069 = sbr.rel (%p3067) target = $region124
        $region123: #{rescl_forward.1} parent=103 // pred_region
          _
        $region124: #{rescl_forward.1} parent=103 // pred_fallthru
          _
      $region104: #{rescl_forward.1} parent=5 // pred_fallthru
        _
      %p3070 = scmp.le.s32.totalorder 2, %s45
      // Predicated region
      $region125: #{rescl_forward.1} parent=5 // pred_check
        %p3071 = pneg %p3070
      $region126: #{rescl_forward.1} parent=5 // pred_check_branch
        %3073 = sbr.rel (%p3071) target = $region128
      $region127: #{rescl_forward.1} parent=5 // pred_region
        %s3074 = ssub.s32 %s45, 2
        // Predicated region
        $region129: #{rescl_forward.1} parent=127 // pred_check
          %p3075 = pneg %p535
        $region130: #{rescl_forward.1} parent=127 // pred_check_branch
          %3077 = sbr.rel (%p3075) target = $region132
        $region131: #{rescl_forward.1} parent=127 // pred_region
          %s3078 = sand.u32 %s520, 1
          %s3079 = scalar_lea.sflag [#allocation5], %s3078
          %s3080 = sand.u32 %s520, 1
          %s3081 = smul.addr %s3080, 8
          %s3082 = scalar_lea.vmem [#allocation4], %s3081
          %3083 = dma.done %s3079, 128
        $region132: #{rescl_forward.1} parent=127 // pred_fallthru
          _
        // Predicated region
        $region133: #{rescl_forward.1} parent=127 // pred_check
          %p3084 = pneg %p561
        $region134: #{rescl_forward.1} parent=127 // pred_check_branch
          %3086 = sbr.rel (%p3084) target = $region136
        $region135: #{rescl_forward.1} parent=127 // pred_region
          %s3087 = sand.u32 %s51, 1
          %s3088 = scalar_lea.sflag [#allocation7], %s3087
          %s3089 = sand.u32 %s546, 1
          %s3090 = scalar_lea.vmem [#allocation6], %s3089
          %3091 = dma.done %s3088, 16
        $region136: #{rescl_forward.1} parent=127 // pred_fallthru
          _
        // Predicated region
        $region137: #{rescl_forward.1} parent=127 // pred_check
          %p3092 = pneg %p587
        $region138: #{rescl_forward.1} parent=127 // pred_check_branch
          %3094 = sbr.rel (%p3092) target = $region140
        $region139: #{rescl_forward.1} parent=127 // pred_region
          %s3095 = sand.u32 %s51, 1
          %s3096 = scalar_lea.sflag [#allocation7], %s3095
          %s3097 = sand.u32 %s572, 1
          %s3098 = scalar_lea.vmem [#allocation8], %s3097
          %3099 = dma.done %s3096, 16
        $region140: #{rescl_forward.1} parent=127 // pred_fallthru
          _
        // Predicated region
        $region141: #{rescl_forward.1} parent=127 // pred_check
          %p3100 = pneg %p613
        $region142: #{rescl_forward.1} parent=127 // pred_check_branch
          %3102 = sbr.rel (%p3100) target = $region144
        $region143: #{rescl_forward.1} parent=127 // pred_region
          %p3103 = scmp.lt.s32.totalorder %s51, 1
          %s3104 = scalar_select %p3103, %s51, 1
          %s3105 = scalar_lea.vmem %s25, %s3104
        $region144: #{rescl_forward.1} parent=127 // pred_fallthru
          _
        // Predicated region
        $region145: #{rescl_forward.1} parent=127 // pred_check
          %p3106 = pneg %p639
        $region146: #{rescl_forward.1} parent=127 // pred_check_branch
          %3108 = sbr.rel (%p3106) target = $region148
        $region147: #{rescl_forward.1} parent=127 // pred_region
          %p3109 = scmp.lt.s32.totalorder %s51, 1
          %s3110 = scalar_select %p3109, %s51, 1
          %s3111 = scalar_lea.vmem %s26, %s3110
        $region148: #{rescl_forward.1} parent=127 // pred_fallthru
          _
      $region128: #{rescl_forward.1} parent=5 // pred_fallthru
        _
    $region6: #{rescl_forward.1} parent=1 // loop_footer
      %s49 = sadd.s32 1, %s45
    $region7: #{rescl_forward.1} parent=1 // loop_footer_branch
      %44 = sbr.rel target = $region3
    $region8: #{rescl_forward.1} parent=1 // loop_exit
      _
    %3112 = vsyncpa [#allocation5], 1
    %s3113 = scalar_lea.sflag [#allocation5], 1
    %3114 = vsyncpa %s3113, 1
    %3115 = vsyncpa [#allocation7], 1
    %s3116 = scalar_lea.sflag [#allocation7], 1
    %3117 = vsyncpa %s3116, 1

</llo_original>
